<compile_context>
chip_gen: v7x
topology: tpu7x:2x2x1
jax: 0.10.0
libtpu: 0.0.40
codegen_flags: <defaults>
</compile_context>

<pallas_src>
import jax
import jax.numpy as jnp
import numpy as np
from jax.experimental import pallas as pl
from jax.experimental.pallas import tpu as pltpu

# ----------------------------- small, TPU-friendly shapes -----------------------------
B = 2             # batch
CIN = 3           # image channels
IMG = 64          # image_size (stand-in for 320)
PATCH = 16        # backbone total stride
GRID_HW = IMG // PATCH            # 4
HW = GRID_HW * GRID_HW            # 16   (= in_h * in_w for MixVPR)
PATCH_DIM = CIN * PATCH * PATCH   # 768
C = 128           # MixVPR in_channels (stand-in for 1024)
MIX_DEPTH = 4     # mix_depth
OUT_ROWS = 4      # out_rows
DESC = 512        # desc_dim (stand-in for 4096)
OUT_C = DESC // OUT_ROWS          # 128 = out_channels
ORC = OUT_ROWS * OUT_C            # 512 (= DESC), fc contraction dim
DESC_TILE = 256   # fc output columns streamed per grid step (prod: 512 v7x / 1024 v6e)
NDT = DESC // DESC_TILE           # 2
EPS_LN = 1e-5
EPS_NORM = 1e-12


# --------------------------------------- kernel ---------------------------------------
def apl_kernel(p_ref, wpt_ref, bp_ref,
               lnw_ref, lnb_ref, w1_ref, b1_ref, w2_ref, b2_ref,
               wr_ref, wct_ref, bpr_ref,
               wfc_ref, bfc_ref,
               out_ref, d_sc, fc_sc):
    j = pl.program_id(0)          # fc DESC-tile index (only grid axis)

    # ---- heavy per-batch work only on the first DESC-tile step ----
    @pl.when(j == 0)
    def _():
        # backbone stand-in: stride-16 patchify conv, one (HW, PD) @ (PD, C) matmul
        # per image; image b occupies columns [b*C, (b+1)*C) of the residual stream.
        cols = []
        for b in range(B):
            xb = jnp.dot(p_ref[b], wpt_ref[...],
                         preferred_element_type=jnp.float32) + bp_ref[...]  # (HW, C) f32
            cols.append(xb)
        x = jnp.concatenate(cols, axis=1)                                   # (HW, B*C) f32

        # MixVPR FeatureMixer layers, batched over all images (mixing over axis 0 = HW)
        for l in range(MIX_DEPTH):
            xm = x - jnp.mean(x, axis=0, keepdims=True)                     # one-pass LN
            var = jnp.mean(xm * xm, axis=0, keepdims=True)
            h = xm * jax.lax.rsqrt(var + EPS_LN) * lnw_ref[l] + lnb_ref[l]
            y = jnp.dot(w1_ref[l], h.astype(jnp.bfloat16),
                        preferred_element_type=jnp.float32) + b1_ref[l]
            y = jnp.maximum(y, 0.0)                                         # ReLU
            y = jnp.dot(w2_ref[l], y.astype(jnp.bfloat16),
                        preferred_element_type=jnp.float32) + b2_ref[l]
            x = x + y                                                       # residual

        # reassociated projections: t = Wr @ X, then per image t_b @ Wc^T + fused bias
        t = jnp.dot(wr_ref[...], x.astype(jnp.bfloat16),
                    preferred_element_type=jnp.float32)                     # (OUT_ROWS, B*C)

        drows = []
        for b in range(B):
            tb = t[:, b * C:(b + 1) * C]                                    # (OUT_ROWS, C)
            agg = jnp.dot(tb.astype(jnp.bfloat16), wct_ref[...],
                          preferred_element_type=jnp.float32) + bpr_ref[...]  # (OUT_ROWS, OUT_C)
            # MixVPR final L2 normalize over the flattened per-image descriptor
            nrm = jnp.maximum(jnp.sqrt(jnp.sum(agg * agg)), EPS_NORM)
            aggn = agg / nrm
            # flatten (r, oc) -> lane index r*OUT_C + oc (matches pre-permuted Wfc rows)
            drows.append(jnp.concatenate(
                [aggn[r:r + 1, :] for r in range(OUT_ROWS)], axis=1))       # (1, ORC)
        d_sc[...] = jnp.concatenate(drows, axis=0).astype(jnp.bfloat16)     # (B, ORC) bf16

    # ---- fc on the current DESC tile: ONE (B, ORC) @ (ORC, DESC_TILE) matmul ----
    fc_sc[j] = jnp.dot(d_sc[...], wfc_ref[...],
                       preferred_element_type=jnp.float32) + bfc_ref[...]   # (B, DESC_TILE)

    # ---- final L2 normalize once all DESC tiles are done; single lane-dense store ----
    @pl.when(j == pl.num_programs(0) - 1)
    def _():
        v = jnp.concatenate([fc_sc[tt] for tt in range(NDT)], axis=-1)      # (B, DESC)
        nrm2 = jnp.maximum(jnp.sqrt(jnp.sum(v * v, axis=-1, keepdims=True)), EPS_NORM)
        out_ref[...] = v / nrm2


# ---------------------------------------- glue ----------------------------------------
def im2col(x):
    """(B, CIN, IMG, IMG) NCHW -> (B, HW, CIN*PATCH*PATCH), patch features in (c, dy, dx) order."""
    b = x.shape[0]
    x = x.reshape(b, CIN, GRID_HW, PATCH, GRID_HW, PATCH)
    x = x.transpose(0, 2, 4, 1, 3, 5)
    return x.reshape(b, HW, PATCH_DIM)


def prepare_params(prm):
    """One-time parameter prep: bf16 casts, transposes, fused biases, fc-weight permute.

    Hoisted out of the per-call jit so the (large at production) Wfc permutation is not
    on the forward critical path."""
    bf16 = jnp.bfloat16
    f32 = jnp.float32

    # fused row_proj bias:  Wr @ broadcast(bc) + br  ->  (OUT_ROWS, OUT_C)
    b_pr = (prm['Wr'].sum(axis=1, keepdims=True) * prm['bc'][None, :]
            + prm['br'][:, None])

    # fc weight with row index r*OUT_C + oc (k = oc*OUT_ROWS + r in PyTorch flatten)
    wfc_flat = (prm['Wfc'].reshape(DESC, OUT_C, OUT_ROWS)
                .transpose(2, 1, 0).reshape(ORC, DESC).astype(bf16))        # (ORC, DESC)

    return dict(
        wpt=prm['Wp'].T.astype(bf16),            # (PATCH_DIM, C)
        bp=prm['bp'].reshape(1, C).astype(f32),
        ln_w=prm['ln_w'][..., None].astype(f32),  # (MIX, HW, 1)
        ln_b=prm['ln_b'][..., None].astype(f32),
        w1=prm['W1'].astype(bf16),               # (MIX, HW, HW)
        b1=prm['b1'][..., None].astype(f32),
        w2=prm['W2'].astype(bf16),
        b2=prm['b2'][..., None].astype(f32),
        wr=prm['Wr'].astype(bf16),               # (OUT_ROWS, HW)
        wct=prm['Wc'].T.astype(bf16),            # (C, OUT_C)
        b_pr=b_pr.astype(f32),                   # (OUT_ROWS, OUT_C)
        wfc=wfc_flat,                            # (ORC, DESC) bf16 -- streamed
        bfc=prm['bfc'].reshape(1, DESC).astype(f32),
    )


@jax.jit
def apl_forward(x_img, pp):
    assert x_img.shape[0] == B
    patches = im2col(x_img).astype(jnp.bfloat16)                 # (B, HW, PATCH_DIM)

    args = (
        patches,        # 0
        pp['wpt'],      # 1
        pp['bp'],       # 2
        pp['ln_w'],     # 3
        pp['ln_b'],     # 4
        pp['w1'],       # 5
        pp['b1'],       # 6
        pp['w2'],       # 7
        pp['b2'],       # 8
        pp['wr'],       # 9
        pp['wct'],      # 10
        pp['b_pr'],     # 11
        pp['wfc'],      # 12  (ORC, DESC)  -- DESC-tiled / streamed
        pp['bfc'],      # 13  (1, DESC)    -- DESC-tiled
    )

    def full_block(a):
        nd = a.ndim
        return pl.BlockSpec(a.shape, (lambda n: (lambda j: (0,) * n))(nd))

    in_specs = [full_block(a) for a in args[:12]]
    in_specs += [pl.BlockSpec((ORC, DESC_TILE), lambda j: (0, j)),   # Wfc DESC-tiled
                 pl.BlockSpec((1, DESC_TILE), lambda j: (0, j))]     # bfc DESC-tiled

    out = pl.pallas_call(
        apl_kernel,
        out_shape=jax.ShapeDtypeStruct((B, DESC), jnp.float32),
        grid_spec=pltpu.PrefetchScalarGridSpec(
            num_scalar_prefetch=0,
            grid=(NDT,),
            in_specs=in_specs,
            out_specs=pl.BlockSpec((B, DESC), lambda j: (0, 0)),
            scratch_shapes=[pltpu.VMEM((B, ORC), jnp.bfloat16),          # descriptors
                            pltpu.VMEM((NDT, B, DESC_TILE), jnp.float32)],  # fc tiles
        ),
        compiler_params=pltpu.CompilerParams(
            dimension_semantics=("arbitrary",),
            vmem_limit_bytes=32 * 1024 * 1024,
        ),
    )(*args)
    return out


# ---------------------------- pure-JAX reference (PyTorch layout) ----------------------------
def reference_forward(x_img, prm):
    b = x_img.shape[0]
    patches = im2col(x_img)                                                 # (B, HW, PD)
    x = jnp.einsum('bpd,cd->bcp', patches, prm['Wp']) + prm['bp'][None, :, None]  # (B, C, HW)
    for l in range(MIX_DEPTH):
        mu = x.mean(-1, keepdims=True)
        var = ((x - mu) ** 2).mean(-1, keepdims=True)
        h = (x - mu) / jnp.sqrt(var + EPS_LN) * prm['ln_w'][l] + prm['ln_b'][l]
        y = h @ prm['W1'][l].T + prm['b1'][l]
        y = jnp.maximum(y, 0.0)
        y = y @ prm['W2'][l].T + prm['b2'][l]
        x = x + y
    x = jnp.swapaxes(x, 1, 2)                                               # (B, HW, C)
    x = x @ prm['Wc'].T + prm['bc']                                         # (B, HW, OUT_C)
    x = jnp.swapaxes(x, 1, 2)                                               # (B, OUT_C, HW)
    x = x @ prm['Wr'].T + prm['br']                                         # (B, OUT_C, OUT_ROWS)
    x = x.reshape(b, -1)                                                    # (B, DESC)
    x = x / jnp.maximum(jnp.linalg.norm(x, axis=-1, keepdims=True), EPS_NORM)
    x = x @ prm['Wfc'].T + prm['bfc']
    x = x / jnp.maximum(jnp.linalg.norm(x, axis=-1, keepdims=True), EPS_NORM)
    return x


# ---------------------------------------- main ----------------------------------------
if __name__ == "__main__":
    key = jax.random.PRNGKey(0)
    ks = jax.random.split(key, 16)

    def init(k, shape, scale):
        return scale * jax.random.normal(k, shape, jnp.float32)

    prm = {
        'Wp':  init(ks[0], (C, PATCH_DIM), 0.05),
        'bp':  init(ks[1], (C,), 0.01),
        'ln_w': 1.0 + init(ks[13], (MIX_DEPTH, HW), 0.1),
        'ln_b': init(ks[14], (MIX_DEPTH, HW), 0.01),
        'W1':  init(ks[2], (MIX_DEPTH, HW, HW), 0.1),
        'b1':  init(ks[3], (MIX_DEPTH, HW), 0.01),
        'W2':  init(ks[4], (MIX_DEPTH, HW, HW), 0.1),
        'b2':  init(ks[5], (MIX_DEPTH, HW), 0.01),
        'Wc':  init(ks[6], (OUT_C, C), 0.05),
        'bc':  init(ks[7], (OUT_C,), 0.01),
        'Wr':  init(ks[8], (OUT_ROWS, HW), 0.1),
        'br':  init(ks[9], (OUT_ROWS,), 0.01),
        'Wfc': init(ks[10], (DESC, DESC), 0.05),
        'bfc': init(ks[11], (DESC,), 0.01),
    }
    x = jax.random.normal(ks[12], (B, CIN, IMG, IMG), jnp.float32)

    pp = jax.tree_util.tree_map(jax.block_until_ready, prepare_params(prm))  # one-time prep

    out = jax.block_until_ready(apl_forward(x, pp))
    ref = jax.block_until_ready(reference_forward(x, prm))

    assert out.shape == (B, DESC)
    o = np.asarray(out, np.float64)
    r = np.asarray(ref, np.float64)
    # bf16 weights/activations in the kernel vs a pure-f32 reference -> relaxed tolerance
    assert np.max(np.abs(o - r)) < 2e-2, "mismatch vs reference"
    cos = np.sum(o * r, axis=-1)  # both rows are unit-norm
    assert np.all(cos > 0.995), "descriptor direction mismatch vs reference"

    print("KERNEL_OK")
</pallas_src>

<mosaic_0001>
module attributes {stable_mosaic.version = 11 : i64} {
  func.func @apl_kernel(%arg0: i32, %arg1: memref<2x16x768xbf16, #tpu.memory_space<vmem>>, %arg2: memref<768x128xbf16, #tpu.memory_space<vmem>>, %arg3: memref<1x128xf32, #tpu.memory_space<vmem>>, %arg4: memref<4x16x1xf32, #tpu.memory_space<vmem>>, %arg5: memref<4x16x1xf32, #tpu.memory_space<vmem>>, %arg6: memref<4x16x16xbf16, #tpu.memory_space<vmem>>, %arg7: memref<4x16x1xf32, #tpu.memory_space<vmem>>, %arg8: memref<4x16x16xbf16, #tpu.memory_space<vmem>>, %arg9: memref<4x16x1xf32, #tpu.memory_space<vmem>>, %arg10: memref<4x16xbf16, #tpu.memory_space<vmem>>, %arg11: memref<128x128xbf16, #tpu.memory_space<vmem>>, %arg12: memref<4x128xf32, #tpu.memory_space<vmem>>, %arg13: memref<512x256xbf16, #tpu.memory_space<vmem>>, %arg14: memref<1x256xf32, #tpu.memory_space<vmem>>, %arg15: memref<2x512xf32, #tpu.memory_space<vmem>>, %arg16: memref<2x512xbf16, #tpu.memory_space<vmem>>, %arg17: memref<2x2x256xf32, #tpu.memory_space<vmem>>) attributes {dimension_semantics = [#tpu.dimension_semantics<arbitrary>], iteration_bounds = array<i64: 2>, scalar_prefetch = 0 : i64, scratch_operands = 2 : i64, tpu.core_type = #tpu.core_type<tc>, window_params = [{pipeline_mode = #tpu.pipeline_mode<synchronous>, transform_indices = @transform_0, window_bounds = array<i64: 2, 16, 768>}, {pipeline_mode = #tpu.pipeline_mode<synchronous>, transform_indices = @transform_1, window_bounds = array<i64: 768, 128>}, {pipeline_mode = #tpu.pipeline_mode<synchronous>, transform_indices = @transform_2, window_bounds = array<i64: 1, 128>}, {pipeline_mode = #tpu.pipeline_mode<synchronous>, transform_indices = @transform_3, window_bounds = array<i64: 4, 16, 1>}, {pipeline_mode = #tpu.pipeline_mode<synchronous>, transform_indices = @transform_4, window_bounds = array<i64: 4, 16, 1>}, {pipeline_mode = #tpu.pipeline_mode<synchronous>, transform_indices = @transform_5, window_bounds = array<i64: 4, 16, 16>}, {pipeline_mode = #tpu.pipeline_mode<synchronous>, transform_indices = @transform_6, window_bounds = array<i64: 4, 16, 1>}, {pipeline_mode = #tpu.pipeline_mode<synchronous>, transform_indices = @transform_7, window_bounds = array<i64: 4, 16, 16>}, {pipeline_mode = #tpu.pipeline_mode<synchronous>, transform_indices = @transform_8, window_bounds = array<i64: 4, 16, 1>}, {pipeline_mode = #tpu.pipeline_mode<synchronous>, transform_indices = @transform_9, window_bounds = array<i64: 4, 16>}, {pipeline_mode = #tpu.pipeline_mode<synchronous>, transform_indices = @transform_10, window_bounds = array<i64: 128, 128>}, {pipeline_mode = #tpu.pipeline_mode<synchronous>, transform_indices = @transform_11, window_bounds = array<i64: 4, 128>}, {transform_indices = @transform_12, window_bounds = array<i64: 512, 256>}, {transform_indices = @transform_13, window_bounds = array<i64: 1, 256>}, {pipeline_mode = #tpu.pipeline_mode<synchronous>, transform_indices = @transform_14, window_bounds = array<i64: 2, 512>}]} {
    %c0_i32 = arith.constant 0 : i32
    %0 = arith.cmpi eq, %arg0, %c0_i32 : i32
    %1 = arith.extui %0 : i1 to i32
    %c0_i32_0 = arith.constant 0 : i32
    %2 = arith.cmpi ne, %1, %c0_i32_0 : i32
    scf.if %2 {
      %c0_9 = arith.constant 0 : index
      %c0_10 = arith.constant 0 : index
      %c0_11 = arith.constant 0 : index
      %16 = vector.load %arg1[%c0_9, %c0_10, %c0_11] : memref<2x16x768xbf16, #tpu.memory_space<vmem>>, vector<1x16x768xbf16>
      %17 = vector.shape_cast %16 : vector<1x16x768xbf16> to vector<16x768xbf16>
      %c0_12 = arith.constant 0 : index
      %c0_13 = arith.constant 0 : index
      %18 = vector.load %arg2[%c0_12, %c0_13] : memref<768x128xbf16, #tpu.memory_space<vmem>>, vector<768x128xbf16>
      %cst_14 = arith.constant dense<0.000000e+00> : vector<16x128xf32>
      %19 = tpu.matmul %17, %18, %cst_14 {dimension_numbers = #tpu.dot_dimension_numbers<[1], [0], [0], [1], [0, 0, 1, 1], [], []>} : vector<16x768xbf16>, vector<768x128xbf16>, vector<16x128xf32> -> vector<16x128xf32>
      %c0_15 = arith.constant 0 : index
      %c0_16 = arith.constant 0 : index
      %20 = vector.load %arg3[%c0_15, %c0_16] : memref<1x128xf32, #tpu.memory_space<vmem>>, vector<1x128xf32>
      %21 = vector.broadcast %20 : vector<1x128xf32> to vector<16x128xf32>
      %22 = arith.addf %19, %21 : vector<16x128xf32>
      %c1 = arith.constant 1 : index
      %c0_17 = arith.constant 0 : index
      %c0_18 = arith.constant 0 : index
      %23 = vector.load %arg1[%c1, %c0_17, %c0_18] : memref<2x16x768xbf16, #tpu.memory_space<vmem>>, vector<1x16x768xbf16>
      %24 = vector.shape_cast %23 : vector<1x16x768xbf16> to vector<16x768xbf16>
      %c0_19 = arith.constant 0 : index
      %c0_20 = arith.constant 0 : index
      %25 = vector.load %arg2[%c0_19, %c0_20] : memref<768x128xbf16, #tpu.memory_space<vmem>>, vector<768x128xbf16>
      %cst_21 = arith.constant dense<0.000000e+00> : vector<16x128xf32>
      %26 = tpu.matmul %24, %25, %cst_21 {dimension_numbers = #tpu.dot_dimension_numbers<[1], [0], [0], [1], [0, 0, 1, 1], [], []>} : vector<16x768xbf16>, vector<768x128xbf16>, vector<16x128xf32> -> vector<16x128xf32>
      %c0_22 = arith.constant 0 : index
      %c0_23 = arith.constant 0 : index
      %27 = vector.load %arg3[%c0_22, %c0_23] : memref<1x128xf32, #tpu.memory_space<vmem>>, vector<1x128xf32>
      %28 = vector.broadcast %27 : vector<1x128xf32> to vector<16x128xf32>
      %29 = arith.addf %26, %28 : vector<16x128xf32>
      %30 = tpu.concatenate %22, %29 in 1 : vector<16x128xf32>, vector<16x128xf32> -> vector<16x256xf32>
      %cst_24 = arith.constant dense<0.000000e+00> : vector<256xf32>
      %31 = vector.multi_reduction <add>, %30, %cst_24 [0] : vector<16x256xf32> to vector<256xf32>
      %32 = vector.shape_cast %31 : vector<256xf32> to vector<1x256xf32>
      %cst_25 = arith.constant 1.600000e+01 : f32
      %33 = vector.broadcast %cst_25 : f32 to vector<1x256xf32>
      %34 = arith.divf %32, %33 : vector<1x256xf32>
      %35 = vector.broadcast %34 : vector<1x256xf32> to vector<16x256xf32>
      %36 = arith.subf %30, %35 : vector<16x256xf32>
      %37 = arith.mulf %36, %36 : vector<16x256xf32>
      %cst_26 = arith.constant dense<0.000000e+00> : vector<256xf32>
      %38 = vector.multi_reduction <add>, %37, %cst_26 [0] : vector<16x256xf32> to vector<256xf32>
      %39 = vector.shape_cast %38 : vector<256xf32> to vector<1x256xf32>
      %cst_27 = arith.constant 1.600000e+01 : f32
      %40 = vector.broadcast %cst_27 : f32 to vector<1x256xf32>
      %41 = arith.divf %39, %40 : vector<1x256xf32>
      %cst_28 = arith.constant 9.99999974E-6 : f32
      %42 = vector.broadcast %cst_28 : f32 to vector<1x256xf32>
      %43 = arith.addf %41, %42 : vector<1x256xf32>
      %44 = math.rsqrt %43 : vector<1x256xf32>
      %45 = vector.broadcast %44 : vector<1x256xf32> to vector<16x256xf32>
      %46 = arith.mulf %36, %45 : vector<16x256xf32>
      %c0_29 = arith.constant 0 : index
      %c0_30 = arith.constant 0 : index
      %c0_31 = arith.constant 0 : index
      %47 = vector.load %arg4[%c0_29, %c0_30, %c0_31] : memref<4x16x1xf32, #tpu.memory_space<vmem>>, vector<1x16x1xf32>
      %48 = vector.shape_cast %47 : vector<1x16x1xf32> to vector<16x1xf32>
      %49 = vector.broadcast %48 : vector<16x1xf32> to vector<16x256xf32>
      %50 = arith.mulf %46, %49 : vector<16x256xf32>
      %c0_32 = arith.constant 0 : index
      %c0_33 = arith.constant 0 : index
      %c0_34 = arith.constant 0 : index
      %51 = vector.load %arg5[%c0_32, %c0_33, %c0_34] : memref<4x16x1xf32, #tpu.memory_space<vmem>>, vector<1x16x1xf32>
      %52 = vector.shape_cast %51 : vector<1x16x1xf32> to vector<16x1xf32>
      %53 = vector.broadcast %52 : vector<16x1xf32> to vector<16x256xf32>
      %54 = arith.addf %50, %53 : vector<16x256xf32>
      %c0_35 = arith.constant 0 : index
      %c0_36 = arith.constant 0 : index
      %c0_37 = arith.constant 0 : index
      %55 = vector.load %arg6[%c0_35, %c0_36, %c0_37] : memref<4x16x16xbf16, #tpu.memory_space<vmem>>, vector<1x16x16xbf16>
      %56 = vector.shape_cast %55 : vector<1x16x16xbf16> to vector<16x16xbf16>
      %57 = arith.truncf %54 : vector<16x256xf32> to vector<16x256xbf16>
      %cst_38 = arith.constant dense<0.000000e+00> : vector<16x256xf32>
      %58 = tpu.matmul %56, %57, %cst_38 {dimension_numbers = #tpu.dot_dimension_numbers<[1], [0], [0], [1], [0, 0, 1, 1], [], []>} : vector<16x16xbf16>, vector<16x256xbf16>, vector<16x256xf32> -> vector<16x256xf32>
      %c0_39 = arith.constant 0 : index
      %c0_40 = arith.constant 0 : index
      %c0_41 = arith.constant 0 : index
      %59 = vector.load %arg7[%c0_39, %c0_40, %c0_41] : memref<4x16x1xf32, #tpu.memory_space<vmem>>, vector<1x16x1xf32>
      %60 = vector.shape_cast %59 : vector<1x16x1xf32> to vector<16x1xf32>
      %61 = vector.broadcast %60 : vector<16x1xf32> to vector<16x256xf32>
      %62 = arith.addf %58, %61 : vector<16x256xf32>
      %cst_42 = arith.constant 0.000000e+00 : f32
      %63 = vector.broadcast %cst_42 : f32 to vector<16x256xf32>
      %64 = arith.maximumf %62, %63 : vector<16x256xf32>
      %c0_43 = arith.constant 0 : index
      %c0_44 = arith.constant 0 : index
      %c0_45 = arith.constant 0 : index
      %65 = vector.load %arg8[%c0_43, %c0_44, %c0_45] : memref<4x16x16xbf16, #tpu.memory_space<vmem>>, vector<1x16x16xbf16>
      %66 = vector.shape_cast %65 : vector<1x16x16xbf16> to vector<16x16xbf16>
      %67 = arith.truncf %64 : vector<16x256xf32> to vector<16x256xbf16>
      %cst_46 = arith.constant dense<0.000000e+00> : vector<16x256xf32>
      %68 = tpu.matmul %66, %67, %cst_46 {dimension_numbers = #tpu.dot_dimension_numbers<[1], [0], [0], [1], [0, 0, 1, 1], [], []>} : vector<16x16xbf16>, vector<16x256xbf16>, vector<16x256xf32> -> vector<16x256xf32>
      %c0_47 = arith.constant 0 : index
      %c0_48 = arith.constant 0 : index
      %c0_49 = arith.constant 0 : index
      %69 = vector.load %arg9[%c0_47, %c0_48, %c0_49] : memref<4x16x1xf32, #tpu.memory_space<vmem>>, vector<1x16x1xf32>
      %70 = vector.shape_cast %69 : vector<1x16x1xf32> to vector<16x1xf32>
      %71 = vector.broadcast %70 : vector<16x1xf32> to vector<16x256xf32>
      %72 = arith.addf %68, %71 : vector<16x256xf32>
      %73 = arith.addf %30, %72 : vector<16x256xf32>
      %cst_50 = arith.constant dense<0.000000e+00> : vector<256xf32>
      %74 = vector.multi_reduction <add>, %73, %cst_50 [0] : vector<16x256xf32> to vector<256xf32>
      %75 = vector.shape_cast %74 : vector<256xf32> to vector<1x256xf32>
      %cst_51 = arith.constant 1.600000e+01 : f32
      %76 = vector.broadcast %cst_51 : f32 to vector<1x256xf32>
      %77 = arith.divf %75, %76 : vector<1x256xf32>
      %78 = vector.broadcast %77 : vector<1x256xf32> to vector<16x256xf32>
      %79 = arith.subf %73, %78 : vector<16x256xf32>
      %80 = arith.mulf %79, %79 : vector<16x256xf32>
      %cst_52 = arith.constant dense<0.000000e+00> : vector<256xf32>
      %81 = vector.multi_reduction <add>, %80, %cst_52 [0] : vector<16x256xf32> to vector<256xf32>
      %82 = vector.shape_cast %81 : vector<256xf32> to vector<1x256xf32>
      %cst_53 = arith.constant 1.600000e+01 : f32
      %83 = vector.broadcast %cst_53 : f32 to vector<1x256xf32>
      %84 = arith.divf %82, %83 : vector<1x256xf32>
      %cst_54 = arith.constant 9.99999974E-6 : f32
      %85 = vector.broadcast %cst_54 : f32 to vector<1x256xf32>
      %86 = arith.addf %84, %85 : vector<1x256xf32>
      %87 = math.rsqrt %86 : vector<1x256xf32>
      %88 = vector.broadcast %87 : vector<1x256xf32> to vector<16x256xf32>
      %89 = arith.mulf %79, %88 : vector<16x256xf32>
      %c1_55 = arith.constant 1 : index
      %c0_56 = arith.constant 0 : index
      %c0_57 = arith.constant 0 : index
      %90 = vector.load %arg4[%c1_55, %c0_56, %c0_57] : memref<4x16x1xf32, #tpu.memory_space<vmem>>, vector<1x16x1xf32>
      %91 = vector.shape_cast %90 : vector<1x16x1xf32> to vector<16x1xf32>
      %92 = vector.broadcast %91 : vector<16x1xf32> to vector<16x256xf32>
      %93 = arith.mulf %89, %92 : vector<16x256xf32>
      %c1_58 = arith.constant 1 : index
      %c0_59 = arith.constant 0 : index
      %c0_60 = arith.constant 0 : index
      %94 = vector.load %arg5[%c1_58, %c0_59, %c0_60] : memref<4x16x1xf32, #tpu.memory_space<vmem>>, vector<1x16x1xf32>
      %95 = vector.shape_cast %94 : vector<1x16x1xf32> to vector<16x1xf32>
      %96 = vector.broadcast %95 : vector<16x1xf32> to vector<16x256xf32>
      %97 = arith.addf %93, %96 : vector<16x256xf32>
      %c1_61 = arith.constant 1 : index
      %c0_62 = arith.constant 0 : index
      %c0_63 = arith.constant 0 : index
      %98 = vector.load %arg6[%c1_61, %c0_62, %c0_63] : memref<4x16x16xbf16, #tpu.memory_space<vmem>>, vector<1x16x16xbf16>
      %99 = vector.shape_cast %98 : vector<1x16x16xbf16> to vector<16x16xbf16>
      %100 = arith.truncf %97 : vector<16x256xf32> to vector<16x256xbf16>
      %cst_64 = arith.constant dense<0.000000e+00> : vector<16x256xf32>
      %101 = tpu.matmul %99, %100, %cst_64 {dimension_numbers = #tpu.dot_dimension_numbers<[1], [0], [0], [1], [0, 0, 1, 1], [], []>} : vector<16x16xbf16>, vector<16x256xbf16>, vector<16x256xf32> -> vector<16x256xf32>
      %c1_65 = arith.constant 1 : index
      %c0_66 = arith.constant 0 : index
      %c0_67 = arith.constant 0 : index
      %102 = vector.load %arg7[%c1_65, %c0_66, %c0_67] : memref<4x16x1xf32, #tpu.memory_space<vmem>>, vector<1x16x1xf32>
      %103 = vector.shape_cast %102 : vector<1x16x1xf32> to vector<16x1xf32>
      %104 = vector.broadcast %103 : vector<16x1xf32> to vector<16x256xf32>
      %105 = arith.addf %101, %104 : vector<16x256xf32>
      %cst_68 = arith.constant 0.000000e+00 : f32
      %106 = vector.broadcast %cst_68 : f32 to vector<16x256xf32>
      %107 = arith.maximumf %105, %106 : vector<16x256xf32>
      %c1_69 = arith.constant 1 : index
      %c0_70 = arith.constant 0 : index
      %c0_71 = arith.constant 0 : index
      %108 = vector.load %arg8[%c1_69, %c0_70, %c0_71] : memref<4x16x16xbf16, #tpu.memory_space<vmem>>, vector<1x16x16xbf16>
      %109 = vector.shape_cast %108 : vector<1x16x16xbf16> to vector<16x16xbf16>
      %110 = arith.truncf %107 : vector<16x256xf32> to vector<16x256xbf16>
      %cst_72 = arith.constant dense<0.000000e+00> : vector<16x256xf32>
      %111 = tpu.matmul %109, %110, %cst_72 {dimension_numbers = #tpu.dot_dimension_numbers<[1], [0], [0], [1], [0, 0, 1, 1], [], []>} : vector<16x16xbf16>, vector<16x256xbf16>, vector<16x256xf32> -> vector<16x256xf32>
      %c1_73 = arith.constant 1 : index
      %c0_74 = arith.constant 0 : index
      %c0_75 = arith.constant 0 : index
      %112 = vector.load %arg9[%c1_73, %c0_74, %c0_75] : memref<4x16x1xf32, #tpu.memory_space<vmem>>, vector<1x16x1xf32>
      %113 = vector.shape_cast %112 : vector<1x16x1xf32> to vector<16x1xf32>
      %114 = vector.broadcast %113 : vector<16x1xf32> to vector<16x256xf32>
      %115 = arith.addf %111, %114 : vector<16x256xf32>
      %116 = arith.addf %73, %115 : vector<16x256xf32>
      %cst_76 = arith.constant dense<0.000000e+00> : vector<256xf32>
      %117 = vector.multi_reduction <add>, %116, %cst_76 [0] : vector<16x256xf32> to vector<256xf32>
      %118 = vector.shape_cast %117 : vector<256xf32> to vector<1x256xf32>
      %cst_77 = arith.constant 1.600000e+01 : f32
      %119 = vector.broadcast %cst_77 : f32 to vector<1x256xf32>
      %120 = arith.divf %118, %119 : vector<1x256xf32>
      %121 = vector.broadcast %120 : vector<1x256xf32> to vector<16x256xf32>
      %122 = arith.subf %116, %121 : vector<16x256xf32>
      %123 = arith.mulf %122, %122 : vector<16x256xf32>
      %cst_78 = arith.constant dense<0.000000e+00> : vector<256xf32>
      %124 = vector.multi_reduction <add>, %123, %cst_78 [0] : vector<16x256xf32> to vector<256xf32>
      %125 = vector.shape_cast %124 : vector<256xf32> to vector<1x256xf32>
      %cst_79 = arith.constant 1.600000e+01 : f32
      %126 = vector.broadcast %cst_79 : f32 to vector<1x256xf32>
      %127 = arith.divf %125, %126 : vector<1x256xf32>
      %cst_80 = arith.constant 9.99999974E-6 : f32
      %128 = vector.broadcast %cst_80 : f32 to vector<1x256xf32>
      %129 = arith.addf %127, %128 : vector<1x256xf32>
      %130 = math.rsqrt %129 : vector<1x256xf32>
      %131 = vector.broadcast %130 : vector<1x256xf32> to vector<16x256xf32>
      %132 = arith.mulf %122, %131 : vector<16x256xf32>
      %c2 = arith.constant 2 : index
      %c0_81 = arith.constant 0 : index
      %c0_82 = arith.constant 0 : index
      %133 = vector.load %arg4[%c2, %c0_81, %c0_82] : memref<4x16x1xf32, #tpu.memory_space<vmem>>, vector<1x16x1xf32>
      %134 = vector.shape_cast %133 : vector<1x16x1xf32> to vector<16x1xf32>
      %135 = vector.broadcast %134 : vector<16x1xf32> to vector<16x256xf32>
      %136 = arith.mulf %132, %135 : vector<16x256xf32>
      %c2_83 = arith.constant 2 : index
      %c0_84 = arith.constant 0 : index
      %c0_85 = arith.constant 0 : index
      %137 = vector.load %arg5[%c2_83, %c0_84, %c0_85] : memref<4x16x1xf32, #tpu.memory_space<vmem>>, vector<1x16x1xf32>
      %138 = vector.shape_cast %137 : vector<1x16x1xf32> to vector<16x1xf32>
      %139 = vector.broadcast %138 : vector<16x1xf32> to vector<16x256xf32>
      %140 = arith.addf %136, %139 : vector<16x256xf32>
      %c2_86 = arith.constant 2 : index
      %c0_87 = arith.constant 0 : index
      %c0_88 = arith.constant 0 : index
      %141 = vector.load %arg6[%c2_86, %c0_87, %c0_88] : memref<4x16x16xbf16, #tpu.memory_space<vmem>>, vector<1x16x16xbf16>
      %142 = vector.shape_cast %141 : vector<1x16x16xbf16> to vector<16x16xbf16>
      %143 = arith.truncf %140 : vector<16x256xf32> to vector<16x256xbf16>
      %cst_89 = arith.constant dense<0.000000e+00> : vector<16x256xf32>
      %144 = tpu.matmul %142, %143, %cst_89 {dimension_numbers = #tpu.dot_dimension_numbers<[1], [0], [0], [1], [0, 0, 1, 1], [], []>} : vector<16x16xbf16>, vector<16x256xbf16>, vector<16x256xf32> -> vector<16x256xf32>
      %c2_90 = arith.constant 2 : index
      %c0_91 = arith.constant 0 : index
      %c0_92 = arith.constant 0 : index
      %145 = vector.load %arg7[%c2_90, %c0_91, %c0_92] : memref<4x16x1xf32, #tpu.memory_space<vmem>>, vector<1x16x1xf32>
      %146 = vector.shape_cast %145 : vector<1x16x1xf32> to vector<16x1xf32>
      %147 = vector.broadcast %146 : vector<16x1xf32> to vector<16x256xf32>
      %148 = arith.addf %144, %147 : vector<16x256xf32>
      %cst_93 = arith.constant 0.000000e+00 : f32
      %149 = vector.broadcast %cst_93 : f32 to vector<16x256xf32>
      %150 = arith.maximumf %148, %149 : vector<16x256xf32>
      %c2_94 = arith.constant 2 : index
      %c0_95 = arith.constant 0 : index
      %c0_96 = arith.constant 0 : index
      %151 = vector.load %arg8[%c2_94, %c0_95, %c0_96] : memref<4x16x16xbf16, #tpu.memory_space<vmem>>, vector<1x16x16xbf16>
      %152 = vector.shape_cast %151 : vector<1x16x16xbf16> to vector<16x16xbf16>
      %153 = arith.truncf %150 : vector<16x256xf32> to vector<16x256xbf16>
      %cst_97 = arith.constant dense<0.000000e+00> : vector<16x256xf32>
      %154 = tpu.matmul %152, %153, %cst_97 {dimension_numbers = #tpu.dot_dimension_numbers<[1], [0], [0], [1], [0, 0, 1, 1], [], []>} : vector<16x16xbf16>, vector<16x256xbf16>, vector<16x256xf32> -> vector<16x256xf32>
      %c2_98 = arith.constant 2 : index
      %c0_99 = arith.constant 0 : index
      %c0_100 = arith.constant 0 : index
      %155 = vector.load %arg9[%c2_98, %c0_99, %c0_100] : memref<4x16x1xf32, #tpu.memory_space<vmem>>, vector<1x16x1xf32>
      %156 = vector.shape_cast %155 : vector<1x16x1xf32> to vector<16x1xf32>
      %157 = vector.broadcast %156 : vector<16x1xf32> to vector<16x256xf32>
      %158 = arith.addf %154, %157 : vector<16x256xf32>
      %159 = arith.addf %116, %158 : vector<16x256xf32>
      %cst_101 = arith.constant dense<0.000000e+00> : vector<256xf32>
      %160 = vector.multi_reduction <add>, %159, %cst_101 [0] : vector<16x256xf32> to vector<256xf32>
      %161 = vector.shape_cast %160 : vector<256xf32> to vector<1x256xf32>
      %cst_102 = arith.constant 1.600000e+01 : f32
      %162 = vector.broadcast %cst_102 : f32 to vector<1x256xf32>
      %163 = arith.divf %161, %162 : vector<1x256xf32>
      %164 = vector.broadcast %163 : vector<1x256xf32> to vector<16x256xf32>
      %165 = arith.subf %159, %164 : vector<16x256xf32>
      %166 = arith.mulf %165, %165 : vector<16x256xf32>
      %cst_103 = arith.constant dense<0.000000e+00> : vector<256xf32>
      %167 = vector.multi_reduction <add>, %166, %cst_103 [0] : vector<16x256xf32> to vector<256xf32>
      %168 = vector.shape_cast %167 : vector<256xf32> to vector<1x256xf32>
      %cst_104 = arith.constant 1.600000e+01 : f32
      %169 = vector.broadcast %cst_104 : f32 to vector<1x256xf32>
      %170 = arith.divf %168, %169 : vector<1x256xf32>
      %cst_105 = arith.constant 9.99999974E-6 : f32
      %171 = vector.broadcast %cst_105 : f32 to vector<1x256xf32>
      %172 = arith.addf %170, %171 : vector<1x256xf32>
      %173 = math.rsqrt %172 : vector<1x256xf32>
      %174 = vector.broadcast %173 : vector<1x256xf32> to vector<16x256xf32>
      %175 = arith.mulf %165, %174 : vector<16x256xf32>
      %c3 = arith.constant 3 : index
      %c0_106 = arith.constant 0 : index
      %c0_107 = arith.constant 0 : index
      %176 = vector.load %arg4[%c3, %c0_106, %c0_107] : memref<4x16x1xf32, #tpu.memory_space<vmem>>, vector<1x16x1xf32>
      %177 = vector.shape_cast %176 : vector<1x16x1xf32> to vector<16x1xf32>
      %178 = vector.broadcast %177 : vector<16x1xf32> to vector<16x256xf32>
      %179 = arith.mulf %175, %178 : vector<16x256xf32>
      %c3_108 = arith.constant 3 : index
      %c0_109 = arith.constant 0 : index
      %c0_110 = arith.constant 0 : index
      %180 = vector.load %arg5[%c3_108, %c0_109, %c0_110] : memref<4x16x1xf32, #tpu.memory_space<vmem>>, vector<1x16x1xf32>
      %181 = vector.shape_cast %180 : vector<1x16x1xf32> to vector<16x1xf32>
      %182 = vector.broadcast %181 : vector<16x1xf32> to vector<16x256xf32>
      %183 = arith.addf %179, %182 : vector<16x256xf32>
      %c3_111 = arith.constant 3 : index
      %c0_112 = arith.constant 0 : index
      %c0_113 = arith.constant 0 : index
      %184 = vector.load %arg6[%c3_111, %c0_112, %c0_113] : memref<4x16x16xbf16, #tpu.memory_space<vmem>>, vector<1x16x16xbf16>
      %185 = vector.shape_cast %184 : vector<1x16x16xbf16> to vector<16x16xbf16>
      %186 = arith.truncf %183 : vector<16x256xf32> to vector<16x256xbf16>
      %cst_114 = arith.constant dense<0.000000e+00> : vector<16x256xf32>
      %187 = tpu.matmul %185, %186, %cst_114 {dimension_numbers = #tpu.dot_dimension_numbers<[1], [0], [0], [1], [0, 0, 1, 1], [], []>} : vector<16x16xbf16>, vector<16x256xbf16>, vector<16x256xf32> -> vector<16x256xf32>
      %c3_115 = arith.constant 3 : index
      %c0_116 = arith.constant 0 : index
      %c0_117 = arith.constant 0 : index
      %188 = vector.load %arg7[%c3_115, %c0_116, %c0_117] : memref<4x16x1xf32, #tpu.memory_space<vmem>>, vector<1x16x1xf32>
      %189 = vector.shape_cast %188 : vector<1x16x1xf32> to vector<16x1xf32>
      %190 = vector.broadcast %189 : vector<16x1xf32> to vector<16x256xf32>
      %191 = arith.addf %187, %190 : vector<16x256xf32>
      %cst_118 = arith.constant 0.000000e+00 : f32
      %192 = vector.broadcast %cst_118 : f32 to vector<16x256xf32>
      %193 = arith.maximumf %191, %192 : vector<16x256xf32>
      %c3_119 = arith.constant 3 : index
      %c0_120 = arith.constant 0 : index
      %c0_121 = arith.constant 0 : index
      %194 = vector.load %arg8[%c3_119, %c0_120, %c0_121] : memref<4x16x16xbf16, #tpu.memory_space<vmem>>, vector<1x16x16xbf16>
      %195 = vector.shape_cast %194 : vector<1x16x16xbf16> to vector<16x16xbf16>
      %196 = arith.truncf %193 : vector<16x256xf32> to vector<16x256xbf16>
      %cst_122 = arith.constant dense<0.000000e+00> : vector<16x256xf32>
      %197 = tpu.matmul %195, %196, %cst_122 {dimension_numbers = #tpu.dot_dimension_numbers<[1], [0], [0], [1], [0, 0, 1, 1], [], []>} : vector<16x16xbf16>, vector<16x256xbf16>, vector<16x256xf32> -> vector<16x256xf32>
      %c3_123 = arith.constant 3 : index
      %c0_124 = arith.constant 0 : index
      %c0_125 = arith.constant 0 : index
      %198 = vector.load %arg9[%c3_123, %c0_124, %c0_125] : memref<4x16x1xf32, #tpu.memory_space<vmem>>, vector<1x16x1xf32>
      %199 = vector.shape_cast %198 : vector<1x16x1xf32> to vector<16x1xf32>
      %200 = vector.broadcast %199 : vector<16x1xf32> to vector<16x256xf32>
      %201 = arith.addf %197, %200 : vector<16x256xf32>
      %202 = arith.addf %159, %201 : vector<16x256xf32>
      %c0_126 = arith.constant 0 : index
      %c0_127 = arith.constant 0 : index
      %203 = vector.load %arg10[%c0_126, %c0_127] : memref<4x16xbf16, #tpu.memory_space<vmem>>, vector<4x16xbf16>
      %204 = arith.truncf %202 : vector<16x256xf32> to vector<16x256xbf16>
      %cst_128 = arith.constant dense<0.000000e+00> : vector<4x256xf32>
      %205 = tpu.matmul %203, %204, %cst_128 {dimension_numbers = #tpu.dot_dimension_numbers<[1], [0], [0], [1], [0, 0, 1, 1], [], []>} : vector<4x16xbf16>, vector<16x256xbf16>, vector<4x256xf32> -> vector<4x256xf32>
      %206 = vector.extract_strided_slice %205 {offsets = [0, 0], sizes = [4, 128], strides = [1, 1]} : vector<4x256xf32> to vector<4x128xf32>
      %207 = arith.truncf %206 : vector<4x128xf32> to vector<4x128xbf16>
      %c0_129 = arith.constant 0 : index
      %c0_130 = arith.constant 0 : index
      %208 = vector.load %arg11[%c0_129, %c0_130] : memref<128x128xbf16, #tpu.memory_space<vmem>>, vector<128x128xbf16>
      %cst_131 = arith.constant dense<0.000000e+00> : vector<4x128xf32>
      %209 = tpu.matmul %207, %208, %cst_131 {dimension_numbers = #tpu.dot_dimension_numbers<[1], [0], [0], [1], [0, 0, 1, 1], [], []>} : vector<4x128xbf16>, vector<128x128xbf16>, vector<4x128xf32> -> vector<4x128xf32>
      %c0_132 = arith.constant 0 : index
      %c0_133 = arith.constant 0 : index
      %210 = vector.load %arg12[%c0_132, %c0_133] : memref<4x128xf32, #tpu.memory_space<vmem>>, vector<4x128xf32>
      %211 = arith.addf %209, %210 : vector<4x128xf32>
      %212 = arith.mulf %211, %211 : vector<4x128xf32>
      %213 = vector.shape_cast %212 : vector<4x128xf32> to vector<1x4x128xf32>
      %cst_134 = arith.constant dense<0.000000e+00> : vector<1xf32>
      %214 = vector.multi_reduction <add>, %213, %cst_134 [1, 2] : vector<1x4x128xf32> to vector<1xf32>
      %215 = vector.shape_cast %214 : vector<1xf32> to vector<1x1x1xf32>
      %216 = vector.extract %215[0, 0, 0] : f32 from vector<1x1x1xf32>
      %217 = math.sqrt %216 : f32
      %cst_135 = arith.constant 9.99999996E-13 : f32
      %218 = arith.maximumf %217, %cst_135 : f32
      %219 = vector.broadcast %218 : f32 to vector<4x128xf32>
      %220 = arith.divf %211, %219 : vector<4x128xf32>
      %221 = vector.extract_strided_slice %220 {offsets = [0, 0], sizes = [1, 128], strides = [1, 1]} : vector<4x128xf32> to vector<1x128xf32>
      %222 = vector.extract_strided_slice %220 {offsets = [1, 0], sizes = [1, 128], strides = [1, 1]} : vector<4x128xf32> to vector<1x128xf32>
      %223 = vector.extract_strided_slice %220 {offsets = [2, 0], sizes = [1, 128], strides = [1, 1]} : vector<4x128xf32> to vector<1x128xf32>
      %224 = vector.extract_strided_slice %220 {offsets = [3, 0], sizes = [1, 128], strides = [1, 1]} : vector<4x128xf32> to vector<1x128xf32>
      %225 = tpu.concatenate %221, %222, %223, %224 in 1 : vector<1x128xf32>, vector<1x128xf32>, vector<1x128xf32>, vector<1x128xf32> -> vector<1x512xf32>
      %226 = vector.extract_strided_slice %205 {offsets = [0, 128], sizes = [4, 128], strides = [1, 1]} : vector<4x256xf32> to vector<4x128xf32>
      %227 = arith.truncf %226 : vector<4x128xf32> to vector<4x128xbf16>
      %c0_136 = arith.constant 0 : index
      %c0_137 = arith.constant 0 : index
      %228 = vector.load %arg11[%c0_136, %c0_137] : memref<128x128xbf16, #tpu.memory_space<vmem>>, vector<128x128xbf16>
      %cst_138 = arith.constant dense<0.000000e+00> : vector<4x128xf32>
      %229 = tpu.matmul %227, %228, %cst_138 {dimension_numbers = #tpu.dot_dimension_numbers<[1], [0], [0], [1], [0, 0, 1, 1], [], []>} : vector<4x128xbf16>, vector<128x128xbf16>, vector<4x128xf32> -> vector<4x128xf32>
      %c0_139 = arith.constant 0 : index
      %c0_140 = arith.constant 0 : index
      %230 = vector.load %arg12[%c0_139, %c0_140] : memref<4x128xf32, #tpu.memory_space<vmem>>, vector<4x128xf32>
      %231 = arith.addf %229, %230 : vector<4x128xf32>
      %232 = arith.mulf %231, %231 : vector<4x128xf32>
      %233 = vector.shape_cast %232 : vector<4x128xf32> to vector<1x4x128xf32>
      %cst_141 = arith.constant dense<0.000000e+00> : vector<1xf32>
      %234 = vector.multi_reduction <add>, %233, %cst_141 [1, 2] : vector<1x4x128xf32> to vector<1xf32>
      %235 = vector.shape_cast %234 : vector<1xf32> to vector<1x1x1xf32>
      %236 = vector.extract %235[0, 0, 0] : f32 from vector<1x1x1xf32>
      %237 = math.sqrt %236 : f32
      %cst_142 = arith.constant 9.99999996E-13 : f32
      %238 = arith.maximumf %237, %cst_142 : f32
      %239 = vector.broadcast %238 : f32 to vector<4x128xf32>
      %240 = arith.divf %231, %239 : vector<4x128xf32>
      %241 = vector.extract_strided_slice %240 {offsets = [0, 0], sizes = [1, 128], strides = [1, 1]} : vector<4x128xf32> to vector<1x128xf32>
      %242 = vector.extract_strided_slice %240 {offsets = [1, 0], sizes = [1, 128], strides = [1, 1]} : vector<4x128xf32> to vector<1x128xf32>
      %243 = vector.extract_strided_slice %240 {offsets = [2, 0], sizes = [1, 128], strides = [1, 1]} : vector<4x128xf32> to vector<1x128xf32>
      %244 = vector.extract_strided_slice %240 {offsets = [3, 0], sizes = [1, 128], strides = [1, 1]} : vector<4x128xf32> to vector<1x128xf32>
      %245 = tpu.concatenate %241, %242, %243, %244 in 1 : vector<1x128xf32>, vector<1x128xf32>, vector<1x128xf32>, vector<1x128xf32> -> vector<1x512xf32>
      %246 = tpu.concatenate %225, %245 in 0 : vector<1x512xf32>, vector<1x512xf32> -> vector<2x512xf32>
      %247 = arith.truncf %246 : vector<2x512xf32> to vector<2x512xbf16>
      %c0_143 = arith.constant 0 : index
      %c0_144 = arith.constant 0 : index
      %248 = vector.load %arg16[%c0_143, %c0_144] : memref<2x512xbf16, #tpu.memory_space<vmem>>, vector<2x512xbf16>
      tpu.vector_store %arg16[%c0_143, %c0_144], %247 {strides = array<i32>} : memref<2x512xbf16, #tpu.memory_space<vmem>>, vector<2x512xbf16>,
    } else {
    }
    %c0 = arith.constant 0 : index
    %c0_1 = arith.constant 0 : index
    %3 = vector.load %arg16[%c0, %c0_1] : memref<2x512xbf16, #tpu.memory_space<vmem>>, vector<2x512xbf16>
    %c0_2 = arith.constant 0 : index
    %c0_3 = arith.constant 0 : index
    %4 = vector.load %arg13[%c0_2, %c0_3] : memref<512x256xbf16, #tpu.memory_space<vmem>>, vector<512x256xbf16>
    %cst = arith.constant dense<0.000000e+00> : vector<2x256xf32>
    %5 = tpu.matmul %3, %4, %cst {dimension_numbers = #tpu.dot_dimension_numbers<[1], [0], [0], [1], [0, 0, 1, 1], [], []>} : vector<2x512xbf16>, vector<512x256xbf16>, vector<2x256xf32> -> vector<2x256xf32>
    %c0_4 = arith.constant 0 : index
    %c0_5 = arith.constant 0 : index
    %6 = vector.load %arg14[%c0_4, %c0_5] : memref<1x256xf32, #tpu.memory_space<vmem>>, vector<1x256xf32>
    %7 = vector.broadcast %6 : vector<1x256xf32> to vector<2x256xf32>
    %8 = arith.addf %5, %7 : vector<2x256xf32>
    %9 = arith.index_cast %arg0 : i32 to index
    %c0_6 = arith.constant 0 : index
    %c0_7 = arith.constant 0 : index
    %10 = vector.load %arg17[%9, %c0_6, %c0_7] : memref<2x2x256xf32, #tpu.memory_space<vmem>>, vector<1x2x256xf32>
    %11 = vector.shape_cast %10 : vector<1x2x256xf32> to vector<2x256xf32>
    %12 = vector.shape_cast %8 : vector<2x256xf32> to vector<1x2x256xf32>
    tpu.vector_store %arg17[%9, %c0_6, %c0_7], %12 {strides = array<i32>} : memref<2x2x256xf32, #tpu.memory_space<vmem>>, vector<1x2x256xf32>,
    %c1_i32 = arith.constant 1 : i32
    %13 = arith.cmpi eq, %arg0, %c1_i32 : i32
    %14 = arith.extui %13 : i1 to i32
    %c0_i32_8 = arith.constant 0 : i32
    %15 = arith.cmpi ne, %14, %c0_i32_8 : i32
    scf.if %15 {
      %c0_9 = arith.constant 0 : index
      %c0_10 = arith.constant 0 : index
      %c0_11 = arith.constant 0 : index
      %16 = vector.load %arg17[%c0_9, %c0_10, %c0_11] : memref<2x2x256xf32, #tpu.memory_space<vmem>>, vector<1x2x256xf32>
      %17 = vector.shape_cast %16 : vector<1x2x256xf32> to vector<2x256xf32>
      %c1 = arith.constant 1 : index
      %c0_12 = arith.constant 0 : index
      %c0_13 = arith.constant 0 : index
      %18 = vector.load %arg17[%c1, %c0_12, %c0_13] : memref<2x2x256xf32, #tpu.memory_space<vmem>>, vector<1x2x256xf32>
      %19 = vector.shape_cast %18 : vector<1x2x256xf32> to vector<2x256xf32>
      %20 = tpu.concatenate %17, %19 in 1 : vector<2x256xf32>, vector<2x256xf32> -> vector<2x512xf32>
      %21 = arith.mulf %20, %20 : vector<2x512xf32>
      %cst_14 = arith.constant dense<0.000000e+00> : vector<2xf32>
      %22 = vector.multi_reduction <add>, %21, %cst_14 [1] : vector<2x512xf32> to vector<2xf32>
      %23 = vector.shape_cast %22 : vector<2xf32> to vector<2x1xf32>
      %24 = math.sqrt %23 : vector<2x1xf32>
      %cst_15 = arith.constant 9.99999996E-13 : f32
      %25 = vector.broadcast %cst_15 : f32 to vector<2x1xf32>
      %26 = arith.maximumf %24, %25 : vector<2x1xf32>
      %27 = vector.broadcast %26 : vector<2x1xf32> to vector<2x512xf32>
      %28 = arith.divf %20, %27 : vector<2x512xf32>
      %c0_16 = arith.constant 0 : index
      %c0_17 = arith.constant 0 : index
      %29 = vector.load %arg15[%c0_16, %c0_17] : memref<2x512xf32, #tpu.memory_space<vmem>>, vector<2x512xf32>
      tpu.vector_store %arg15[%c0_16, %c0_17], %28 {strides = array<i32>} : memref<2x512xf32, #tpu.memory_space<vmem>>, vector<2x512xf32>,
    } else {
    }
    return
  }
  func.func @transform_0(%arg0: i32) -> (i32, i32, i32) {
    %c0_i32 = arith.constant 0 : i32
    %c0_i32_0 = arith.constant 0 : i32
    %c0_i32_1 = arith.constant 0 : i32
    %c0_i32_2 = arith.constant 0 : i32
    return %c0_i32, %c0_i32_0, %c0_i32_1 : i32, i32, i32
  }
  func.func @transform_1(%arg0: i32) -> (i32, i32) {
    %c0_i32 = arith.constant 0 : i32
    %c0_i32_0 = arith.constant 0 : i32
    %c0_i32_1 = arith.constant 0 : i32
    return %c0_i32, %c0_i32_0 : i32, i32
  }
  func.func @transform_2(%arg0: i32) -> (i32, i32) {
    %c0_i32 = arith.constant 0 : i32
    %c0_i32_0 = arith.constant 0 : i32
    %c0_i32_1 = arith.constant 0 : i32
    return %c0_i32, %c0_i32_0 : i32, i32
  }
  func.func @transform_3(%arg0: i32) -> (i32, i32, i32) {
    %c0_i32 = arith.constant 0 : i32
    %c0_i32_0 = arith.constant 0 : i32
    %c0_i32_1 = arith.constant 0 : i32
    %c0_i32_2 = arith.constant 0 : i32
    return %c0_i32, %c0_i32_0, %c0_i32_1 : i32, i32, i32
  }
  func.func @transform_4(%arg0: i32) -> (i32, i32, i32) {
    %c0_i32 = arith.constant 0 : i32
    %c0_i32_0 = arith.constant 0 : i32
    %c0_i32_1 = arith.constant 0 : i32
    %c0_i32_2 = arith.constant 0 : i32
    return %c0_i32, %c0_i32_0, %c0_i32_1 : i32, i32, i32
  }
  func.func @transform_5(%arg0: i32) -> (i32, i32, i32) {
    %c0_i32 = arith.constant 0 : i32
    %c0_i32_0 = arith.constant 0 : i32
    %c0_i32_1 = arith.constant 0 : i32
    %c0_i32_2 = arith.constant 0 : i32
    return %c0_i32, %c0_i32_0, %c0_i32_1 : i32, i32, i32
  }
  func.func @transform_6(%arg0: i32) -> (i32, i32, i32) {
    %c0_i32 = arith.constant 0 : i32
    %c0_i32_0 = arith.constant 0 : i32
    %c0_i32_1 = arith.constant 0 : i32
    %c0_i32_2 = arith.constant 0 : i32
    return %c0_i32, %c0_i32_0, %c0_i32_1 : i32, i32, i32
  }
  func.func @transform_7(%arg0: i32) -> (i32, i32, i32) {
    %c0_i32 = arith.constant 0 : i32
    %c0_i32_0 = arith.constant 0 : i32
    %c0_i32_1 = arith.constant 0 : i32
    %c0_i32_2 = arith.constant 0 : i32
    return %c0_i32, %c0_i32_0, %c0_i32_1 : i32, i32, i32
  }
  func.func @transform_8(%arg0: i32) -> (i32, i32, i32) {
    %c0_i32 = arith.constant 0 : i32
    %c0_i32_0 = arith.constant 0 : i32
    %c0_i32_1 = arith.constant 0 : i32
    %c0_i32_2 = arith.constant 0 : i32
    return %c0_i32, %c0_i32_0, %c0_i32_1 : i32, i32, i32
  }
  func.func @transform_9(%arg0: i32) -> (i32, i32) {
    %c0_i32 = arith.constant 0 : i32
    %c0_i32_0 = arith.constant 0 : i32
    %c0_i32_1 = arith.constant 0 : i32
    return %c0_i32, %c0_i32_0 : i32, i32
  }
  func.func @transform_10(%arg0: i32) -> (i32, i32) {
    %c0_i32 = arith.constant 0 : i32
    %c0_i32_0 = arith.constant 0 : i32
    %c0_i32_1 = arith.constant 0 : i32
    return %c0_i32, %c0_i32_0 : i32, i32
  }
  func.func @transform_11(%arg0: i32) -> (i32, i32) {
    %c0_i32 = arith.constant 0 : i32
    %c0_i32_0 = arith.constant 0 : i32
    %c0_i32_1 = arith.constant 0 : i32
    return %c0_i32, %c0_i32_0 : i32, i32
  }
  func.func @transform_12(%arg0: i32) -> (i32, i32) {
    %c0_i32 = arith.constant 0 : i32
    %c0_i32_0 = arith.constant 0 : i32
    return %c0_i32, %arg0 : i32, i32
  }
  func.func @transform_13(%arg0: i32) -> (i32, i32) {
    %c0_i32 = arith.constant 0 : i32
    %c0_i32_0 = arith.constant 0 : i32
    return %c0_i32, %arg0 : i32, i32
  }
  func.func @transform_14(%arg0: i32) -> (i32, i32) {
    %c0_i32 = arith.constant 0 : i32
    %c0_i32_0 = arith.constant 0 : i32
    %c0_i32_1 = arith.constant 0 : i32
    return %c0_i32, %c0_i32_0 : i32, i32
  }
}

</mosaic_0001>

<llo_original>
// kernel: apl_forward.1
$region0: #{apl_forward.1}
  #allocation0 [shape = 'u32[]', space=smem, size = 0x4, offset = 0x4, fixed_abs, tag = 'smem constant byte address 0x4 - core index']
  #allocation1 [shape = 'u32[144,128]{1,0:T(1,128)}', space=vmem, size = 0x12000, scoped, tag = 'internal scratch']
  #allocation2 [shape = 'bf16[2,512]{1,0:T(2,128)(2,1)}', space=vmem, size = 0x800, scoped, tag = 'scratch operand']
  #allocation3 [shape = 'f32[2,2,256]{2,1,0:T(2,128)}', space=vmem, size = 0x1000, scoped, tag = 'scratch operand']
  %s0 = inlined_call_operand.vmem [shape: bf16[2,16,768], index: 0, kind: input, shape index: {}]
  %s1 = inlined_call_operand.vmem [shape: bf16[768,128], index: 1, kind: input, shape index: {}]
  %s2 = inlined_call_operand.vmem [shape: f32[1,128], index: 2, kind: input, shape index: {}]
  %s3 = inlined_call_operand.vmem [shape: f32[4,16,1], index: 3, kind: input, shape index: {}]
  %s4 = inlined_call_operand.vmem [shape: f32[4,16,1], index: 4, kind: input, shape index: {}]
  %s5 = inlined_call_operand.vmem [shape: bf16[4,16,16], index: 5, kind: input, shape index: {}]
  %s6 = inlined_call_operand.vmem [shape: f32[4,16,1], index: 6, kind: input, shape index: {}]
  %s7 = inlined_call_operand.vmem [shape: bf16[4,16,16], index: 7, kind: input, shape index: {}]
  %s8 = inlined_call_operand.vmem [shape: f32[4,16,1], index: 8, kind: input, shape index: {}]
  %s9 = inlined_call_operand.vmem [shape: bf16[4,16], index: 9, kind: input, shape index: {}]
  %s10 = inlined_call_operand.vmem [shape: bf16[128,128], index: 10, kind: input, shape index: {}]
  %s11 = inlined_call_operand.vmem [shape: f32[4,128], index: 11, kind: input, shape index: {}]
  %s12 = inlined_call_operand.vmem [shape: bf16[512,512], index: 12, kind: input, shape index: {}]
  %s13 = inlined_call_operand.vmem [shape: f32[1,512], index: 13, kind: input, shape index: {}]
  %s14 = inlined_call_operand.hbm [shape: f32[2,512], index: 14, kind: output, shape index: {}]
  %s15 = sld [smem:[#allocation0]]
  $region135: #{apl_forward.1} parent=0
    _
  %s17 = ssub.s32 1, %s15
  %s18 = scalar_select 0, %s17, %s15
  $region1: #{apl_forward.1} parent=0
    #allocation4 [shape = 'u8[524288]{0}', space=vmem, size = 0x80000, scoped, tag = 'input window, operand 12']
    #allocation5 [shape = 'u8[4096]{0}', space=vmem, size = 0x1000, scoped, tag = 'output window, operand 0, single buffered']
    #allocation6 [shape = 's32[2]{0}', space=sflag, size = 0x8, scoped, tag = 'scoped memory for apl_forward.1']
    %19 = vsyncpa [#allocation6], 0
    loop: start=0, step=1, limit=4
    $region2: #{apl_forward.1} parent=1 // loop_pre_header
      _
    $region3: #{apl_forward.1} parent=1 // loop_header
      %s21 = sphi 0, %s25
      %p22 = scmp.ge.s32.totalorder %s21, 4
      %s29 = sphi 0, %s29
      %s31 = sphi 0, %s29
      %s32 = sphi 0, %s31
      %s46 = sphi 0, %s32
      %s50 = sphi 0, %s50
      %s52 = sphi 0, %s50
      %s53 = sphi 0, %s52
      %s67 = sphi 0, %s53
      %s71 = sphi 0, %s71
      %s73 = sphi 0, %s71
      %s74 = sphi 0, %s73
      %s88 = sphi 0, %s74
      %s92 = sphi 0, %s92
      %s94 = sphi 0, %s92
      %s95 = sphi 0, %s94
      %s109 = sphi 0, %s95
      %s113 = sphi 0, %s113
      %s115 = sphi 0, %s113
      %s116 = sphi 0, %s115
      %s130 = sphi 0, %s116
      %s134 = sphi 0, %s134
      %s136 = sphi 0, %s134
      %s137 = sphi 0, %s136
      %s151 = sphi 0, %s137
      %s155 = sphi 0, %s155
      %s157 = sphi 0, %s155
      %s158 = sphi 0, %s157
      %s172 = sphi 0, %s158
      %s176 = sphi 0, %s176
      %s178 = sphi 0, %s176
      %s179 = sphi 0, %s178
      %s193 = sphi 0, %s179
      %s197 = sphi 0, %s197
      %s199 = sphi 0, %s197
      %s200 = sphi 0, %s199
      %s214 = sphi 0, %s200
      %s218 = sphi 0, %s218
      %s220 = sphi 0, %s218
      %s221 = sphi 0, %s220
      %s235 = sphi 0, %s221
      %s239 = sphi 0, %s239
      %s241 = sphi 0, %s239
      %s242 = sphi 0, %s241
      %s256 = sphi 0, %s242
      %s260 = sphi 0, %s260
      %s262 = sphi 0, %s260
      %s263 = sphi 0, %s262
      %s277 = sphi 0, %s263
      %s283 = sphi 0, %s285
      %s286 = sphi 0, %s283
      %s287 = sphi 0, %s286
      %s303 = sphi 0, %s287
      %s309 = sphi 0, %s311
      %s312 = sphi 0, %s309
      %s313 = sphi 0, %s312
      %s329 = sphi 0, %s313
      %s333 = sphi 0, %s333
      %s335 = sphi 0, %s333
      %s336 = sphi 0, %s335
      %s350 = sphi 0, %s336
    $region4: #{apl_forward.1} parent=1 // loop_header_branch
      %24 = sbr.rel (%p22) target = $region8
    $region5: #{apl_forward.1} parent=1 // loop_body
      %s26 = ssub.s32 %s21, 1
      %s27 = ssub.s32 %s21, 2
      %s28 = sadd.s32 %s21, 1
      %s30 = sadd.s32 %s29, 1
      %p33 = scmp.eq.s32.totalorder %s21, 1
      %p34 = scmp.ne.s32.totalorder %s29, %s31
      %p35 = scmp.eq.s32.totalorder %s21, 0
      %p36 = por %p34, %p35
      %p37 = scmp.ne.s32.totalorder %s29, %s31
      %p38 = scmp.eq.s32.totalorder %s26, 1
      %p39 = por %p37, %p38
      %p40 = scmp.ne.s32.totalorder %s31, %s32
      %p41 = scmp.eq.s32.totalorder %s26, 0
      %p42 = por %p40, %p41
      %p43 = scmp.ne.s32.totalorder %s31, %s32
      %p44 = scmp.eq.s32.totalorder %s27, 1
      %p45 = por %p43, %p44
      %p47 = scmp.ne.s32.totalorder %s32, %s46
      %p48 = scmp.eq.s32.totalorder %s27, 0
      %p49 = por %p47, %p48
      %s51 = sadd.s32 %s50, 1
      %p54 = scmp.eq.s32.totalorder %s21, 1
      %p55 = scmp.ne.s32.totalorder %s50, %s52
      %p56 = scmp.eq.s32.totalorder %s21, 0
      %p57 = por %p55, %p56
      %p58 = scmp.ne.s32.totalorder %s50, %s52
      %p59 = scmp.eq.s32.totalorder %s26, 1
      %p60 = por %p58, %p59
      %p61 = scmp.ne.s32.totalorder %s52, %s53
      %p62 = scmp.eq.s32.totalorder %s26, 0
      %p63 = por %p61, %p62
      %p64 = scmp.ne.s32.totalorder %s52, %s53
      %p65 = scmp.eq.s32.totalorder %s27, 1
      %p66 = por %p64, %p65
      %p68 = scmp.ne.s32.totalorder %s53, %s67
      %p69 = scmp.eq.s32.totalorder %s27, 0
      %p70 = por %p68, %p69
      %s72 = sadd.s32 %s71, 1
      %p75 = scmp.eq.s32.totalorder %s21, 1
      %p76 = scmp.ne.s32.totalorder %s71, %s73
      %p77 = scmp.eq.s32.totalorder %s21, 0
      %p78 = por %p76, %p77
      %p79 = scmp.ne.s32.totalorder %s71, %s73
      %p80 = scmp.eq.s32.totalorder %s26, 1
      %p81 = por %p79, %p80
      %p82 = scmp.ne.s32.totalorder %s73, %s74
      %p83 = scmp.eq.s32.totalorder %s26, 0
      %p84 = por %p82, %p83
      %p85 = scmp.ne.s32.totalorder %s73, %s74
      %p86 = scmp.eq.s32.totalorder %s27, 1
      %p87 = por %p85, %p86
      %p89 = scmp.ne.s32.totalorder %s74, %s88
      %p90 = scmp.eq.s32.totalorder %s27, 0
      %p91 = por %p89, %p90
      %s93 = sadd.s32 %s92, 1
      %p96 = scmp.eq.s32.totalorder %s21, 1
      %p97 = scmp.ne.s32.totalorder %s92, %s94
      %p98 = scmp.eq.s32.totalorder %s21, 0
      %p99 = por %p97, %p98
      %p100 = scmp.ne.s32.totalorder %s92, %s94
      %p101 = scmp.eq.s32.totalorder %s26, 1
      %p102 = por %p100, %p101
      %p103 = scmp.ne.s32.totalorder %s94, %s95
      %p104 = scmp.eq.s32.totalorder %s26, 0
      %p105 = por %p103, %p104
      %p106 = scmp.ne.s32.totalorder %s94, %s95
      %p107 = scmp.eq.s32.totalorder %s27, 1
      %p108 = por %p106, %p107
      %p110 = scmp.ne.s32.totalorder %s95, %s109
      %p111 = scmp.eq.s32.totalorder %s27, 0
      %p112 = por %p110, %p111
      %s114 = sadd.s32 %s113, 1
      %p117 = scmp.eq.s32.totalorder %s21, 1
      %p118 = scmp.ne.s32.totalorder %s113, %s115
      %p119 = scmp.eq.s32.totalorder %s21, 0
      %p120 = por %p118, %p119
      %p121 = scmp.ne.s32.totalorder %s113, %s115
      %p122 = scmp.eq.s32.totalorder %s26, 1
      %p123 = por %p121, %p122
      %p124 = scmp.ne.s32.totalorder %s115, %s116
      %p125 = scmp.eq.s32.totalorder %s26, 0
      %p126 = por %p124, %p125
      %p127 = scmp.ne.s32.totalorder %s115, %s116
      %p128 = scmp.eq.s32.totalorder %s27, 1
      %p129 = por %p127, %p128
      %p131 = scmp.ne.s32.totalorder %s116, %s130
      %p132 = scmp.eq.s32.totalorder %s27, 0
      %p133 = por %p131, %p132
      %s135 = sadd.s32 %s134, 1
      %p138 = scmp.eq.s32.totalorder %s21, 1
      %p139 = scmp.ne.s32.totalorder %s134, %s136
      %p140 = scmp.eq.s32.totalorder %s21, 0
      %p141 = por %p139, %p140
      %p142 = scmp.ne.s32.totalorder %s134, %s136
      %p143 = scmp.eq.s32.totalorder %s26, 1
      %p144 = por %p142, %p143
      %p145 = scmp.ne.s32.totalorder %s136, %s137
      %p146 = scmp.eq.s32.totalorder %s26, 0
      %p147 = por %p145, %p146
      %p148 = scmp.ne.s32.totalorder %s136, %s137
      %p149 = scmp.eq.s32.totalorder %s27, 1
      %p150 = por %p148, %p149
      %p152 = scmp.ne.s32.totalorder %s137, %s151
      %p153 = scmp.eq.s32.totalorder %s27, 0
      %p154 = por %p152, %p153
      %s156 = sadd.s32 %s155, 1
      %p159 = scmp.eq.s32.totalorder %s21, 1
      %p160 = scmp.ne.s32.totalorder %s155, %s157
      %p161 = scmp.eq.s32.totalorder %s21, 0
      %p162 = por %p160, %p161
      %p163 = scmp.ne.s32.totalorder %s155, %s157
      %p164 = scmp.eq.s32.totalorder %s26, 1
      %p165 = por %p163, %p164
      %p166 = scmp.ne.s32.totalorder %s157, %s158
      %p167 = scmp.eq.s32.totalorder %s26, 0
      %p168 = por %p166, %p167
      %p169 = scmp.ne.s32.totalorder %s157, %s158
      %p170 = scmp.eq.s32.totalorder %s27, 1
      %p171 = por %p169, %p170
      %p173 = scmp.ne.s32.totalorder %s158, %s172
      %p174 = scmp.eq.s32.totalorder %s27, 0
      %p175 = por %p173, %p174
      %s177 = sadd.s32 %s176, 1
      %p180 = scmp.eq.s32.totalorder %s21, 1
      %p181 = scmp.ne.s32.totalorder %s176, %s178
      %p182 = scmp.eq.s32.totalorder %s21, 0
      %p183 = por %p181, %p182
      %p184 = scmp.ne.s32.totalorder %s176, %s178
      %p185 = scmp.eq.s32.totalorder %s26, 1
      %p186 = por %p184, %p185
      %p187 = scmp.ne.s32.totalorder %s178, %s179
      %p188 = scmp.eq.s32.totalorder %s26, 0
      %p189 = por %p187, %p188
      %p190 = scmp.ne.s32.totalorder %s178, %s179
      %p191 = scmp.eq.s32.totalorder %s27, 1
      %p192 = por %p190, %p191
      %p194 = scmp.ne.s32.totalorder %s179, %s193
      %p195 = scmp.eq.s32.totalorder %s27, 0
      %p196 = por %p194, %p195
      %s198 = sadd.s32 %s197, 1
      %p201 = scmp.eq.s32.totalorder %s21, 1
      %p202 = scmp.ne.s32.totalorder %s197, %s199
      %p203 = scmp.eq.s32.totalorder %s21, 0
      %p204 = por %p202, %p203
      %p205 = scmp.ne.s32.totalorder %s197, %s199
      %p206 = scmp.eq.s32.totalorder %s26, 1
      %p207 = por %p205, %p206
      %p208 = scmp.ne.s32.totalorder %s199, %s200
      %p209 = scmp.eq.s32.totalorder %s26, 0
      %p210 = por %p208, %p209
      %p211 = scmp.ne.s32.totalorder %s199, %s200
      %p212 = scmp.eq.s32.totalorder %s27, 1
      %p213 = por %p211, %p212
      %p215 = scmp.ne.s32.totalorder %s200, %s214
      %p216 = scmp.eq.s32.totalorder %s27, 0
      %p217 = por %p215, %p216
      %s219 = sadd.s32 %s218, 1
      %p222 = scmp.eq.s32.totalorder %s21, 1
      %p223 = scmp.ne.s32.totalorder %s218, %s220
      %p224 = scmp.eq.s32.totalorder %s21, 0
      %p225 = por %p223, %p224
      %p226 = scmp.ne.s32.totalorder %s218, %s220
      %p227 = scmp.eq.s32.totalorder %s26, 1
      %p228 = por %p226, %p227
      %p229 = scmp.ne.s32.totalorder %s220, %s221
      %p230 = scmp.eq.s32.totalorder %s26, 0
      %p231 = por %p229, %p230
      %p232 = scmp.ne.s32.totalorder %s220, %s221
      %p233 = scmp.eq.s32.totalorder %s27, 1
      %p234 = por %p232, %p233
      %p236 = scmp.ne.s32.totalorder %s221, %s235
      %p237 = scmp.eq.s32.totalorder %s27, 0
      %p238 = por %p236, %p237
      %s240 = sadd.s32 %s239, 1
      %p243 = scmp.eq.s32.totalorder %s21, 1
      %p244 = scmp.ne.s32.totalorder %s239, %s241
      %p245 = scmp.eq.s32.totalorder %s21, 0
      %p246 = por %p244, %p245
      %p247 = scmp.ne.s32.totalorder %s239, %s241
      %p248 = scmp.eq.s32.totalorder %s26, 1
      %p249 = por %p247, %p248
      %p250 = scmp.ne.s32.totalorder %s241, %s242
      %p251 = scmp.eq.s32.totalorder %s26, 0
      %p252 = por %p250, %p251
      %p253 = scmp.ne.s32.totalorder %s241, %s242
      %p254 = scmp.eq.s32.totalorder %s27, 1
      %p255 = por %p253, %p254
      %p257 = scmp.ne.s32.totalorder %s242, %s256
      %p258 = scmp.eq.s32.totalorder %s27, 0
      %p259 = por %p257, %p258
      %s261 = sadd.s32 %s260, 1
      %p264 = scmp.eq.s32.totalorder %s21, 1
      %p265 = scmp.ne.s32.totalorder %s260, %s262
      %p266 = scmp.eq.s32.totalorder %s21, 0
      %p267 = por %p265, %p266
      %p268 = scmp.ne.s32.totalorder %s260, %s262
      %p269 = scmp.eq.s32.totalorder %s26, 1
      %p270 = por %p268, %p269
      %p271 = scmp.ne.s32.totalorder %s262, %s263
      %p272 = scmp.eq.s32.totalorder %s26, 0
      %p273 = por %p271, %p272
      %p274 = scmp.ne.s32.totalorder %s262, %s263
      %p275 = scmp.eq.s32.totalorder %s27, 1
      %p276 = por %p274, %p275
      %p278 = scmp.ne.s32.totalorder %s263, %s277
      %p279 = scmp.eq.s32.totalorder %s27, 0
      %p280 = por %p278, %p279
      %s281 = ssub.s32 %s21, %s28
      %p282 = scmp.eq.s32.totalorder %s281, 0
      %s284 = sadd.s32 %s283, 1
      %s285 = scalar_select %p282, %s283, %s284
      %p288 = pneg %p282
      %p289 = scmp.eq.s32.totalorder %s21, 1
      %p290 = por %p288, %p289
      %p291 = scmp.ne.s32.totalorder %s283, %s286
      %p292 = scmp.eq.s32.totalorder %s21, 0
      %p293 = por %p291, %p292
      %p294 = scmp.ne.s32.totalorder %s283, %s286
      %p295 = scmp.eq.s32.totalorder %s26, 1
      %p296 = por %p294, %p295
      %p297 = scmp.ne.s32.totalorder %s286, %s287
      %p298 = scmp.eq.s32.totalorder %s26, 0
      %p299 = por %p297, %p298
      %p300 = scmp.ne.s32.totalorder %s286, %s287
      %p301 = scmp.eq.s32.totalorder %s27, 1
      %p302 = por %p300, %p301
      %p304 = scmp.ne.s32.totalorder %s287, %s303
      %p305 = scmp.eq.s32.totalorder %s27, 0
      %p306 = por %p304, %p305
      %s307 = ssub.s32 %s21, %s28
      %p308 = scmp.eq.s32.totalorder %s307, 0
      %s310 = sadd.s32 %s309, 1
      %s311 = scalar_select %p308, %s309, %s310
      %p314 = pneg %p308
      %p315 = scmp.eq.s32.totalorder %s21, 1
      %p316 = por %p314, %p315
      %p317 = scmp.ne.s32.totalorder %s309, %s312
      %p318 = scmp.eq.s32.totalorder %s21, 0
      %p319 = por %p317, %p318
      %p320 = scmp.ne.s32.totalorder %s309, %s312
      %p321 = scmp.eq.s32.totalorder %s26, 1
      %p322 = por %p320, %p321
      %p323 = scmp.ne.s32.totalorder %s312, %s313
      %p324 = scmp.eq.s32.totalorder %s26, 0
      %p325 = por %p323, %p324
      %p326 = scmp.ne.s32.totalorder %s312, %s313
      %p327 = scmp.eq.s32.totalorder %s27, 1
      %p328 = por %p326, %p327
      %p330 = scmp.ne.s32.totalorder %s313, %s329
      %p331 = scmp.eq.s32.totalorder %s27, 0
      %p332 = por %p330, %p331
      %s334 = sadd.s32 %s333, 1
      %p337 = scmp.eq.s32.totalorder %s21, 1
      %p338 = scmp.ne.s32.totalorder %s333, %s335
      %p339 = scmp.eq.s32.totalorder %s21, 0
      %p340 = por %p338, %p339
      %p341 = scmp.ne.s32.totalorder %s333, %s335
      %p342 = scmp.eq.s32.totalorder %s26, 1
      %p343 = por %p341, %p342
      %p344 = scmp.ne.s32.totalorder %s335, %s336
      %p345 = scmp.eq.s32.totalorder %s26, 0
      %p346 = por %p344, %p345
      %p347 = scmp.ne.s32.totalorder %s335, %s336
      %p348 = scmp.eq.s32.totalorder %s27, 1
      %p349 = por %p347, %p348
      %p351 = scmp.ne.s32.totalorder %s336, %s350
      %p352 = scmp.eq.s32.totalorder %s27, 0
      %p353 = por %p351, %p352
      %p354 = scmp.le.s32.totalorder 1, %s21
      %p355 = scmp.lt.s32.totalorder %s21, 3
      %p356 = pnand %p354, %p355
      %p357 = pneg %p356
      // Predicated region
      $region9: #{apl_forward.1} parent=5 // pred_check
        _
      $region10: #{apl_forward.1} parent=5 // pred_check_branch
        %359 = sbr.rel (%p356) target = $region12
      $region11: #{apl_forward.1} parent=5 // pred_region
        %s360 = ssub.s32 %s21, 1
        // Predicated region
        $region13: #{apl_forward.1} parent=11 // pred_check
          %p361 = pneg %p42
        $region14: #{apl_forward.1} parent=11 // pred_check_branch
          %363 = sbr.rel (%p361) target = $region16
        $region15: #{apl_forward.1} parent=11 // pred_region
          _
        $region16: #{apl_forward.1} parent=11 // pred_fallthru
          _
        // Predicated region
        $region17: #{apl_forward.1} parent=11 // pred_check
          %p364 = pneg %p63
        $region18: #{apl_forward.1} parent=11 // pred_check_branch
          %366 = sbr.rel (%p364) target = $region20
        $region19: #{apl_forward.1} parent=11 // pred_region
          _
        $region20: #{apl_forward.1} parent=11 // pred_fallthru
          _
        // Predicated region
        $region21: #{apl_forward.1} parent=11 // pred_check
          %p367 = pneg %p84
        $region22: #{apl_forward.1} parent=11 // pred_check_branch
          %369 = sbr.rel (%p367) target = $region24
        $region23: #{apl_forward.1} parent=11 // pred_region
          _
        $region24: #{apl_forward.1} parent=11 // pred_fallthru
          _
        // Predicated region
        $region25: #{apl_forward.1} parent=11 // pred_check
          %p370 = pneg %p105
        $region26: #{apl_forward.1} parent=11 // pred_check_branch
          %372 = sbr.rel (%p370) target = $region28
        $region27: #{apl_forward.1} parent=11 // pred_region
          _
        $region28: #{apl_forward.1} parent=11 // pred_fallthru
          _
        // Predicated region
        $region29: #{apl_forward.1} parent=11 // pred_check
          %p373 = pneg %p126
        $region30: #{apl_forward.1} parent=11 // pred_check_branch
          %375 = sbr.rel (%p373) target = $region32
        $region31: #{apl_forward.1} parent=11 // pred_region
          _
        $region32: #{apl_forward.1} parent=11 // pred_fallthru
          _
        // Predicated region
        $region33: #{apl_forward.1} parent=11 // pred_check
          %p376 = pneg %p147
        $region34: #{apl_forward.1} parent=11 // pred_check_branch
          %378 = sbr.rel (%p376) target = $region36
        $region35: #{apl_forward.1} parent=11 // pred_region
          _
        $region36: #{apl_forward.1} parent=11 // pred_fallthru
          _
        // Predicated region
        $region37: #{apl_forward.1} parent=11 // pred_check
          %p379 = pneg %p168
        $region38: #{apl_forward.1} parent=11 // pred_check_branch
          %381 = sbr.rel (%p379) target = $region40
        $region39: #{apl_forward.1} parent=11 // pred_region
          _
        $region40: #{apl_forward.1} parent=11 // pred_fallthru
          _
        // Predicated region
        $region41: #{apl_forward.1} parent=11 // pred_check
          %p382 = pneg %p189
        $region42: #{apl_forward.1} parent=11 // pred_check_branch
          %384 = sbr.rel (%p382) target = $region44
        $region43: #{apl_forward.1} parent=11 // pred_region
          _
        $region44: #{apl_forward.1} parent=11 // pred_fallthru
          _
        // Predicated region
        $region45: #{apl_forward.1} parent=11 // pred_check
          %p385 = pneg %p210
        $region46: #{apl_forward.1} parent=11 // pred_check_branch
          %387 = sbr.rel (%p385) target = $region48
        $region47: #{apl_forward.1} parent=11 // pred_region
          _
        $region48: #{apl_forward.1} parent=11 // pred_fallthru
          _
        // Predicated region
        $region49: #{apl_forward.1} parent=11 // pred_check
          %p388 = pneg %p231
        $region50: #{apl_forward.1} parent=11 // pred_check_branch
          %390 = sbr.rel (%p388) target = $region52
        $region51: #{apl_forward.1} parent=11 // pred_region
          _
        $region52: #{apl_forward.1} parent=11 // pred_fallthru
          _
        // Predicated region
        $region53: #{apl_forward.1} parent=11 // pred_check
          %p391 = pneg %p252
        $region54: #{apl_forward.1} parent=11 // pred_check_branch
          %393 = sbr.rel (%p391) target = $region56
        $region55: #{apl_forward.1} parent=11 // pred_region
          _
        $region56: #{apl_forward.1} parent=11 // pred_fallthru
          _
        // Predicated region
        $region57: #{apl_forward.1} parent=11 // pred_check
          %p394 = pneg %p273
        $region58: #{apl_forward.1} parent=11 // pred_check_branch
          %396 = sbr.rel (%p394) target = $region60
        $region59: #{apl_forward.1} parent=11 // pred_region
          _
        $region60: #{apl_forward.1} parent=11 // pred_fallthru
          _
      $region12: #{apl_forward.1} parent=5 // pred_fallthru
        _
      %p397 = scmp.lt.s32.totalorder %s21, 2
      // Predicated region
      $region61: #{apl_forward.1} parent=5 // pred_check
        %p398 = pneg %p397
      $region62: #{apl_forward.1} parent=5 // pred_check_branch
        %400 = sbr.rel (%p398) target = $region64
      $region63: #{apl_forward.1} parent=5 // pred_region
        // Predicated region
        $region65: #{apl_forward.1} parent=63 // pred_check
          %p401 = pneg %p293
        $region66: #{apl_forward.1} parent=63 // pred_check_branch
          %403 = sbr.rel (%p401) target = $region68
        $region67: #{apl_forward.1} parent=63 // pred_region
          %s404 = sand.u32 %s283, 1
          %s405 = sand.u32 %s283, 1
          %s406 = smul.addr %s405, 512
          %s407 = scalar_lea.vmem [#allocation4], %s406
          %s408 = smul.u32 2, %s21
          %s409 = smul.addr %s408, 4
          %s410 = scalar_lea.vmem %s12, %s409
          // Predicated region
          $region69: #{apl_forward.1} parent=67 // pred_check
            _
          $region70: #{apl_forward.1} parent=67 // pred_check_branch
            %412 = sbr.rel (0) target = $region72
          $region71: #{apl_forward.1} parent=67 // pred_region
            // Predicated region
            $region73: #{apl_forward.1} parent=71 // pred_check
              _
            $region74: #{apl_forward.1} parent=71 // pred_check_branch
              %414 = sbr.rel (0) target = $region76
            $region75: #{apl_forward.1} parent=71 // pred_region
              // Predicated region
              $region88: #{apl_forward.1} parent=75 // pred_check
                _
              $region89: #{apl_forward.1} parent=75 // pred_check_branch
                %555 = sbr.rel (0) target = $region91
              $region90: #{apl_forward.1} parent=75 // pred_region
                loop: start=0, step=1, limit=1
                $region92: #{apl_forward.1} parent=90 // loop_pre_header
                  _
                $region93: #{apl_forward.1} parent=90 // loop_header
                  %s557 = sphi 0, %s561
                  %p558 = scmp.ge.s32.totalorder %s557, 1
                  %s562 = sphi %s410, %s410
                  %s563 = sphi %s407, %s407
                $region94: #{apl_forward.1} parent=90 // loop_header_branch
                  %560 = sbr.rel (%p558) target = $region98
                $region95: #{apl_forward.1} parent=90 // loop_body
                  %v564 = vld [vmem:[%s562] sm:$0xff]
                  %565 = vst [vmem:[%s563] sm:$0xff] %v564
                  %v566 = vld [vmem:[%s562 + $0x10] sm:$0xff]
                  %567 = vst [vmem:[%s563 + $0x8] sm:$0xff] %v566
                  %v568 = vld [vmem:[%s562 + $0x20] sm:$0xff]
                  %569 = vst [vmem:[%s563 + $0x10] sm:$0xff] %v568
                  %v570 = vld [vmem:[%s562 + $0x30] sm:$0xff]
                  %571 = vst [vmem:[%s563 + $0x18] sm:$0xff] %v570
                  %v572 = vld [vmem:[%s562 + $0x40] sm:$0xff]
                  %573 = vst [vmem:[%s563 + $0x20] sm:$0xff] %v572
                  %v574 = vld [vmem:[%s562 + $0x50] sm:$0xff]
                  %575 = vst [vmem:[%s563 + $0x28] sm:$0xff] %v574
                  %v576 = vld [vmem:[%s562 + $0x60] sm:$0xff]
                  %577 = vst [vmem:[%s563 + $0x30] sm:$0xff] %v576
                  %v578 = vld [vmem:[%s562 + $0x70] sm:$0xff]
                  %579 = vst [vmem:[%s563 + $0x38] sm:$0xff] %v578
                  %v580 = vld [vmem:[%s562 + $0x80] sm:$0xff]
                  %581 = vst [vmem:[%s563 + $0x40] sm:$0xff] %v580
                  %v582 = vld [vmem:[%s562 + $0x90] sm:$0xff]
                  %583 = vst [vmem:[%s563 + $0x48] sm:$0xff] %v582
                  %v584 = vld [vmem:[%s562 + $0xa0] sm:$0xff]
                  %585 = vst [vmem:[%s563 + $0x50] sm:$0xff] %v584
                  %v586 = vld [vmem:[%s562 + $0xb0] sm:$0xff]
                  %587 = vst [vmem:[%s563 + $0x58] sm:$0xff] %v586
                  %v588 = vld [vmem:[%s562 + $0xc0] sm:$0xff]
                  %589 = vst [vmem:[%s563 + $0x60] sm:$0xff] %v588
                  %v590 = vld [vmem:[%s562 + $0xd0] sm:$0xff]
                  %591 = vst [vmem:[%s563 + $0x68] sm:$0xff] %v590
                  %v592 = vld [vmem:[%s562 + $0xe0] sm:$0xff]
                  %593 = vst [vmem:[%s563 + $0x70] sm:$0xff] %v592
                  %v594 = vld [vmem:[%s562 + $0xf0] sm:$0xff]
                  %595 = vst [vmem:[%s563 + $0x78] sm:$0xff] %v594
                  %v596 = vld [vmem:[%s562 + $0x100] sm:$0xff]
                  %597 = vst [vmem:[%s563 + $0x80] sm:$0xff] %v596
                  %v598 = vld [vmem:[%s562 + $0x110] sm:$0xff]
                  %599 = vst [vmem:[%s563 + $0x88] sm:$0xff] %v598
                  %v600 = vld [vmem:[%s562 + $0x120] sm:$0xff]
                  %601 = vst [vmem:[%s563 + $0x90] sm:$0xff] %v600
                  %v602 = vld [vmem:[%s562 + $0x130] sm:$0xff]
                  %603 = vst [vmem:[%s563 + $0x98] sm:$0xff] %v602
                  %v604 = vld [vmem:[%s562 + $0x140] sm:$0xff]
                  %605 = vst [vmem:[%s563 + $0xa0] sm:$0xff] %v604
                  %v606 = vld [vmem:[%s562 + $0x150] sm:$0xff]
                  %607 = vst [vmem:[%s563 + $0xa8] sm:$0xff] %v606
                  %v608 = vld [vmem:[%s562 + $0x160] sm:$0xff]
                  %609 = vst [vmem:[%s563 + $0xb0] sm:$0xff] %v608
                  %v610 = vld [vmem:[%s562 + $0x170] sm:$0xff]
                  %611 = vst [vmem:[%s563 + $0xb8] sm:$0xff] %v610
                  %v612 = vld [vmem:[%s562 + $0x180] sm:$0xff]
                  %613 = vst [vmem:[%s563 + $0xc0] sm:$0xff] %v612
                  %v614 = vld [vmem:[%s562 + $0x190] sm:$0xff]
                  %615 = vst [vmem:[%s563 + $0xc8] sm:$0xff] %v614
                  %v616 = vld [vmem:[%s562 + $0x1a0] sm:$0xff]
                  %617 = vst [vmem:[%s563 + $0xd0] sm:$0xff] %v616
                  %v618 = vld [vmem:[%s562 + $0x1b0] sm:$0xff]
                  %619 = vst [vmem:[%s563 + $0xd8] sm:$0xff] %v618
                  %v620 = vld [vmem:[%s562 + $0x1c0] sm:$0xff]
                  %621 = vst [vmem:[%s563 + $0xe0] sm:$0xff] %v620
                  %v622 = vld [vmem:[%s562 + $0x1d0] sm:$0xff]
                  %623 = vst [vmem:[%s563 + $0xe8] sm:$0xff] %v622
                  %v624 = vld [vmem:[%s562 + $0x1e0] sm:$0xff]
                  %625 = vst [vmem:[%s563 + $0xf0] sm:$0xff] %v624
                  %v626 = vld [vmem:[%s562 + $0x1f0] sm:$0xff]
                  %627 = vst [vmem:[%s563 + $0xf8] sm:$0xff] %v626
                  %v628 = vld [vmem:[%s562 + $0x200] sm:$0xff]
                  %629 = vst [vmem:[%s563 + $0x100] sm:$0xff] %v628
                  %v630 = vld [vmem:[%s562 + $0x210] sm:$0xff]
                  %631 = vst [vmem:[%s563 + $0x108] sm:$0xff] %v630
                  %v632 = vld [vmem:[%s562 + $0x220] sm:$0xff]
                  %633 = vst [vmem:[%s563 + $0x110] sm:$0xff] %v632
                  %v634 = vld [vmem:[%s562 + $0x230] sm:$0xff]
                  %635 = vst [vmem:[%s563 + $0x118] sm:$0xff] %v634
                  %v636 = vld [vmem:[%s562 + $0x240] sm:$0xff]
                  %637 = vst [vmem:[%s563 + $0x120] sm:$0xff] %v636
                  %v638 = vld [vmem:[%s562 + $0x250] sm:$0xff]
                  %639 = vst [vmem:[%s563 + $0x128] sm:$0xff] %v638
                  %v640 = vld [vmem:[%s562 + $0x260] sm:$0xff]
                  %641 = vst [vmem:[%s563 + $0x130] sm:$0xff] %v640
                  %v642 = vld [vmem:[%s562 + $0x270] sm:$0xff]
                  %643 = vst [vmem:[%s563 + $0x138] sm:$0xff] %v642
                  %v644 = vld [vmem:[%s562 + $0x280] sm:$0xff]
                  %645 = vst [vmem:[%s563 + $0x140] sm:$0xff] %v644
                  %v646 = vld [vmem:[%s562 + $0x290] sm:$0xff]
                  %647 = vst [vmem:[%s563 + $0x148] sm:$0xff] %v646
                  %v648 = vld [vmem:[%s562 + $0x2a0] sm:$0xff]
                  %649 = vst [vmem:[%s563 + $0x150] sm:$0xff] %v648
                  %v650 = vld [vmem:[%s562 + $0x2b0] sm:$0xff]
                  %651 = vst [vmem:[%s563 + $0x158] sm:$0xff] %v650
                  %v652 = vld [vmem:[%s562 + $0x2c0] sm:$0xff]
                  %653 = vst [vmem:[%s563 + $0x160] sm:$0xff] %v652
                  %v654 = vld [vmem:[%s562 + $0x2d0] sm:$0xff]
                  %655 = vst [vmem:[%s563 + $0x168] sm:$0xff] %v654
                  %v656 = vld [vmem:[%s562 + $0x2e0] sm:$0xff]
                  %657 = vst [vmem:[%s563 + $0x170] sm:$0xff] %v656
                  %v658 = vld [vmem:[%s562 + $0x2f0] sm:$0xff]
                  %659 = vst [vmem:[%s563 + $0x178] sm:$0xff] %v658
                  %v660 = vld [vmem:[%s562 + $0x300] sm:$0xff]
                  %661 = vst [vmem:[%s563 + $0x180] sm:$0xff] %v660
                  %v662 = vld [vmem:[%s562 + $0x310] sm:$0xff]
                  %663 = vst [vmem:[%s563 + $0x188] sm:$0xff] %v662
                  %v664 = vld [vmem:[%s562 + $0x320] sm:$0xff]
                  %665 = vst [vmem:[%s563 + $0x190] sm:$0xff] %v664
                  %v666 = vld [vmem:[%s562 + $0x330] sm:$0xff]
                  %667 = vst [vmem:[%s563 + $0x198] sm:$0xff] %v666
                  %v668 = vld [vmem:[%s562 + $0x340] sm:$0xff]
                  %669 = vst [vmem:[%s563 + $0x1a0] sm:$0xff] %v668
                  %v670 = vld [vmem:[%s562 + $0x350] sm:$0xff]
                  %671 = vst [vmem:[%s563 + $0x1a8] sm:$0xff] %v670
                  %v672 = vld [vmem:[%s562 + $0x360] sm:$0xff]
                  %673 = vst [vmem:[%s563 + $0x1b0] sm:$0xff] %v672
                  %v674 = vld [vmem:[%s562 + $0x370] sm:$0xff]
                  %675 = vst [vmem:[%s563 + $0x1b8] sm:$0xff] %v674
                  %v676 = vld [vmem:[%s562 + $0x380] sm:$0xff]
                  %677 = vst [vmem:[%s563 + $0x1c0] sm:$0xff] %v676
                  %v678 = vld [vmem:[%s562 + $0x390] sm:$0xff]
                  %679 = vst [vmem:[%s563 + $0x1c8] sm:$0xff] %v678
                  %v680 = vld [vmem:[%s562 + $0x3a0] sm:$0xff]
                  %681 = vst [vmem:[%s563 + $0x1d0] sm:$0xff] %v680
                  %v682 = vld [vmem:[%s562 + $0x3b0] sm:$0xff]
                  %683 = vst [vmem:[%s563 + $0x1d8] sm:$0xff] %v682
                  %v684 = vld [vmem:[%s562 + $0x3c0] sm:$0xff]
                  %685 = vst [vmem:[%s563 + $0x1e0] sm:$0xff] %v684
                  %v686 = vld [vmem:[%s562 + $0x3d0] sm:$0xff]
                  %687 = vst [vmem:[%s563 + $0x1e8] sm:$0xff] %v686
                  %v688 = vld [vmem:[%s562 + $0x3e0] sm:$0xff]
                  %689 = vst [vmem:[%s563 + $0x1f0] sm:$0xff] %v688
                  %v690 = vld [vmem:[%s562 + $0x3f0] sm:$0xff]
                  %691 = vst [vmem:[%s563 + $0x1f8] sm:$0xff] %v690
                $region96: #{apl_forward.1} parent=90 // loop_footer
                  %s561 = sadd.s32 1, %s557
                $region97: #{apl_forward.1} parent=90 // loop_footer_branch
                  %556 = sbr.rel target = $region93
                $region98: #{apl_forward.1} parent=90 // loop_exit
                  _
              $region91: #{apl_forward.1} parent=75 // pred_fallthru
                _
              // Predicated region
              $region99: #{apl_forward.1} parent=75 // pred_check
                _
              $region100: #{apl_forward.1} parent=75 // pred_check_branch
                %693 = sbr.rel target = $region102
              $region101: #{apl_forward.1} parent=75 // pred_region
                _
              $region102: #{apl_forward.1} parent=75 // pred_fallthru
                _
            $region76: #{apl_forward.1} parent=71 // pred_fallthru
              _
            // Predicated region
            $region77: #{apl_forward.1} parent=71 // pred_check
              _
            $region78: #{apl_forward.1} parent=71 // pred_check_branch
              %416 = sbr.rel target = $region80
            $region79: #{apl_forward.1} parent=71 // pred_region
              loop: start=0, step=1, limit=1
              $region81: #{apl_forward.1} parent=79 // loop_pre_header
                _
              $region82: #{apl_forward.1} parent=79 // loop_header
                %s419 = sphi 0, %s423
                %p420 = scmp.ge.s32.totalorder %s419, 1
                %s424 = sphi %s410, %s410
                %s425 = sphi %s407, %s407
              $region83: #{apl_forward.1} parent=79 // loop_header_branch
                %422 = sbr.rel (%p420) target = $region87
              $region84: #{apl_forward.1} parent=79 // loop_body
                %v426 = vld [vmem:[%s424] sm:$0xff]
                %427 = vst [vmem:[%s425] sm:$0xff] %v426
                %v428 = vld [vmem:[%s424 + $0x10] sm:$0xff]
                %429 = vst [vmem:[%s425 + $0x8] sm:$0xff] %v428
                %v430 = vld [vmem:[%s424 + $0x20] sm:$0xff]
                %431 = vst [vmem:[%s425 + $0x10] sm:$0xff] %v430
                %v432 = vld [vmem:[%s424 + $0x30] sm:$0xff]
                %433 = vst [vmem:[%s425 + $0x18] sm:$0xff] %v432
                %v434 = vld [vmem:[%s424 + $0x40] sm:$0xff]
                %435 = vst [vmem:[%s425 + $0x20] sm:$0xff] %v434
                %v436 = vld [vmem:[%s424 + $0x50] sm:$0xff]
                %437 = vst [vmem:[%s425 + $0x28] sm:$0xff] %v436
                %v438 = vld [vmem:[%s424 + $0x60] sm:$0xff]
                %439 = vst [vmem:[%s425 + $0x30] sm:$0xff] %v438
                %v440 = vld [vmem:[%s424 + $0x70] sm:$0xff]
                %441 = vst [vmem:[%s425 + $0x38] sm:$0xff] %v440
                %v442 = vld [vmem:[%s424 + $0x80] sm:$0xff]
                %443 = vst [vmem:[%s425 + $0x40] sm:$0xff] %v442
                %v444 = vld [vmem:[%s424 + $0x90] sm:$0xff]
                %445 = vst [vmem:[%s425 + $0x48] sm:$0xff] %v444
                %v446 = vld [vmem:[%s424 + $0xa0] sm:$0xff]
                %447 = vst [vmem:[%s425 + $0x50] sm:$0xff] %v446
                %v448 = vld [vmem:[%s424 + $0xb0] sm:$0xff]
                %449 = vst [vmem:[%s425 + $0x58] sm:$0xff] %v448
                %v450 = vld [vmem:[%s424 + $0xc0] sm:$0xff]
                %451 = vst [vmem:[%s425 + $0x60] sm:$0xff] %v450
                %v452 = vld [vmem:[%s424 + $0xd0] sm:$0xff]
                %453 = vst [vmem:[%s425 + $0x68] sm:$0xff] %v452
                %v454 = vld [vmem:[%s424 + $0xe0] sm:$0xff]
                %455 = vst [vmem:[%s425 + $0x70] sm:$0xff] %v454
                %v456 = vld [vmem:[%s424 + $0xf0] sm:$0xff]
                %457 = vst [vmem:[%s425 + $0x78] sm:$0xff] %v456
                %v458 = vld [vmem:[%s424 + $0x100] sm:$0xff]
                %459 = vst [vmem:[%s425 + $0x80] sm:$0xff] %v458
                %v460 = vld [vmem:[%s424 + $0x110] sm:$0xff]
                %461 = vst [vmem:[%s425 + $0x88] sm:$0xff] %v460
                %v462 = vld [vmem:[%s424 + $0x120] sm:$0xff]
                %463 = vst [vmem:[%s425 + $0x90] sm:$0xff] %v462
                %v464 = vld [vmem:[%s424 + $0x130] sm:$0xff]
                %465 = vst [vmem:[%s425 + $0x98] sm:$0xff] %v464
                %v466 = vld [vmem:[%s424 + $0x140] sm:$0xff]
                %467 = vst [vmem:[%s425 + $0xa0] sm:$0xff] %v466
                %v468 = vld [vmem:[%s424 + $0x150] sm:$0xff]
                %469 = vst [vmem:[%s425 + $0xa8] sm:$0xff] %v468
                %v470 = vld [vmem:[%s424 + $0x160] sm:$0xff]
                %471 = vst [vmem:[%s425 + $0xb0] sm:$0xff] %v470
                %v472 = vld [vmem:[%s424 + $0x170] sm:$0xff]
                %473 = vst [vmem:[%s425 + $0xb8] sm:$0xff] %v472
                %v474 = vld [vmem:[%s424 + $0x180] sm:$0xff]
                %475 = vst [vmem:[%s425 + $0xc0] sm:$0xff] %v474
                %v476 = vld [vmem:[%s424 + $0x190] sm:$0xff]
                %477 = vst [vmem:[%s425 + $0xc8] sm:$0xff] %v476
                %v478 = vld [vmem:[%s424 + $0x1a0] sm:$0xff]
                %479 = vst [vmem:[%s425 + $0xd0] sm:$0xff] %v478
                %v480 = vld [vmem:[%s424 + $0x1b0] sm:$0xff]
                %481 = vst [vmem:[%s425 + $0xd8] sm:$0xff] %v480
                %v482 = vld [vmem:[%s424 + $0x1c0] sm:$0xff]
                %483 = vst [vmem:[%s425 + $0xe0] sm:$0xff] %v482
                %v484 = vld [vmem:[%s424 + $0x1d0] sm:$0xff]
                %485 = vst [vmem:[%s425 + $0xe8] sm:$0xff] %v484
                %v486 = vld [vmem:[%s424 + $0x1e0] sm:$0xff]
                %487 = vst [vmem:[%s425 + $0xf0] sm:$0xff] %v486
                %v488 = vld [vmem:[%s424 + $0x1f0] sm:$0xff]
                %489 = vst [vmem:[%s425 + $0xf8] sm:$0xff] %v488
                %v490 = vld [vmem:[%s424 + $0x200] sm:$0xff]
                %491 = vst [vmem:[%s425 + $0x100] sm:$0xff] %v490
                %v492 = vld [vmem:[%s424 + $0x210] sm:$0xff]
                %493 = vst [vmem:[%s425 + $0x108] sm:$0xff] %v492
                %v494 = vld [vmem:[%s424 + $0x220] sm:$0xff]
                %495 = vst [vmem:[%s425 + $0x110] sm:$0xff] %v494
                %v496 = vld [vmem:[%s424 + $0x230] sm:$0xff]
                %497 = vst [vmem:[%s425 + $0x118] sm:$0xff] %v496
                %v498 = vld [vmem:[%s424 + $0x240] sm:$0xff]
                %499 = vst [vmem:[%s425 + $0x120] sm:$0xff] %v498
                %v500 = vld [vmem:[%s424 + $0x250] sm:$0xff]
                %501 = vst [vmem:[%s425 + $0x128] sm:$0xff] %v500
                %v502 = vld [vmem:[%s424 + $0x260] sm:$0xff]
                %503 = vst [vmem:[%s425 + $0x130] sm:$0xff] %v502
                %v504 = vld [vmem:[%s424 + $0x270] sm:$0xff]
                %505 = vst [vmem:[%s425 + $0x138] sm:$0xff] %v504
                %v506 = vld [vmem:[%s424 + $0x280] sm:$0xff]
                %507 = vst [vmem:[%s425 + $0x140] sm:$0xff] %v506
                %v508 = vld [vmem:[%s424 + $0x290] sm:$0xff]
                %509 = vst [vmem:[%s425 + $0x148] sm:$0xff] %v508
                %v510 = vld [vmem:[%s424 + $0x2a0] sm:$0xff]
                %511 = vst [vmem:[%s425 + $0x150] sm:$0xff] %v510
                %v512 = vld [vmem:[%s424 + $0x2b0] sm:$0xff]
                %513 = vst [vmem:[%s425 + $0x158] sm:$0xff] %v512
                %v514 = vld [vmem:[%s424 + $0x2c0] sm:$0xff]
                %515 = vst [vmem:[%s425 + $0x160] sm:$0xff] %v514
                %v516 = vld [vmem:[%s424 + $0x2d0] sm:$0xff]
                %517 = vst [vmem:[%s425 + $0x168] sm:$0xff] %v516
                %v518 = vld [vmem:[%s424 + $0x2e0] sm:$0xff]
                %519 = vst [vmem:[%s425 + $0x170] sm:$0xff] %v518
                %v520 = vld [vmem:[%s424 + $0x2f0] sm:$0xff]
                %521 = vst [vmem:[%s425 + $0x178] sm:$0xff] %v520
                %v522 = vld [vmem:[%s424 + $0x300] sm:$0xff]
                %523 = vst [vmem:[%s425 + $0x180] sm:$0xff] %v522
                %v524 = vld [vmem:[%s424 + $0x310] sm:$0xff]
                %525 = vst [vmem:[%s425 + $0x188] sm:$0xff] %v524
                %v526 = vld [vmem:[%s424 + $0x320] sm:$0xff]
                %527 = vst [vmem:[%s425 + $0x190] sm:$0xff] %v526
                %v528 = vld [vmem:[%s424 + $0x330] sm:$0xff]
                %529 = vst [vmem:[%s425 + $0x198] sm:$0xff] %v528
                %v530 = vld [vmem:[%s424 + $0x340] sm:$0xff]
                %531 = vst [vmem:[%s425 + $0x1a0] sm:$0xff] %v530
                %v532 = vld [vmem:[%s424 + $0x350] sm:$0xff]
                %533 = vst [vmem:[%s425 + $0x1a8] sm:$0xff] %v532
                %v534 = vld [vmem:[%s424 + $0x360] sm:$0xff]
                %535 = vst [vmem:[%s425 + $0x1b0] sm:$0xff] %v534
                %v536 = vld [vmem:[%s424 + $0x370] sm:$0xff]
                %537 = vst [vmem:[%s425 + $0x1b8] sm:$0xff] %v536
                %v538 = vld [vmem:[%s424 + $0x380] sm:$0xff]
                %539 = vst [vmem:[%s425 + $0x1c0] sm:$0xff] %v538
                %v540 = vld [vmem:[%s424 + $0x390] sm:$0xff]
                %541 = vst [vmem:[%s425 + $0x1c8] sm:$0xff] %v540
                %v542 = vld [vmem:[%s424 + $0x3a0] sm:$0xff]
                %543 = vst [vmem:[%s425 + $0x1d0] sm:$0xff] %v542
                %v544 = vld [vmem:[%s424 + $0x3b0] sm:$0xff]
                %545 = vst [vmem:[%s425 + $0x1d8] sm:$0xff] %v544
                %v546 = vld [vmem:[%s424 + $0x3c0] sm:$0xff]
                %547 = vst [vmem:[%s425 + $0x1e0] sm:$0xff] %v546
                %v548 = vld [vmem:[%s424 + $0x3d0] sm:$0xff]
                %549 = vst [vmem:[%s425 + $0x1e8] sm:$0xff] %v548
                %v550 = vld [vmem:[%s424 + $0x3e0] sm:$0xff]
                %551 = vst [vmem:[%s425 + $0x1f0] sm:$0xff] %v550
                %v552 = vld [vmem:[%s424 + $0x3f0] sm:$0xff]
                %553 = vst [vmem:[%s425 + $0x1f8] sm:$0xff] %v552
              $region85: #{apl_forward.1} parent=79 // loop_footer
                %s423 = sadd.s32 1, %s419
              $region86: #{apl_forward.1} parent=79 // loop_footer_branch
                %418 = sbr.rel target = $region82
              $region87: #{apl_forward.1} parent=79 // loop_exit
                _
            $region80: #{apl_forward.1} parent=71 // pred_fallthru
              _
          $region72: #{apl_forward.1} parent=67 // pred_fallthru
            _
          %694 = vnop
        $region68: #{apl_forward.1} parent=63 // pred_fallthru
          _
        // Predicated region
        $region103: #{apl_forward.1} parent=63 // pred_check
          %p695 = pneg %p319
        $region104: #{apl_forward.1} parent=63 // pred_check_branch
          %697 = sbr.rel (%p695) target = $region106
        $region105: #{apl_forward.1} parent=63 // pred_region
          %s698 = smul.u32 2, %s21
          %p699 = scmp.lt.s32.totalorder %s698, 3
          %s700 = scalar_select %p699, %s698, 3
          %s701 = scalar_lea.vmem %s13, %s700
          %s702 = smul.u32 2, %s21
        $region106: #{apl_forward.1} parent=63 // pred_fallthru
          _
      $region64: #{apl_forward.1} parent=5 // pred_fallthru
        _
      %p703 = scmp.le.s32.totalorder 1, %s21
      %p704 = scmp.lt.s32.totalorder %s21, 3
      %p705 = pnand %p703, %p704
      %p706 = pneg %p705
      // Predicated region
      $region107: #{apl_forward.1} parent=5 // pred_check
        _
      $region108: #{apl_forward.1} parent=5 // pred_check_branch
        %708 = sbr.rel (%p705) target = $region110
      $region109: #{apl_forward.1} parent=5 // pred_region
        %s709 = ssub.s32 %s21, 1
        %s710 = sand.u32 %s286, 1
        %s711 = sand.u32 %s286, 1
        %s712 = smul.addr %s711, 512
        %s713 = scalar_lea.vmem [#allocation4], %s712
        // Predicated region
        $region111: #{apl_forward.1} parent=109 // pred_check
          %p714 = pneg %p299
        $region112: #{apl_forward.1} parent=109 // pred_check_branch
          %716 = sbr.rel (%p714) target = $region114
        $region113: #{apl_forward.1} parent=109 // pred_region
          _
        $region114: #{apl_forward.1} parent=109 // pred_fallthru
          _
        %p717 = pneg %p42
        %p718 = pneg %p39
        %p719 = pneg %p63
        %p720 = pneg %p60
        %p721 = pneg %p84
        %p722 = pneg %p81
        %p723 = pneg %p105
        %p724 = pneg %p102
        %p725 = pneg %p126
        %p726 = pneg %p123
        %p727 = pneg %p147
        %p728 = pneg %p144
        %p729 = pneg %p168
        %p730 = pneg %p165
        %p731 = pneg %p189
        %p732 = pneg %p186
        %p733 = pneg %p210
        %p734 = pneg %p207
        %p735 = pneg %p231
        %p736 = pneg %p228
        %p737 = pneg %p252
        %p738 = pneg %p249
        %p739 = pneg %p273
        %p740 = pneg %p270
        %s741 = sand.u32 %s286, 1
        %s742 = sand.u32 %s286, 1
        %s743 = smul.addr %s742, 512
        %s744 = scalar_lea.vmem [#allocation4], %s743
        %p745 = pneg %p299
        %p746 = pneg %p296
        %s747 = smul.u32 2, %s26
        %p748 = scmp.lt.s32.totalorder %s747, 3
        %s749 = scalar_select %p748, %s747, 3
        %s750 = scalar_lea.vmem %s13, %s749
        %p751 = pneg %p325
        %p752 = pneg %p322
        %p753 = pneg %p346
        %p754 = pneg %p343
        %s755 = smul.u32 2, %s26
        %s756 = smul.u32 2, %s26
        %p757 = scmp.lt.s32.totalorder %s756, 3
        %s758 = scalar_select %p757, %s756, 3
        %s759 = scalar_lea.vmem %s13, %s758
        %s760 = smul.u32 2, %s26
        %p762 = scmp.eq.s32.totalorder %s26, 0
        // Predicated region
        $region115: #{apl_forward.1} parent=109 // pred_check
          %p763 = pneg %p762
        $region116: #{apl_forward.1} parent=109 // pred_check_branch
          %765 = sbr.rel (%p763) target = $region118
        $region117: #{apl_forward.1} parent=109 // pred_region
          %v766 = vld [vmem:[%s0] sm:$0xff]
          %v767 = vld [vmem:[%s0 + $0x8] sm:$0xff]
          %v768 = vld [vmem:[%s0 + $0x10] sm:$0xff]
          %v769 = vld [vmem:[%s0 + $0x18] sm:$0xff]
          %v770 = vld [vmem:[%s0 + $0x20] sm:$0xff]
          %v771 = vld [vmem:[%s0 + $0x28] sm:$0xff]
          %v772 = vld [vmem:[%s1] sm:$0xf]
          %v773 = vld [vmem:[%s1 + $0x4] sm:$0xf]
          %v774 = vld [vmem:[%s1 + $0x8] sm:$0xf]
          %v775 = vld [vmem:[%s1 + $0xc] sm:$0xf]
          %v776 = vld [vmem:[%s1 + $0x10] sm:$0xf]
          %v777 = vld [vmem:[%s1 + $0x14] sm:$0xf]
          %v778 = vld [vmem:[%s1 + $0x18] sm:$0xf]
          %v779 = vld [vmem:[%s1 + $0x1c] sm:$0xf]
          %v780 = vld [vmem:[%s1 + $0x20] sm:$0xf]
          %v781 = vld [vmem:[%s1 + $0x24] sm:$0xf]
          %v782 = vld [vmem:[%s1 + $0x28] sm:$0xf]
          %v783 = vld [vmem:[%s1 + $0x2c] sm:$0xf]
          %v784 = vld [vmem:[%s1 + $0x30] sm:$0xf]
          %v785 = vld [vmem:[%s1 + $0x34] sm:$0xf]
          %v786 = vld [vmem:[%s1 + $0x38] sm:$0xf]
          %v787 = vld [vmem:[%s1 + $0x3c] sm:$0xf]
          %v788 = vld [vmem:[%s1 + $0x40] sm:$0xf]
          %v789 = vld [vmem:[%s1 + $0x44] sm:$0xf]
          %v790 = vld [vmem:[%s1 + $0x48] sm:$0xf]
          %v791 = vld [vmem:[%s1 + $0x4c] sm:$0xf]
          %v792 = vld [vmem:[%s1 + $0x50] sm:$0xf]
          %v793 = vld [vmem:[%s1 + $0x54] sm:$0xf]
          %v794 = vld [vmem:[%s1 + $0x58] sm:$0xf]
          %v795 = vld [vmem:[%s1 + $0x5c] sm:$0xf]
          %v796 = vld [vmem:[%s1 + $0x60] sm:$0xf]
          %v797 = vld [vmem:[%s1 + $0x64] sm:$0xf]
          %v798 = vld [vmem:[%s1 + $0x68] sm:$0xf]
          %v799 = vld [vmem:[%s1 + $0x6c] sm:$0xf]
          %v800 = vld [vmem:[%s1 + $0x70] sm:$0xf]
          %v801 = vld [vmem:[%s1 + $0x74] sm:$0xf]
          %v802 = vld [vmem:[%s1 + $0x78] sm:$0xf]
          %v803 = vld [vmem:[%s1 + $0x7c] sm:$0xf]
          %v804 = vld [vmem:[%s1 + $0x80] sm:$0xf]
          %v805 = vld [vmem:[%s1 + $0x84] sm:$0xf]
          %v806 = vld [vmem:[%s1 + $0x88] sm:$0xf]
          %v807 = vld [vmem:[%s1 + $0x8c] sm:$0xf]
          %v808 = vld [vmem:[%s1 + $0x90] sm:$0xf]
          %v809 = vld [vmem:[%s1 + $0x94] sm:$0xf]
          %v810 = vld [vmem:[%s1 + $0x98] sm:$0xf]
          %v811 = vld [vmem:[%s1 + $0x9c] sm:$0xf]
          %v812 = vld [vmem:[%s1 + $0xa0] sm:$0xf]
          %v813 = vld [vmem:[%s1 + $0xa4] sm:$0xf]
          %v814 = vld [vmem:[%s1 + $0xa8] sm:$0xf]
          %v815 = vld [vmem:[%s1 + $0xac] sm:$0xf]
          %v816 = vld [vmem:[%s1 + $0xb0] sm:$0xf]
          %v817 = vld [vmem:[%s1 + $0xb4] sm:$0xf]
          %v818 = vld [vmem:[%s1 + $0xb8] sm:$0xf]
          %v819 = vld [vmem:[%s1 + $0xbc] sm:$0xf]
          %v820 = vld [vmem:[%s1 + $0xc0] sm:$0xf]
          %v821 = vld [vmem:[%s1 + $0xc4] sm:$0xf]
          %v822 = vld [vmem:[%s1 + $0xc8] sm:$0xf]
          %v823 = vld [vmem:[%s1 + $0xcc] sm:$0xf]
          %v824 = vld [vmem:[%s1 + $0xd0] sm:$0xf]
          %v825 = vld [vmem:[%s1 + $0xd4] sm:$0xf]
          %v826 = vld [vmem:[%s1 + $0xd8] sm:$0xf]
          %v827 = vld [vmem:[%s1 + $0xdc] sm:$0xf]
          %v828 = vld [vmem:[%s1 + $0xe0] sm:$0xf]
          %v829 = vld [vmem:[%s1 + $0xe4] sm:$0xf]
          %v830 = vld [vmem:[%s1 + $0xe8] sm:$0xf]
          %v831 = vld [vmem:[%s1 + $0xec] sm:$0xf]
          %v832 = vld [vmem:[%s1 + $0xf0] sm:$0xf]
          %v833 = vld [vmem:[%s1 + $0xf4] sm:$0xf]
          %v834 = vld [vmem:[%s1 + $0xf8] sm:$0xf]
          %v835 = vld [vmem:[%s1 + $0xfc] sm:$0xf]
          %v836 = vld [vmem:[%s1 + $0x100] sm:$0xf]
          %v837 = vld [vmem:[%s1 + $0x104] sm:$0xf]
          %v838 = vld [vmem:[%s1 + $0x108] sm:$0xf]
          %v839 = vld [vmem:[%s1 + $0x10c] sm:$0xf]
          %v840 = vld [vmem:[%s1 + $0x110] sm:$0xf]
          %v841 = vld [vmem:[%s1 + $0x114] sm:$0xf]
          %v842 = vld [vmem:[%s1 + $0x118] sm:$0xf]
          %v843 = vld [vmem:[%s1 + $0x11c] sm:$0xf]
          %v844 = vld [vmem:[%s1 + $0x120] sm:$0xf]
          %v845 = vld [vmem:[%s1 + $0x124] sm:$0xf]
          %v846 = vld [vmem:[%s1 + $0x128] sm:$0xf]
          %v847 = vld [vmem:[%s1 + $0x12c] sm:$0xf]
          %v848 = vld [vmem:[%s1 + $0x130] sm:$0xf]
          %v849 = vld [vmem:[%s1 + $0x134] sm:$0xf]
          %v850 = vld [vmem:[%s1 + $0x138] sm:$0xf]
          %v851 = vld [vmem:[%s1 + $0x13c] sm:$0xf]
          %v852 = vld [vmem:[%s1 + $0x140] sm:$0xf]
          %v853 = vld [vmem:[%s1 + $0x144] sm:$0xf]
          %v854 = vld [vmem:[%s1 + $0x148] sm:$0xf]
          %v855 = vld [vmem:[%s1 + $0x14c] sm:$0xf]
          %v856 = vld [vmem:[%s1 + $0x150] sm:$0xf]
          %v857 = vld [vmem:[%s1 + $0x154] sm:$0xf]
          %v858 = vld [vmem:[%s1 + $0x158] sm:$0xf]
          %v859 = vld [vmem:[%s1 + $0x15c] sm:$0xf]
          %v860 = vld [vmem:[%s1 + $0x160] sm:$0xf]
          %v861 = vld [vmem:[%s1 + $0x164] sm:$0xf]
          %v862 = vld [vmem:[%s1 + $0x168] sm:$0xf]
          %v863 = vld [vmem:[%s1 + $0x16c] sm:$0xf]
          %v864 = vld [vmem:[%s1 + $0x170] sm:$0xf]
          %v865 = vld [vmem:[%s1 + $0x174] sm:$0xf]
          %v866 = vld [vmem:[%s1 + $0x178] sm:$0xf]
          %v867 = vld [vmem:[%s1 + $0x17c] sm:$0xf]
          %v868 = vld [vmem:[%s2] sm:$0x1]
          %v870 = vlaneseq
          %v871 = vshrl.u32 %v870, 7
          %v872 = vsub.s32 0, %v871
          %v873 = vrot.slane %v868, %v872
          %v881 = vunpack.c.l.b16 %v766
          %v882 = vunpack.c.h.b16 %v766
          %v883 = vunpack.c.l.b16 %v767
          %v884 = vunpack.c.h.b16 %v767
          %v885 = vunpack.c.l.b16 %v768
          %v886 = vunpack.c.h.b16 %v768
          %v887 = vunpack.c.l.b16 %v769
          %v888 = vunpack.c.h.b16 %v769
          %v889 = vunpack.c.l.b16 %v770
          %v890 = vunpack.c.h.b16 %v770
          %v891 = vunpack.c.l.b16 %v771
          %v892 = vunpack.c.h.b16 %v771
          %v893 = vpack.c.b16 %v887, %v881
          %v894 = vpack.c.b16 %v888, %v882
          %v895 = vpack.c.b16 %v889, %v883
          %v896 = vpack.c.b16 %v890, %v884
          %v897 = vpack.c.b16 %v891, %v885
          %v898 = vpack.c.b16 %v892, %v886
          %v1001 = vunpack.c.l.b16 %v772
          %v1002 = vunpack.c.l.b16 %v773
          %v1003 = vunpack.c.l.b16 %v774
          %v1004 = vunpack.c.l.b16 %v775
          %v1005 = vunpack.c.l.b16 %v776
          %v1006 = vunpack.c.l.b16 %v777
          %v1007 = vunpack.c.l.b16 %v778
          %v1008 = vunpack.c.l.b16 %v779
          %v1009 = vunpack.c.l.b16 %v780
          %v1010 = vunpack.c.l.b16 %v781
          %v1011 = vunpack.c.l.b16 %v782
          %v1012 = vunpack.c.l.b16 %v783
          %v1013 = vunpack.c.l.b16 %v784
          %v1014 = vunpack.c.l.b16 %v785
          %v1015 = vunpack.c.l.b16 %v786
          %v1016 = vunpack.c.l.b16 %v787
          %v1017 = vunpack.c.l.b16 %v788
          %v1018 = vunpack.c.l.b16 %v789
          %v1019 = vunpack.c.l.b16 %v790
          %v1020 = vunpack.c.l.b16 %v791
          %v1021 = vunpack.c.l.b16 %v792
          %v1022 = vunpack.c.l.b16 %v793
          %v1023 = vunpack.c.l.b16 %v794
          %v1024 = vunpack.c.l.b16 %v795
          %v1025 = vunpack.c.l.b16 %v796
          %v1026 = vunpack.c.l.b16 %v797
          %v1027 = vunpack.c.l.b16 %v798
          %v1028 = vunpack.c.l.b16 %v799
          %v1029 = vunpack.c.l.b16 %v800
          %v1030 = vunpack.c.l.b16 %v801
          %v1031 = vunpack.c.l.b16 %v802
          %v1032 = vunpack.c.l.b16 %v803
          %v1033 = vunpack.c.l.b16 %v804
          %v1034 = vunpack.c.l.b16 %v805
          %v1035 = vunpack.c.l.b16 %v806
          %v1036 = vunpack.c.l.b16 %v807
          %v1037 = vunpack.c.l.b16 %v808
          %v1038 = vunpack.c.l.b16 %v809
          %v1039 = vunpack.c.l.b16 %v810
          %v1040 = vunpack.c.l.b16 %v811
          %v1041 = vunpack.c.l.b16 %v812
          %v1042 = vunpack.c.l.b16 %v813
          %v1043 = vunpack.c.l.b16 %v814
          %v1044 = vunpack.c.l.b16 %v815
          %v1045 = vunpack.c.l.b16 %v816
          %v1046 = vunpack.c.l.b16 %v817
          %v1047 = vunpack.c.l.b16 %v818
          %v1048 = vunpack.c.l.b16 %v819
          %v1049 = vunpack.c.l.b16 %v820
          %v1050 = vunpack.c.l.b16 %v821
          %v1051 = vunpack.c.l.b16 %v822
          %v1052 = vunpack.c.l.b16 %v823
          %v1053 = vunpack.c.l.b16 %v824
          %v1054 = vunpack.c.l.b16 %v825
          %v1055 = vunpack.c.l.b16 %v826
          %v1056 = vunpack.c.l.b16 %v827
          %v1057 = vunpack.c.l.b16 %v828
          %v1058 = vunpack.c.l.b16 %v829
          %v1059 = vunpack.c.l.b16 %v830
          %v1060 = vunpack.c.l.b16 %v831
          %v1061 = vunpack.c.l.b16 %v832
          %v1062 = vunpack.c.l.b16 %v833
          %v1063 = vunpack.c.l.b16 %v834
          %v1064 = vunpack.c.l.b16 %v835
          %v1065 = vunpack.c.l.b16 %v836
          %v1066 = vunpack.c.l.b16 %v837
          %v1067 = vunpack.c.l.b16 %v838
          %v1068 = vunpack.c.l.b16 %v839
          %v1069 = vunpack.c.l.b16 %v840
          %v1070 = vunpack.c.l.b16 %v841
          %v1071 = vunpack.c.l.b16 %v842
          %v1072 = vunpack.c.l.b16 %v843
          %v1073 = vunpack.c.l.b16 %v844
          %v1074 = vunpack.c.l.b16 %v845
          %v1075 = vunpack.c.l.b16 %v846
          %v1076 = vunpack.c.l.b16 %v847
          %v1077 = vunpack.c.l.b16 %v848
          %v1078 = vunpack.c.l.b16 %v849
          %v1079 = vunpack.c.l.b16 %v850
          %v1080 = vunpack.c.l.b16 %v851
          %v1081 = vunpack.c.l.b16 %v852
          %v1082 = vunpack.c.l.b16 %v853
          %v1083 = vunpack.c.l.b16 %v854
          %v1084 = vunpack.c.l.b16 %v855
          %v1085 = vunpack.c.l.b16 %v856
          %v1086 = vunpack.c.l.b16 %v857
          %v1087 = vunpack.c.l.b16 %v858
          %v1088 = vunpack.c.l.b16 %v859
          %v1089 = vunpack.c.l.b16 %v860
          %v1090 = vunpack.c.l.b16 %v861
          %v1091 = vunpack.c.l.b16 %v862
          %v1092 = vunpack.c.l.b16 %v863
          %v1093 = vunpack.c.l.b16 %v864
          %v1094 = vunpack.c.l.b16 %v865
          %v1095 = vunpack.c.l.b16 %v866
          %v1096 = vunpack.c.l.b16 %v867
          %v1097 = vpack.c.b16 %v1002, %v1001
          %v1098 = vpack.c.b16 %v1004, %v1003
          %v1099 = vpack.c.b16 %v1006, %v1005
          %v1100 = vpack.c.b16 %v1008, %v1007
          %v1101 = vpack.c.b16 %v1010, %v1009
          %v1102 = vpack.c.b16 %v1012, %v1011
          %v1103 = vpack.c.b16 %v1014, %v1013
          %v1104 = vpack.c.b16 %v1016, %v1015
          %v1105 = vpack.c.b16 %v1018, %v1017
          %v1106 = vpack.c.b16 %v1020, %v1019
          %v1107 = vpack.c.b16 %v1022, %v1021
          %v1108 = vpack.c.b16 %v1024, %v1023
          %v1109 = vpack.c.b16 %v1026, %v1025
          %v1110 = vpack.c.b16 %v1028, %v1027
          %v1111 = vpack.c.b16 %v1030, %v1029
          %v1112 = vpack.c.b16 %v1032, %v1031
          %v1113 = vpack.c.b16 %v1034, %v1033
          %v1114 = vpack.c.b16 %v1036, %v1035
          %v1115 = vpack.c.b16 %v1038, %v1037
          %v1116 = vpack.c.b16 %v1040, %v1039
          %v1117 = vpack.c.b16 %v1042, %v1041
          %v1118 = vpack.c.b16 %v1044, %v1043
          %v1119 = vpack.c.b16 %v1046, %v1045
          %v1120 = vpack.c.b16 %v1048, %v1047
          %v1121 = vpack.c.b16 %v1050, %v1049
          %v1122 = vpack.c.b16 %v1052, %v1051
          %v1123 = vpack.c.b16 %v1054, %v1053
          %v1124 = vpack.c.b16 %v1056, %v1055
          %v1125 = vpack.c.b16 %v1058, %v1057
          %v1126 = vpack.c.b16 %v1060, %v1059
          %v1127 = vpack.c.b16 %v1062, %v1061
          %v1128 = vpack.c.b16 %v1064, %v1063
          %v1129 = vpack.c.b16 %v1066, %v1065
          %v1130 = vpack.c.b16 %v1068, %v1067
          %v1131 = vpack.c.b16 %v1070, %v1069
          %v1132 = vpack.c.b16 %v1072, %v1071
          %v1133 = vpack.c.b16 %v1074, %v1073
          %v1134 = vpack.c.b16 %v1076, %v1075
          %v1135 = vpack.c.b16 %v1078, %v1077
          %v1136 = vpack.c.b16 %v1080, %v1079
          %v1137 = vpack.c.b16 %v1082, %v1081
          %v1138 = vpack.c.b16 %v1084, %v1083
          %v1139 = vpack.c.b16 %v1086, %v1085
          %v1140 = vpack.c.b16 %v1088, %v1087
          %v1141 = vpack.c.b16 %v1090, %v1089
          %v1142 = vpack.c.b16 %v1092, %v1091
          %v1143 = vpack.c.b16 %v1094, %v1093
          %v1144 = vpack.c.b16 %v1096, %v1095
          %1193 = vmatprep.subr.bf16.mxu0 0
          %1194 = vmatpush1.bf16.msra.mxu0 %v1097
          %1195 = vmatprep.subr.bf16.mxu0 0
          %1196 = vmatpush1.bf16.msra.mxu0 %v1098
          %1197 = vmatprep.subr.bf16.mxu0 0
          %1198 = vmatpush1.bf16.msra.mxu0 %v1099
          %1199 = vmatprep.subr.bf16.mxu0 0
          %1200 = vmatpush1.bf16.msra.mxu0 %v1100
          %1201 = vmatprep.subr.bf16.mxu0 0
          %1202 = vmatpush1.bf16.msra.mxu0 %v1101
          %1203 = vmatprep.subr.bf16.mxu0 0
          %1204 = vmatpush1.bf16.msra.mxu0 %v1102
          %1205 = vmatprep.subr.bf16.mxu0 0
          %1206 = vmatpush1.bf16.msra.mxu0 %v1103
          %1207 = vmatprep.subr.bf16.mxu0 0
          %1208 = vmatpush1.bf16.msra.mxu0 %v1104
          %1209 = vmatprep.subr.bf16.mxu0 0
          %1210 = vmatpush1.bf16.msra.mxu0 %v1105
          %1211 = vmatprep.subr.bf16.mxu0 0
          %1212 = vmatpush1.bf16.msra.mxu0 %v1106
          %1213 = vmatprep.subr.bf16.mxu0 0
          %1214 = vmatpush1.bf16.msra.mxu0 %v1107
          %1215 = vmatprep.subr.bf16.mxu0 0
          %1216 = vmatpush1.bf16.msra.mxu0 %v1108
          %1217 = vmatprep.subr.bf16.mxu0 0
          %1218 = vmatpush1.bf16.msra.mxu0 %v1109
          %1219 = vmatprep.subr.bf16.mxu0 0
          %1220 = vmatpush1.bf16.msra.mxu0 %v1110
          %1221 = vmatprep.subr.bf16.mxu0 0
          %1222 = vmatpush1.bf16.msra.mxu0 %v1111
          %1223 = vmatprep.subr.bf16.mxu0 0
          %1224 = vmatpush1.bf16.msra.mxu0 %v1112
          %1225 = vmatprep.mubr.bf16.mxu0 %v894
          %1226 = vmatmul.mubr.bf16.gmra.mrb[0].mxu0 %v893
          %v1227 = vpop.f32.mrb[0].mxu0
          %v1228 = vadd.f32 %v873, %v1227
          %v1229 = vpop.f32.mrb[0].mxu0
          %v1230 = vpop.f32.mrb[0].mxu0
          %v1231 = vadd.f32 %v873, %v1230
          %v1232 = vpop.f32.mrb[0].mxu0
          %1233 = vdwg.mxu0
          %1234 = vmatprep.subr.bf16.mxu0 0
          %1235 = vmatpush1.bf16.msra.mxu0 %v1113
          %1236 = vmatprep.subr.bf16.mxu0 0
          %1237 = vmatpush1.bf16.msra.mxu0 %v1114
          %1238 = vmatprep.subr.bf16.mxu0 0
          %1239 = vmatpush1.bf16.msra.mxu0 %v1115
          %1240 = vmatprep.subr.bf16.mxu0 0
          %1241 = vmatpush1.bf16.msra.mxu0 %v1116
          %1242 = vmatprep.subr.bf16.mxu0 0
          %1243 = vmatpush1.bf16.msra.mxu0 %v1117
          %1244 = vmatprep.subr.bf16.mxu0 0
          %1245 = vmatpush1.bf16.msra.mxu0 %v1118
          %1246 = vmatprep.subr.bf16.mxu0 0
          %1247 = vmatpush1.bf16.msra.mxu0 %v1119
          %1248 = vmatprep.subr.bf16.mxu0 0
          %1249 = vmatpush1.bf16.msra.mxu0 %v1120
          %1250 = vmatprep.subr.bf16.mxu0 0
          %1251 = vmatpush1.bf16.msra.mxu0 %v1121
          %1252 = vmatprep.subr.bf16.mxu0 0
          %1253 = vmatpush1.bf16.msra.mxu0 %v1122
          %1254 = vmatprep.subr.bf16.mxu0 0
          %1255 = vmatpush1.bf16.msra.mxu0 %v1123
          %1256 = vmatprep.subr.bf16.mxu0 0
          %1257 = vmatpush1.bf16.msra.mxu0 %v1124
          %1258 = vmatprep.subr.bf16.mxu0 0
          %1259 = vmatpush1.bf16.msra.mxu0 %v1125
          %1260 = vmatprep.subr.bf16.mxu0 0
          %1261 = vmatpush1.bf16.msra.mxu0 %v1126
          %1262 = vmatprep.subr.bf16.mxu0 0
          %1263 = vmatpush1.bf16.msra.mxu0 %v1127
          %1264 = vmatprep.subr.bf16.mxu0 0
          %1265 = vmatpush1.bf16.msra.mxu0 %v1128
          %1266 = vmatprep.mubr.bf16.mxu0 %v896
          %1267 = vmatmul.mubr.bf16.gmra.mrb[0].mxu0 %v895
          %v1268 = vpop.f32.mrb[0].mxu0
          %v1269 = vadd.f32 %v1228, %v1268
          %v1270 = vpop.f32.mrb[0].mxu0
          %v1271 = vpop.f32.mrb[0].mxu0
          %v1272 = vadd.f32 %v1231, %v1271
          %v1273 = vpop.f32.mrb[0].mxu0
          %1274 = vdwg.mxu0
          %1275 = vmatprep.subr.bf16.mxu0 0
          %1276 = vmatpush1.bf16.msra.mxu0 %v1129
          %1277 = vmatprep.subr.bf16.mxu0 0
          %1278 = vmatpush1.bf16.msra.mxu0 %v1130
          %1279 = vmatprep.subr.bf16.mxu0 0
          %1280 = vmatpush1.bf16.msra.mxu0 %v1131
          %1281 = vmatprep.subr.bf16.mxu0 0
          %1282 = vmatpush1.bf16.msra.mxu0 %v1132
          %1283 = vmatprep.subr.bf16.mxu0 0
          %1284 = vmatpush1.bf16.msra.mxu0 %v1133
          %1285 = vmatprep.subr.bf16.mxu0 0
          %1286 = vmatpush1.bf16.msra.mxu0 %v1134
          %1287 = vmatprep.subr.bf16.mxu0 0
          %1288 = vmatpush1.bf16.msra.mxu0 %v1135
          %1289 = vmatprep.subr.bf16.mxu0 0
          %1290 = vmatpush1.bf16.msra.mxu0 %v1136
          %1291 = vmatprep.subr.bf16.mxu0 0
          %1292 = vmatpush1.bf16.msra.mxu0 %v1137
          %1293 = vmatprep.subr.bf16.mxu0 0
          %1294 = vmatpush1.bf16.msra.mxu0 %v1138
          %1295 = vmatprep.subr.bf16.mxu0 0
          %1296 = vmatpush1.bf16.msra.mxu0 %v1139
          %1297 = vmatprep.subr.bf16.mxu0 0
          %1298 = vmatpush1.bf16.msra.mxu0 %v1140
          %1299 = vmatprep.subr.bf16.mxu0 0
          %1300 = vmatpush1.bf16.msra.mxu0 %v1141
          %1301 = vmatprep.subr.bf16.mxu0 0
          %1302 = vmatpush1.bf16.msra.mxu0 %v1142
          %1303 = vmatprep.subr.bf16.mxu0 0
          %1304 = vmatpush1.bf16.msra.mxu0 %v1143
          %1305 = vmatprep.subr.bf16.mxu0 0
          %1306 = vmatpush1.bf16.msra.mxu0 %v1144
          %1307 = vmatprep.mubr.bf16.mxu0 %v898
          %1308 = vmatmul.mubr.bf16.gmra.mrb[0].mxu0 %v897
          %v1309 = vpop.f32.mrb[0].mxu0
          %v1310 = vadd.f32 %v1269, %v1309
          %v1311 = vpop.f32.mrb[0].mxu0
          %v1312 = vpop.f32.mrb[0].mxu0
          %v1313 = vadd.f32 %v1272, %v1312
          %v1314 = vpop.f32.mrb[0].mxu0
          %1315 = vdwg.mxu0
          %s1316 = scalar_lea.vmem %s0, 48
          %v1317 = vld [vmem:[%s1316] sm:$0xff]
          %v1318 = vld [vmem:[%s1316 + $0x8] sm:$0xff]
          %v1319 = vld [vmem:[%s1316 + $0x10] sm:$0xff]
          %v1320 = vld [vmem:[%s1316 + $0x18] sm:$0xff]
          %v1321 = vld [vmem:[%s1316 + $0x20] sm:$0xff]
          %v1322 = vld [vmem:[%s1316 + $0x28] sm:$0xff]
          %v1329 = vunpack.c.l.b16 %v1317
          %v1330 = vunpack.c.h.b16 %v1317
          %v1331 = vunpack.c.l.b16 %v1318
          %v1332 = vunpack.c.h.b16 %v1318
          %v1333 = vunpack.c.l.b16 %v1319
          %v1334 = vunpack.c.h.b16 %v1319
          %v1335 = vunpack.c.l.b16 %v1320
          %v1336 = vunpack.c.h.b16 %v1320
          %v1337 = vunpack.c.l.b16 %v1321
          %v1338 = vunpack.c.h.b16 %v1321
          %v1339 = vunpack.c.l.b16 %v1322
          %v1340 = vunpack.c.h.b16 %v1322
          %v1341 = vpack.c.b16 %v1335, %v1329
          %v1342 = vpack.c.b16 %v1336, %v1330
          %v1343 = vpack.c.b16 %v1337, %v1331
          %v1344 = vpack.c.b16 %v1338, %v1332
          %v1345 = vpack.c.b16 %v1339, %v1333
          %v1346 = vpack.c.b16 %v1340, %v1334
          %1353 = vmatprep.subr.bf16.mxu0 0
          %1354 = vmatpush1.bf16.msra.mxu0 %v1097
          %1355 = vmatprep.subr.bf16.mxu0 0
          %1356 = vmatpush1.bf16.msra.mxu0 %v1098
          %1357 = vmatprep.subr.bf16.mxu0 0
          %1358 = vmatpush1.bf16.msra.mxu0 %v1099
          %1359 = vmatprep.subr.bf16.mxu0 0
          %1360 = vmatpush1.bf16.msra.mxu0 %v1100
          %1361 = vmatprep.subr.bf16.mxu0 0
          %1362 = vmatpush1.bf16.msra.mxu0 %v1101
          %1363 = vmatprep.subr.bf16.mxu0 0
          %1364 = vmatpush1.bf16.msra.mxu0 %v1102
          %1365 = vmatprep.subr.bf16.mxu0 0
          %1366 = vmatpush1.bf16.msra.mxu0 %v1103
          %1367 = vmatprep.subr.bf16.mxu0 0
          %1368 = vmatpush1.bf16.msra.mxu0 %v1104
          %1369 = vmatprep.subr.bf16.mxu0 0
          %1370 = vmatpush1.bf16.msra.mxu0 %v1105
          %1371 = vmatprep.subr.bf16.mxu0 0
          %1372 = vmatpush1.bf16.msra.mxu0 %v1106
          %1373 = vmatprep.subr.bf16.mxu0 0
          %1374 = vmatpush1.bf16.msra.mxu0 %v1107
          %1375 = vmatprep.subr.bf16.mxu0 0
          %1376 = vmatpush1.bf16.msra.mxu0 %v1108
          %1377 = vmatprep.subr.bf16.mxu0 0
          %1378 = vmatpush1.bf16.msra.mxu0 %v1109
          %1379 = vmatprep.subr.bf16.mxu0 0
          %1380 = vmatpush1.bf16.msra.mxu0 %v1110
          %1381 = vmatprep.subr.bf16.mxu0 0
          %1382 = vmatpush1.bf16.msra.mxu0 %v1111
          %1383 = vmatprep.subr.bf16.mxu0 0
          %1384 = vmatpush1.bf16.msra.mxu0 %v1112
          %1385 = vmatprep.mubr.bf16.mxu0 %v1342
          %1386 = vmatmul.mubr.bf16.gmra.mrb[0].mxu0 %v1341
          %v1387 = vpop.f32.mrb[0].mxu0
          %v1388 = vadd.f32 %v873, %v1387
          %v1389 = vpop.f32.mrb[0].mxu0
          %v1390 = vpop.f32.mrb[0].mxu0
          %v1391 = vadd.f32 %v873, %v1390
          %v1392 = vpop.f32.mrb[0].mxu0
          %1393 = vdwg.mxu0
          %1394 = vmatprep.subr.bf16.mxu0 0
          %1395 = vmatpush1.bf16.msra.mxu0 %v1113
          %1396 = vmatprep.subr.bf16.mxu0 0
          %1397 = vmatpush1.bf16.msra.mxu0 %v1114
          %1398 = vmatprep.subr.bf16.mxu0 0
          %1399 = vmatpush1.bf16.msra.mxu0 %v1115
          %1400 = vmatprep.subr.bf16.mxu0 0
          %1401 = vmatpush1.bf16.msra.mxu0 %v1116
          %1402 = vmatprep.subr.bf16.mxu0 0
          %1403 = vmatpush1.bf16.msra.mxu0 %v1117
          %1404 = vmatprep.subr.bf16.mxu0 0
          %1405 = vmatpush1.bf16.msra.mxu0 %v1118
          %1406 = vmatprep.subr.bf16.mxu0 0
          %1407 = vmatpush1.bf16.msra.mxu0 %v1119
          %1408 = vmatprep.subr.bf16.mxu0 0
          %1409 = vmatpush1.bf16.msra.mxu0 %v1120
          %1410 = vmatprep.subr.bf16.mxu0 0
          %1411 = vmatpush1.bf16.msra.mxu0 %v1121
          %1412 = vmatprep.subr.bf16.mxu0 0
          %1413 = vmatpush1.bf16.msra.mxu0 %v1122
          %1414 = vmatprep.subr.bf16.mxu0 0
          %1415 = vmatpush1.bf16.msra.mxu0 %v1123
          %1416 = vmatprep.subr.bf16.mxu0 0
          %1417 = vmatpush1.bf16.msra.mxu0 %v1124
          %1418 = vmatprep.subr.bf16.mxu0 0
          %1419 = vmatpush1.bf16.msra.mxu0 %v1125
          %1420 = vmatprep.subr.bf16.mxu0 0
          %1421 = vmatpush1.bf16.msra.mxu0 %v1126
          %1422 = vmatprep.subr.bf16.mxu0 0
          %1423 = vmatpush1.bf16.msra.mxu0 %v1127
          %1424 = vmatprep.subr.bf16.mxu0 0
          %1425 = vmatpush1.bf16.msra.mxu0 %v1128
          %1426 = vmatprep.mubr.bf16.mxu0 %v1344
          %1427 = vmatmul.mubr.bf16.gmra.mrb[0].mxu0 %v1343
          %v1428 = vpop.f32.mrb[0].mxu0
          %v1429 = vadd.f32 %v1388, %v1428
          %v1430 = vpop.f32.mrb[0].mxu0
          %v1431 = vpop.f32.mrb[0].mxu0
          %v1432 = vadd.f32 %v1391, %v1431
          %v1433 = vpop.f32.mrb[0].mxu0
          %1434 = vdwg.mxu0
          %1435 = vmatprep.subr.bf16.mxu0 0
          %1436 = vmatpush1.bf16.msra.mxu0 %v1129
          %1437 = vmatprep.subr.bf16.mxu0 0
          %1438 = vmatpush1.bf16.msra.mxu0 %v1130
          %1439 = vmatprep.subr.bf16.mxu0 0
          %1440 = vmatpush1.bf16.msra.mxu0 %v1131
          %1441 = vmatprep.subr.bf16.mxu0 0
          %1442 = vmatpush1.bf16.msra.mxu0 %v1132
          %1443 = vmatprep.subr.bf16.mxu0 0
          %1444 = vmatpush1.bf16.msra.mxu0 %v1133
          %1445 = vmatprep.subr.bf16.mxu0 0
          %1446 = vmatpush1.bf16.msra.mxu0 %v1134
          %1447 = vmatprep.subr.bf16.mxu0 0
          %1448 = vmatpush1.bf16.msra.mxu0 %v1135
          %1449 = vmatprep.subr.bf16.mxu0 0
          %1450 = vmatpush1.bf16.msra.mxu0 %v1136
          %1451 = vmatprep.subr.bf16.mxu0 0
          %1452 = vmatpush1.bf16.msra.mxu0 %v1137
          %1453 = vmatprep.subr.bf16.mxu0 0
          %1454 = vmatpush1.bf16.msra.mxu0 %v1138
          %1455 = vmatprep.subr.bf16.mxu0 0
          %1456 = vmatpush1.bf16.msra.mxu0 %v1139
          %1457 = vmatprep.subr.bf16.mxu0 0
          %1458 = vmatpush1.bf16.msra.mxu0 %v1140
          %1459 = vmatprep.subr.bf16.mxu0 0
          %1460 = vmatpush1.bf16.msra.mxu0 %v1141
          %1461 = vmatprep.subr.bf16.mxu0 0
          %1462 = vmatpush1.bf16.msra.mxu0 %v1142
          %1463 = vmatprep.subr.bf16.mxu0 0
          %1464 = vmatpush1.bf16.msra.mxu0 %v1143
          %1465 = vmatprep.subr.bf16.mxu0 0
          %1466 = vmatpush1.bf16.msra.mxu0 %v1144
          %1467 = vmatprep.mubr.bf16.mxu0 %v1346
          %1468 = vmatmul.mubr.bf16.gmra.mrb[0].mxu0 %v1345
          %v1469 = vpop.f32.mrb[0].mxu0
          %v1470 = vadd.f32 %v1429, %v1469
          %v1471 = vpop.f32.mrb[0].mxu0
          %v1472 = vpop.f32.mrb[0].mxu0
          %v1473 = vadd.f32 %v1432, %v1472
          %v1474 = vpop.f32.mrb[0].mxu0
          %1475 = vdwg.mxu0
          %v1476 = vadd.f32 %v1310, %v1313
          %v1477 = vrot.slane %v1476, 4
          %v1478 = vadd.f32 %v1476, %v1477
          %v1479 = vrot.slane %v1478, 2
          %v1480 = vadd.f32 %v1478, %v1479
          %v1481 = vrot.slane %v1480, 1
          %v1482 = vadd.f32 %v1480, %v1481
          %v1483 = vadd.f32 %v1470, %v1473
          %v1484 = vrot.slane %v1483, 4
          %v1485 = vadd.f32 %v1483, %v1484
          %v1486 = vrot.slane %v1485, 2
          %v1487 = vadd.f32 %v1485, %v1486
          %v1488 = vrot.slane %v1487, 1
          %v1489 = vadd.f32 %v1487, %v1488
          %v1490 = vrcp.pop 16.0
          %v1491 = vmul.f32 %v1482, %v1490
          %v1492 = vmul.f32 %v1489, %v1490
          %v1493 = vsub.f32 %v1310, %v1491
          %v1494 = vsub.f32 %v1470, %v1492
          %v1495 = vsub.f32 %v1313, %v1491
          %v1496 = vsub.f32 %v1473, %v1492
          %v1497 = vmul.f32 %v1493, %v1493
          %v1498 = vmul.f32 %v1494, %v1494
          %v1499 = vmul.f32 %v1495, %v1495
          %v1500 = vmul.f32 %v1496, %v1496
          %v1501 = vadd.f32 %v1497, %v1499
          %v1502 = vrot.slane %v1501, 4
          %v1503 = vadd.f32 %v1501, %v1502
          %v1504 = vrot.slane %v1503, 2
          %v1505 = vadd.f32 %v1503, %v1504
          %v1506 = vrot.slane %v1505, 1
          %v1507 = vadd.f32 %v1505, %v1506
          %v1508 = vadd.f32 %v1498, %v1500
          %v1509 = vrot.slane %v1508, 4
          %v1510 = vadd.f32 %v1508, %v1509
          %v1511 = vrot.slane %v1510, 2
          %v1512 = vadd.f32 %v1510, %v1511
          %v1513 = vrot.slane %v1512, 1
          %v1514 = vadd.f32 %v1512, %v1513
          %v1515 = vmul.f32 %v1507, %v1490
          %v1516 = vmul.f32 %v1514, %v1490
          %v1517 = vadd.f32 %v1515, 1e-05
          %v1518 = vadd.f32 %v1516, 1e-05
          %v1519 = vrsqrt.pop %v1517
          %v1520 = vrsqrt.pop %v1518
          %v1521 = vmul.f32 %v1493, %v1519
          %v1522 = vmul.f32 %v1494, %v1520
          %v1523 = vmul.f32 %v1495, %v1519
          %v1524 = vmul.f32 %v1496, %v1520
          %v1525 = vld [vmem:[%s3] sm:$0xff]
          %v1526 = vld [vmem:[%s3 + $0x8] sm:$0xff]
          %1528 = vset.pattern.permute.xlu0 0
          %1529 = vperm.xlu0 %1528, %v1525
          %v1530 = vpop.permute.xlu0 %1529
          %1533 = vset.pattern.permute.xlu0 0
          %1534 = vperm.xlu0 %1533, %v1526
          %v1535 = vpop.permute.xlu0 %1534
          %v1537 = vmul.f32 %v1521, %v1530
          %v1538 = vmul.f32 %v1522, %v1530
          %v1539 = vmul.f32 %v1523, %v1535
          %v1540 = vmul.f32 %v1524, %v1535
          %v1541 = vld [vmem:[%s4] sm:$0xff]
          %v1542 = vld [vmem:[%s4 + $0x8] sm:$0xff]
          %1544 = vset.pattern.permute.xlu0 0
          %1545 = vperm.xlu0 %1544, %v1541
          %v1546 = vpop.permute.xlu0 %1545
          %1549 = vset.pattern.permute.xlu0 0
          %1550 = vperm.xlu0 %1549, %v1542
          %v1551 = vpop.permute.xlu0 %1550
          %v1553 = vadd.f32 %v1537, %v1546
          %v1554 = vadd.f32 %v1538, %v1546
          %v1555 = vadd.f32 %v1539, %v1551
          %v1556 = vadd.f32 %v1540, %v1551
          %v1557 = vld [vmem:[%s5] sm:$0xf]
          %v1558 = vld [vmem:[%s5 + $0x4] sm:$0xf]
          %v1559 = vpack.c.bf16 %v1555, %v1553
          %v1560 = vpack.c.bf16 %v1556, %v1554
          %v1561 = vld [vmem:[%s6] sm:$0xff]
          %v1562 = vld [vmem:[%s6 + $0x8] sm:$0xff]
          %1564 = vset.pattern.permute.xlu0 0
          %1565 = vperm.xlu0 %1564, %v1561
          %v1566 = vpop.permute.xlu0 %1565
          %1569 = vset.pattern.permute.xlu0 0
          %1570 = vperm.xlu0 %1569, %v1562
          %v1571 = vpop.permute.xlu0 %1570
          %v1575 = vunpack.c.l.b16 %v1557
          %v1576 = vunpack.c.l.b16 %v1558
          %v1577 = vpack.c.b16 %v1576, %v1575
          %vm1578 = vcmask 130048
          %v1580 = vsel %vm1578, %v1577, 0
          %1582 = vmatprep.subr.bf16.mxu0 %v1560
          %1583 = vmatpush1.bf16.msra.mxu0 %v1559
          %1584 = vmatprep.subr.bf16.mxu0 0
          %1585 = vmatpush1.bf16.msra.mxu0 0
          %1586 = vmatprep.subr.bf16.mxu0 0
          %1587 = vmatpush1.bf16.msra.mxu0 0
          %1588 = vmatprep.subr.bf16.mxu0 0
          %1589 = vmatpush1.bf16.msra.mxu0 0
          %1590 = vmatprep.subr.bf16.mxu0 0
          %1591 = vmatpush1.bf16.msra.mxu0 0
          %1592 = vmatprep.subr.bf16.mxu0 0
          %1593 = vmatpush1.bf16.msra.mxu0 0
          %1594 = vmatprep.subr.bf16.mxu0 0
          %1595 = vmatpush1.bf16.msra.mxu0 0
          %1596 = vmatprep.subr.bf16.mxu0 0
          %1597 = vmatpush1.bf16.msra.mxu0 0
          %1598 = vmatprep.subr.bf16.mxu0 0
          %1599 = vmatpush1.bf16.msra.mxu0 0
          %1600 = vmatprep.subr.bf16.mxu0 0
          %1601 = vmatpush1.bf16.msra.mxu0 0
          %1602 = vmatprep.subr.bf16.mxu0 0
          %1603 = vmatpush1.bf16.msra.mxu0 0
          %1604 = vmatprep.subr.bf16.mxu0 0
          %1605 = vmatpush1.bf16.msra.mxu0 0
          %1606 = vmatprep.subr.bf16.mxu0 0
          %1607 = vmatpush1.bf16.msra.mxu0 0
          %1608 = vmatprep.subr.bf16.mxu0 0
          %1609 = vmatpush1.bf16.msra.mxu0 0
          %1610 = vmatprep.subr.bf16.mxu0 0
          %1611 = vmatpush1.bf16.msra.mxu0 0
          %1612 = vmatprep.subr.bf16.mxu0 0
          %1613 = vmatpush1.bf16.msra.mxu0 0
          %1614 = vmatprep.mubr.bf16.mxu0 0
          %1615 = vmatmul.mubr.bf16.gmra.mrb[0].mxu0 %v1580
          %v1616 = vpop.f32.mrb[0].mxu0
          %v1617 = vadd.f32 %v1566, %v1616
          %v1618 = vpop.f32.mrb[0].mxu0
          %v1619 = vadd.f32 %v1566, %v1618
          %v1620 = vpop.f32.mrb[0].mxu0
          %v1621 = vadd.f32 %v1571, %v1620
          %v1622 = vpop.f32.mrb[0].mxu0
          %v1623 = vadd.f32 %v1571, %v1622
          %1624 = vdwg.mxu0
          %v1625 = vmax.f32 %v1617, 0.0
          %v1626 = vmax.f32 %v1619, 0.0
          %v1627 = vmax.f32 %v1621, 0.0
          %v1628 = vmax.f32 %v1623, 0.0
          %v1629 = vld [vmem:[%s7] sm:$0xf]
          %v1630 = vld [vmem:[%s7 + $0x4] sm:$0xf]
          %v1631 = vpack.c.bf16 %v1627, %v1625
          %v1632 = vpack.c.bf16 %v1628, %v1626
          %v1633 = vld [vmem:[%s8] sm:$0xff]
          %v1634 = vld [vmem:[%s8 + $0x8] sm:$0xff]
          %1636 = vset.pattern.permute.xlu0 0
          %1637 = vperm.xlu0 %1636, %v1633
          %v1638 = vpop.permute.xlu0 %1637
          %1641 = vset.pattern.permute.xlu0 0
          %1642 = vperm.xlu0 %1641, %v1634
          %v1643 = vpop.permute.xlu0 %1642
          %v1647 = vunpack.c.l.b16 %v1629
          %v1648 = vunpack.c.l.b16 %v1630
          %v1649 = vpack.c.b16 %v1648, %v1647
          %v1651 = vsel %vm1578, %v1649, 0
          %1653 = vmatprep.subr.bf16.mxu0 %v1632
          %1654 = vmatpush1.bf16.msra.mxu0 %v1631
          %1655 = vmatprep.subr.bf16.mxu0 0
          %1656 = vmatpush1.bf16.msra.mxu0 0
          %1657 = vmatprep.subr.bf16.mxu0 0
          %1658 = vmatpush1.bf16.msra.mxu0 0
          %1659 = vmatprep.subr.bf16.mxu0 0
          %1660 = vmatpush1.bf16.msra.mxu0 0
          %1661 = vmatprep.subr.bf16.mxu0 0
          %1662 = vmatpush1.bf16.msra.mxu0 0
          %1663 = vmatprep.subr.bf16.mxu0 0
          %1664 = vmatpush1.bf16.msra.mxu0 0
          %1665 = vmatprep.subr.bf16.mxu0 0
          %1666 = vmatpush1.bf16.msra.mxu0 0
          %1667 = vmatprep.subr.bf16.mxu0 0
          %1668 = vmatpush1.bf16.msra.mxu0 0
          %1669 = vmatprep.subr.bf16.mxu0 0
          %1670 = vmatpush1.bf16.msra.mxu0 0
          %1671 = vmatprep.subr.bf16.mxu0 0
          %1672 = vmatpush1.bf16.msra.mxu0 0
          %1673 = vmatprep.subr.bf16.mxu0 0
          %1674 = vmatpush1.bf16.msra.mxu0 0
          %1675 = vmatprep.subr.bf16.mxu0 0
          %1676 = vmatpush1.bf16.msra.mxu0 0
          %1677 = vmatprep.subr.bf16.mxu0 0
          %1678 = vmatpush1.bf16.msra.mxu0 0
          %1679 = vmatprep.subr.bf16.mxu0 0
          %1680 = vmatpush1.bf16.msra.mxu0 0
          %1681 = vmatprep.subr.bf16.mxu0 0
          %1682 = vmatpush1.bf16.msra.mxu0 0
          %1683 = vmatprep.subr.bf16.mxu0 0
          %1684 = vmatpush1.bf16.msra.mxu0 0
          %1685 = vmatprep.mubr.bf16.mxu0 0
          %1686 = vmatmul.mubr.bf16.gmra.mrb[0].mxu0 %v1651
          %v1687 = vpop.f32.mrb[0].mxu0
          %v1688 = vadd.f32 %v1638, %v1687
          %v1689 = vpop.f32.mrb[0].mxu0
          %v1690 = vadd.f32 %v1638, %v1689
          %v1691 = vpop.f32.mrb[0].mxu0
          %v1692 = vadd.f32 %v1643, %v1691
          %v1693 = vpop.f32.mrb[0].mxu0
          %v1694 = vadd.f32 %v1643, %v1693
          %1695 = vdwg.mxu0
          %v1696 = vadd.f32 %v1310, %v1688
          %v1697 = vadd.f32 %v1470, %v1690
          %v1698 = vadd.f32 %v1313, %v1692
          %v1699 = vadd.f32 %v1473, %v1694
          %v1700 = vadd.f32 %v1696, %v1698
          %v1701 = vrot.slane %v1700, 4
          %v1702 = vadd.f32 %v1700, %v1701
          %v1703 = vrot.slane %v1702, 2
          %v1704 = vadd.f32 %v1702, %v1703
          %v1705 = vrot.slane %v1704, 1
          %v1706 = vadd.f32 %v1704, %v1705
          %v1707 = vadd.f32 %v1697, %v1699
          %v1708 = vrot.slane %v1707, 4
          %v1709 = vadd.f32 %v1707, %v1708
          %v1710 = vrot.slane %v1709, 2
          %v1711 = vadd.f32 %v1709, %v1710
          %v1712 = vrot.slane %v1711, 1
          %v1713 = vadd.f32 %v1711, %v1712
          %v1714 = vmul.f32 %v1706, %v1490
          %v1715 = vmul.f32 %v1713, %v1490
          %v1716 = vsub.f32 %v1696, %v1714
          %v1717 = vsub.f32 %v1697, %v1715
          %v1718 = vsub.f32 %v1698, %v1714
          %v1719 = vsub.f32 %v1699, %v1715
          %v1720 = vmul.f32 %v1716, %v1716
          %v1721 = vmul.f32 %v1717, %v1717
          %v1722 = vmul.f32 %v1718, %v1718
          %v1723 = vmul.f32 %v1719, %v1719
          %v1724 = vadd.f32 %v1720, %v1722
          %v1725 = vrot.slane %v1724, 4
          %v1726 = vadd.f32 %v1724, %v1725
          %v1727 = vrot.slane %v1726, 2
          %v1728 = vadd.f32 %v1726, %v1727
          %v1729 = vrot.slane %v1728, 1
          %v1730 = vadd.f32 %v1728, %v1729
          %v1731 = vadd.f32 %v1721, %v1723
          %v1732 = vrot.slane %v1731, 4
          %v1733 = vadd.f32 %v1731, %v1732
          %v1734 = vrot.slane %v1733, 2
          %v1735 = vadd.f32 %v1733, %v1734
          %v1736 = vrot.slane %v1735, 1
          %v1737 = vadd.f32 %v1735, %v1736
          %v1738 = vmul.f32 %v1730, %v1490
          %v1739 = vmul.f32 %v1737, %v1490
          %v1740 = vadd.f32 %v1738, 1e-05
          %v1741 = vadd.f32 %v1739, 1e-05
          %v1742 = vrsqrt.pop %v1740
          %v1743 = vrsqrt.pop %v1741
          %v1744 = vmul.f32 %v1716, %v1742
          %v1745 = vmul.f32 %v1717, %v1743
          %v1746 = vmul.f32 %v1718, %v1742
          %v1747 = vmul.f32 %v1719, %v1743
          %s1748 = scalar_lea.vmem %s3, 16
          %v1749 = vld [vmem:[%s1748] sm:$0xff]
          %v1750 = vld [vmem:[%s1748 + $0x8] sm:$0xff]
          %1752 = vset.pattern.permute.xlu0 0
          %1753 = vperm.xlu0 %1752, %v1749
          %v1754 = vpop.permute.xlu0 %1753
          %1757 = vset.pattern.permute.xlu0 0
          %1758 = vperm.xlu0 %1757, %v1750
          %v1759 = vpop.permute.xlu0 %1758
          %v1761 = vmul.f32 %v1744, %v1754
          %v1762 = vmul.f32 %v1745, %v1754
          %v1763 = vmul.f32 %v1746, %v1759
          %v1764 = vmul.f32 %v1747, %v1759
          %s1765 = scalar_lea.vmem %s4, 16
          %v1766 = vld [vmem:[%s1765] sm:$0xff]
          %v1767 = vld [vmem:[%s1765 + $0x8] sm:$0xff]
          %1769 = vset.pattern.permute.xlu0 0
          %1770 = vperm.xlu0 %1769, %v1766
          %v1771 = vpop.permute.xlu0 %1770
          %1774 = vset.pattern.permute.xlu0 0
          %1775 = vperm.xlu0 %1774, %v1767
          %v1776 = vpop.permute.xlu0 %1775
          %v1778 = vadd.f32 %v1761, %v1771
          %v1779 = vadd.f32 %v1762, %v1771
          %v1780 = vadd.f32 %v1763, %v1776
          %v1781 = vadd.f32 %v1764, %v1776
          %s1782 = scalar_lea.vmem %s5, 8
          %v1783 = vld [vmem:[%s1782] sm:$0xf]
          %v1784 = vld [vmem:[%s1782 + $0x4] sm:$0xf]
          %v1785 = vpack.c.bf16 %v1780, %v1778
          %v1786 = vpack.c.bf16 %v1781, %v1779
          %s1787 = scalar_lea.vmem %s6, 16
          %v1788 = vld [vmem:[%s1787] sm:$0xff]
          %v1789 = vld [vmem:[%s1787 + $0x8] sm:$0xff]
          %1791 = vset.pattern.permute.xlu0 0
          %1792 = vperm.xlu0 %1791, %v1788
          %v1793 = vpop.permute.xlu0 %1792
          %1796 = vset.pattern.permute.xlu0 0
          %1797 = vperm.xlu0 %1796, %v1789
          %v1798 = vpop.permute.xlu0 %1797
          %v1802 = vunpack.c.l.b16 %v1783
          %v1803 = vunpack.c.l.b16 %v1784
          %v1804 = vpack.c.b16 %v1803, %v1802
          %v1806 = vsel %vm1578, %v1804, 0
          %1808 = vmatprep.subr.bf16.mxu0 %v1786
          %1809 = vmatpush1.bf16.msra.mxu0 %v1785
          %1810 = vmatprep.subr.bf16.mxu0 0
          %1811 = vmatpush1.bf16.msra.mxu0 0
          %1812 = vmatprep.subr.bf16.mxu0 0
          %1813 = vmatpush1.bf16.msra.mxu0 0
          %1814 = vmatprep.subr.bf16.mxu0 0
          %1815 = vmatpush1.bf16.msra.mxu0 0
          %1816 = vmatprep.subr.bf16.mxu0 0
          %1817 = vmatpush1.bf16.msra.mxu0 0
          %1818 = vmatprep.subr.bf16.mxu0 0
          %1819 = vmatpush1.bf16.msra.mxu0 0
          %1820 = vmatprep.subr.bf16.mxu0 0
          %1821 = vmatpush1.bf16.msra.mxu0 0
          %1822 = vmatprep.subr.bf16.mxu0 0
          %1823 = vmatpush1.bf16.msra.mxu0 0
          %1824 = vmatprep.subr.bf16.mxu0 0
          %1825 = vmatpush1.bf16.msra.mxu0 0
          %1826 = vmatprep.subr.bf16.mxu0 0
          %1827 = vmatpush1.bf16.msra.mxu0 0
          %1828 = vmatprep.subr.bf16.mxu0 0
          %1829 = vmatpush1.bf16.msra.mxu0 0
          %1830 = vmatprep.subr.bf16.mxu0 0
          %1831 = vmatpush1.bf16.msra.mxu0 0
          %1832 = vmatprep.subr.bf16.mxu0 0
          %1833 = vmatpush1.bf16.msra.mxu0 0
          %1834 = vmatprep.subr.bf16.mxu0 0
          %1835 = vmatpush1.bf16.msra.mxu0 0
          %1836 = vmatprep.subr.bf16.mxu0 0
          %1837 = vmatpush1.bf16.msra.mxu0 0
          %1838 = vmatprep.subr.bf16.mxu0 0
          %1839 = vmatpush1.bf16.msra.mxu0 0
          %1840 = vmatprep.mubr.bf16.mxu0 0
          %1841 = vmatmul.mubr.bf16.gmra.mrb[0].mxu0 %v1806
          %v1842 = vpop.f32.mrb[0].mxu0
          %v1843 = vadd.f32 %v1793, %v1842
          %v1844 = vpop.f32.mrb[0].mxu0
          %v1845 = vadd.f32 %v1793, %v1844
          %v1846 = vpop.f32.mrb[0].mxu0
          %v1847 = vadd.f32 %v1798, %v1846
          %v1848 = vpop.f32.mrb[0].mxu0
          %v1849 = vadd.f32 %v1798, %v1848
          %1850 = vdwg.mxu0
          %v1851 = vmax.f32 %v1843, 0.0
          %v1852 = vmax.f32 %v1845, 0.0
          %v1853 = vmax.f32 %v1847, 0.0
          %v1854 = vmax.f32 %v1849, 0.0
          %s1855 = scalar_lea.vmem %s7, 8
          %v1856 = vld [vmem:[%s1855] sm:$0xf]
          %v1857 = vld [vmem:[%s1855 + $0x4] sm:$0xf]
          %v1858 = vpack.c.bf16 %v1853, %v1851
          %v1859 = vpack.c.bf16 %v1854, %v1852
          %s1860 = scalar_lea.vmem %s8, 16
          %v1861 = vld [vmem:[%s1860] sm:$0xff]
          %v1862 = vld [vmem:[%s1860 + $0x8] sm:$0xff]
          %1864 = vset.pattern.permute.xlu0 0
          %1865 = vperm.xlu0 %1864, %v1861
          %v1866 = vpop.permute.xlu0 %1865
          %1869 = vset.pattern.permute.xlu0 0
          %1870 = vperm.xlu0 %1869, %v1862
          %v1871 = vpop.permute.xlu0 %1870
          %v1875 = vunpack.c.l.b16 %v1856
          %v1876 = vunpack.c.l.b16 %v1857
          %v1877 = vpack.c.b16 %v1876, %v1875
          %v1879 = vsel %vm1578, %v1877, 0
          %1881 = vmatprep.subr.bf16.mxu0 %v1859
          %1882 = vmatpush1.bf16.msra.mxu0 %v1858
          %1883 = vmatprep.subr.bf16.mxu0 0
          %1884 = vmatpush1.bf16.msra.mxu0 0
          %1885 = vmatprep.subr.bf16.mxu0 0
          %1886 = vmatpush1.bf16.msra.mxu0 0
          %1887 = vmatprep.subr.bf16.mxu0 0
          %1888 = vmatpush1.bf16.msra.mxu0 0
          %1889 = vmatprep.subr.bf16.mxu0 0
          %1890 = vmatpush1.bf16.msra.mxu0 0
          %1891 = vmatprep.subr.bf16.mxu0 0
          %1892 = vmatpush1.bf16.msra.mxu0 0
          %1893 = vmatprep.subr.bf16.mxu0 0
          %1894 = vmatpush1.bf16.msra.mxu0 0
          %1895 = vmatprep.subr.bf16.mxu0 0
          %1896 = vmatpush1.bf16.msra.mxu0 0
          %1897 = vmatprep.subr.bf16.mxu0 0
          %1898 = vmatpush1.bf16.msra.mxu0 0
          %1899 = vmatprep.subr.bf16.mxu0 0
          %1900 = vmatpush1.bf16.msra.mxu0 0
          %1901 = vmatprep.subr.bf16.mxu0 0
          %1902 = vmatpush1.bf16.msra.mxu0 0
          %1903 = vmatprep.subr.bf16.mxu0 0
          %1904 = vmatpush1.bf16.msra.mxu0 0
          %1905 = vmatprep.subr.bf16.mxu0 0
          %1906 = vmatpush1.bf16.msra.mxu0 0
          %1907 = vmatprep.subr.bf16.mxu0 0
          %1908 = vmatpush1.bf16.msra.mxu0 0
          %1909 = vmatprep.subr.bf16.mxu0 0
          %1910 = vmatpush1.bf16.msra.mxu0 0
          %1911 = vmatprep.subr.bf16.mxu0 0
          %1912 = vmatpush1.bf16.msra.mxu0 0
          %1913 = vmatprep.mubr.bf16.mxu0 0
          %1914 = vmatmul.mubr.bf16.gmra.mrb[0].mxu0 %v1879
          %v1915 = vpop.f32.mrb[0].mxu0
          %v1916 = vadd.f32 %v1866, %v1915
          %v1917 = vpop.f32.mrb[0].mxu0
          %v1918 = vadd.f32 %v1866, %v1917
          %v1919 = vpop.f32.mrb[0].mxu0
          %v1920 = vadd.f32 %v1871, %v1919
          %v1921 = vpop.f32.mrb[0].mxu0
          %v1922 = vadd.f32 %v1871, %v1921
          %1923 = vdwg.mxu0
          %v1924 = vadd.f32 %v1696, %v1916
          %v1925 = vadd.f32 %v1697, %v1918
          %v1926 = vadd.f32 %v1698, %v1920
          %v1927 = vadd.f32 %v1699, %v1922
          %v1928 = vadd.f32 %v1924, %v1926
          %v1929 = vrot.slane %v1928, 4
          %v1930 = vadd.f32 %v1928, %v1929
          %v1931 = vrot.slane %v1930, 2
          %v1932 = vadd.f32 %v1930, %v1931
          %v1933 = vrot.slane %v1932, 1
          %v1934 = vadd.f32 %v1932, %v1933
          %v1935 = vadd.f32 %v1925, %v1927
          %v1936 = vrot.slane %v1935, 4
          %v1937 = vadd.f32 %v1935, %v1936
          %v1938 = vrot.slane %v1937, 2
          %v1939 = vadd.f32 %v1937, %v1938
          %v1940 = vrot.slane %v1939, 1
          %v1941 = vadd.f32 %v1939, %v1940
          %v1942 = vmul.f32 %v1934, %v1490
          %v1943 = vmul.f32 %v1941, %v1490
          %v1944 = vsub.f32 %v1924, %v1942
          %v1945 = vsub.f32 %v1925, %v1943
          %v1946 = vsub.f32 %v1926, %v1942
          %v1947 = vsub.f32 %v1927, %v1943
          %v1948 = vmul.f32 %v1944, %v1944
          %v1949 = vmul.f32 %v1945, %v1945
          %v1950 = vmul.f32 %v1946, %v1946
          %v1951 = vmul.f32 %v1947, %v1947
          %v1952 = vadd.f32 %v1948, %v1950
          %v1953 = vrot.slane %v1952, 4
          %v1954 = vadd.f32 %v1952, %v1953
          %v1955 = vrot.slane %v1954, 2
          %v1956 = vadd.f32 %v1954, %v1955
          %v1957 = vrot.slane %v1956, 1
          %v1958 = vadd.f32 %v1956, %v1957
          %v1959 = vadd.f32 %v1949, %v1951
          %v1960 = vrot.slane %v1959, 4
          %v1961 = vadd.f32 %v1959, %v1960
          %v1962 = vrot.slane %v1961, 2
          %v1963 = vadd.f32 %v1961, %v1962
          %v1964 = vrot.slane %v1963, 1
          %v1965 = vadd.f32 %v1963, %v1964
          %v1966 = vmul.f32 %v1958, %v1490
          %v1967 = vmul.f32 %v1965, %v1490
          %v1968 = vadd.f32 %v1966, 1e-05
          %v1969 = vadd.f32 %v1967, 1e-05
          %v1970 = vrsqrt.pop %v1968
          %v1971 = vrsqrt.pop %v1969
          %v1972 = vmul.f32 %v1944, %v1970
          %v1973 = vmul.f32 %v1945, %v1971
          %v1974 = vmul.f32 %v1946, %v1970
          %v1975 = vmul.f32 %v1947, %v1971
          %s1976 = scalar_lea.vmem %s3, 32
          %v1977 = vld [vmem:[%s1976] sm:$0xff]
          %v1978 = vld [vmem:[%s1976 + $0x8] sm:$0xff]
          %1980 = vset.pattern.permute.xlu0 0
          %1981 = vperm.xlu0 %1980, %v1977
          %v1982 = vpop.permute.xlu0 %1981
          %1985 = vset.pattern.permute.xlu0 0
          %1986 = vperm.xlu0 %1985, %v1978
          %v1987 = vpop.permute.xlu0 %1986
          %v1989 = vmul.f32 %v1972, %v1982
          %v1990 = vmul.f32 %v1973, %v1982
          %v1991 = vmul.f32 %v1974, %v1987
          %v1992 = vmul.f32 %v1975, %v1987
          %s1993 = scalar_lea.vmem %s4, 32
          %v1994 = vld [vmem:[%s1993] sm:$0xff]
          %v1995 = vld [vmem:[%s1993 + $0x8] sm:$0xff]
          %1997 = vset.pattern.permute.xlu0 0
          %1998 = vperm.xlu0 %1997, %v1994
          %v1999 = vpop.permute.xlu0 %1998
          %2002 = vset.pattern.permute.xlu0 0
          %2003 = vperm.xlu0 %2002, %v1995
          %v2004 = vpop.permute.xlu0 %2003
          %v2006 = vadd.f32 %v1989, %v1999
          %v2007 = vadd.f32 %v1990, %v1999
          %v2008 = vadd.f32 %v1991, %v2004
          %v2009 = vadd.f32 %v1992, %v2004
          %s2010 = scalar_lea.vmem %s5, 16
          %v2011 = vld [vmem:[%s2010] sm:$0xf]
          %v2012 = vld [vmem:[%s2010 + $0x4] sm:$0xf]
          %v2013 = vpack.c.bf16 %v2008, %v2006
          %v2014 = vpack.c.bf16 %v2009, %v2007
          %s2015 = scalar_lea.vmem %s6, 32
          %v2016 = vld [vmem:[%s2015] sm:$0xff]
          %v2017 = vld [vmem:[%s2015 + $0x8] sm:$0xff]
          %2019 = vset.pattern.permute.xlu0 0
          %2020 = vperm.xlu0 %2019, %v2016
          %v2021 = vpop.permute.xlu0 %2020
          %2024 = vset.pattern.permute.xlu0 0
          %2025 = vperm.xlu0 %2024, %v2017
          %v2026 = vpop.permute.xlu0 %2025
          %v2030 = vunpack.c.l.b16 %v2011
          %v2031 = vunpack.c.l.b16 %v2012
          %v2032 = vpack.c.b16 %v2031, %v2030
          %v2034 = vsel %vm1578, %v2032, 0
          %2036 = vmatprep.subr.bf16.mxu0 %v2014
          %2037 = vmatpush1.bf16.msra.mxu0 %v2013
          %2038 = vmatprep.subr.bf16.mxu0 0
          %2039 = vmatpush1.bf16.msra.mxu0 0
          %2040 = vmatprep.subr.bf16.mxu0 0
          %2041 = vmatpush1.bf16.msra.mxu0 0
          %2042 = vmatprep.subr.bf16.mxu0 0
          %2043 = vmatpush1.bf16.msra.mxu0 0
          %2044 = vmatprep.subr.bf16.mxu0 0
          %2045 = vmatpush1.bf16.msra.mxu0 0
          %2046 = vmatprep.subr.bf16.mxu0 0
          %2047 = vmatpush1.bf16.msra.mxu0 0
          %2048 = vmatprep.subr.bf16.mxu0 0
          %2049 = vmatpush1.bf16.msra.mxu0 0
          %2050 = vmatprep.subr.bf16.mxu0 0
          %2051 = vmatpush1.bf16.msra.mxu0 0
          %2052 = vmatprep.subr.bf16.mxu0 0
          %2053 = vmatpush1.bf16.msra.mxu0 0
          %2054 = vmatprep.subr.bf16.mxu0 0
          %2055 = vmatpush1.bf16.msra.mxu0 0
          %2056 = vmatprep.subr.bf16.mxu0 0
          %2057 = vmatpush1.bf16.msra.mxu0 0
          %2058 = vmatprep.subr.bf16.mxu0 0
          %2059 = vmatpush1.bf16.msra.mxu0 0
          %2060 = vmatprep.subr.bf16.mxu0 0
          %2061 = vmatpush1.bf16.msra.mxu0 0
          %2062 = vmatprep.subr.bf16.mxu0 0
          %2063 = vmatpush1.bf16.msra.mxu0 0
          %2064 = vmatprep.subr.bf16.mxu0 0
          %2065 = vmatpush1.bf16.msra.mxu0 0
          %2066 = vmatprep.subr.bf16.mxu0 0
          %2067 = vmatpush1.bf16.msra.mxu0 0
          %2068 = vmatprep.mubr.bf16.mxu0 0
          %2069 = vmatmul.mubr.bf16.gmra.mrb[0].mxu0 %v2034
          %v2070 = vpop.f32.mrb[0].mxu0
          %v2071 = vadd.f32 %v2021, %v2070
          %v2072 = vpop.f32.mrb[0].mxu0
          %v2073 = vadd.f32 %v2021, %v2072
          %v2074 = vpop.f32.mrb[0].mxu0
          %v2075 = vadd.f32 %v2026, %v2074
          %v2076 = vpop.f32.mrb[0].mxu0
          %v2077 = vadd.f32 %v2026, %v2076
          %2078 = vdwg.mxu0
          %v2079 = vmax.f32 %v2071, 0.0
          %v2080 = vmax.f32 %v2073, 0.0
          %v2081 = vmax.f32 %v2075, 0.0
          %v2082 = vmax.f32 %v2077, 0.0
          %s2083 = scalar_lea.vmem %s7, 16
          %v2084 = vld [vmem:[%s2083] sm:$0xf]
          %v2085 = vld [vmem:[%s2083 + $0x4] sm:$0xf]
          %v2086 = vpack.c.bf16 %v2081, %v2079
          %v2087 = vpack.c.bf16 %v2082, %v2080
          %s2088 = scalar_lea.vmem %s8, 32
          %v2089 = vld [vmem:[%s2088] sm:$0xff]
          %v2090 = vld [vmem:[%s2088 + $0x8] sm:$0xff]
          %2092 = vset.pattern.permute.xlu0 0
          %2093 = vperm.xlu0 %2092, %v2089
          %v2094 = vpop.permute.xlu0 %2093
          %2097 = vset.pattern.permute.xlu0 0
          %2098 = vperm.xlu0 %2097, %v2090
          %v2099 = vpop.permute.xlu0 %2098
          %v2103 = vunpack.c.l.b16 %v2084
          %v2104 = vunpack.c.l.b16 %v2085
          %v2105 = vpack.c.b16 %v2104, %v2103
          %v2107 = vsel %vm1578, %v2105, 0
          %2109 = vmatprep.subr.bf16.mxu0 %v2087
          %2110 = vmatpush1.bf16.msra.mxu0 %v2086
          %2111 = vmatprep.subr.bf16.mxu0 0
          %2112 = vmatpush1.bf16.msra.mxu0 0
          %2113 = vmatprep.subr.bf16.mxu0 0
          %2114 = vmatpush1.bf16.msra.mxu0 0
          %2115 = vmatprep.subr.bf16.mxu0 0
          %2116 = vmatpush1.bf16.msra.mxu0 0
          %2117 = vmatprep.subr.bf16.mxu0 0
          %2118 = vmatpush1.bf16.msra.mxu0 0
          %2119 = vmatprep.subr.bf16.mxu0 0
          %2120 = vmatpush1.bf16.msra.mxu0 0
          %2121 = vmatprep.subr.bf16.mxu0 0
          %2122 = vmatpush1.bf16.msra.mxu0 0
          %2123 = vmatprep.subr.bf16.mxu0 0
          %2124 = vmatpush1.bf16.msra.mxu0 0
          %2125 = vmatprep.subr.bf16.mxu0 0
          %2126 = vmatpush1.bf16.msra.mxu0 0
          %2127 = vmatprep.subr.bf16.mxu0 0
          %2128 = vmatpush1.bf16.msra.mxu0 0
          %2129 = vmatprep.subr.bf16.mxu0 0
          %2130 = vmatpush1.bf16.msra.mxu0 0
          %2131 = vmatprep.subr.bf16.mxu0 0
          %2132 = vmatpush1.bf16.msra.mxu0 0
          %2133 = vmatprep.subr.bf16.mxu0 0
          %2134 = vmatpush1.bf16.msra.mxu0 0
          %2135 = vmatprep.subr.bf16.mxu0 0
          %2136 = vmatpush1.bf16.msra.mxu0 0
          %2137 = vmatprep.subr.bf16.mxu0 0
          %2138 = vmatpush1.bf16.msra.mxu0 0
          %2139 = vmatprep.subr.bf16.mxu0 0
          %2140 = vmatpush1.bf16.msra.mxu0 0
          %2141 = vmatprep.mubr.bf16.mxu0 0
          %2142 = vmatmul.mubr.bf16.gmra.mrb[0].mxu0 %v2107
          %v2143 = vpop.f32.mrb[0].mxu0
          %v2144 = vadd.f32 %v2094, %v2143
          %v2145 = vpop.f32.mrb[0].mxu0
          %v2146 = vadd.f32 %v2094, %v2145
          %v2147 = vpop.f32.mrb[0].mxu0
          %v2148 = vadd.f32 %v2099, %v2147
          %v2149 = vpop.f32.mrb[0].mxu0
          %v2150 = vadd.f32 %v2099, %v2149
          %2151 = vdwg.mxu0
          %v2152 = vadd.f32 %v1924, %v2144
          %v2153 = vadd.f32 %v1925, %v2146
          %v2154 = vadd.f32 %v1926, %v2148
          %v2155 = vadd.f32 %v1927, %v2150
          %v2156 = vadd.f32 %v2152, %v2154
          %v2157 = vrot.slane %v2156, 4
          %v2158 = vadd.f32 %v2156, %v2157
          %v2159 = vrot.slane %v2158, 2
          %v2160 = vadd.f32 %v2158, %v2159
          %v2161 = vrot.slane %v2160, 1
          %v2162 = vadd.f32 %v2160, %v2161
          %v2163 = vadd.f32 %v2153, %v2155
          %v2164 = vrot.slane %v2163, 4
          %v2165 = vadd.f32 %v2163, %v2164
          %v2166 = vrot.slane %v2165, 2
          %v2167 = vadd.f32 %v2165, %v2166
          %v2168 = vrot.slane %v2167, 1
          %v2169 = vadd.f32 %v2167, %v2168
          %v2170 = vmul.f32 %v2162, %v1490
          %v2171 = vmul.f32 %v2169, %v1490
          %v2172 = vsub.f32 %v2152, %v2170
          %v2173 = vsub.f32 %v2153, %v2171
          %v2174 = vsub.f32 %v2154, %v2170
          %v2175 = vsub.f32 %v2155, %v2171
          %v2176 = vmul.f32 %v2172, %v2172
          %v2177 = vmul.f32 %v2173, %v2173
          %v2178 = vmul.f32 %v2174, %v2174
          %v2179 = vmul.f32 %v2175, %v2175
          %v2180 = vadd.f32 %v2176, %v2178
          %v2181 = vrot.slane %v2180, 4
          %v2182 = vadd.f32 %v2180, %v2181
          %v2183 = vrot.slane %v2182, 2
          %v2184 = vadd.f32 %v2182, %v2183
          %v2185 = vrot.slane %v2184, 1
          %v2186 = vadd.f32 %v2184, %v2185
          %v2187 = vadd.f32 %v2177, %v2179
          %v2188 = vrot.slane %v2187, 4
          %v2189 = vadd.f32 %v2187, %v2188
          %v2190 = vrot.slane %v2189, 2
          %v2191 = vadd.f32 %v2189, %v2190
          %v2192 = vrot.slane %v2191, 1
          %v2193 = vadd.f32 %v2191, %v2192
          %v2194 = vmul.f32 %v2186, %v1490
          %v2195 = vmul.f32 %v2193, %v1490
          %v2196 = vadd.f32 %v2194, 1e-05
          %v2197 = vadd.f32 %v2195, 1e-05
          %v2198 = vrsqrt.pop %v2196
          %v2199 = vrsqrt.pop %v2197
          %v2200 = vmul.f32 %v2172, %v2198
          %v2201 = vmul.f32 %v2173, %v2199
          %v2202 = vmul.f32 %v2174, %v2198
          %v2203 = vmul.f32 %v2175, %v2199
          %s2204 = scalar_lea.vmem %s3, 48
          %v2205 = vld [vmem:[%s2204] sm:$0xff]
          %v2206 = vld [vmem:[%s2204 + $0x8] sm:$0xff]
          %2208 = vset.pattern.permute.xlu0 0
          %2209 = vperm.xlu0 %2208, %v2205
          %v2210 = vpop.permute.xlu0 %2209
          %2213 = vset.pattern.permute.xlu0 0
          %2214 = vperm.xlu0 %2213, %v2206
          %v2215 = vpop.permute.xlu0 %2214
          %v2217 = vmul.f32 %v2200, %v2210
          %v2218 = vmul.f32 %v2201, %v2210
          %v2219 = vmul.f32 %v2202, %v2215
          %v2220 = vmul.f32 %v2203, %v2215
          %s2221 = scalar_lea.vmem %s4, 48
          %v2222 = vld [vmem:[%s2221] sm:$0xff]
          %v2223 = vld [vmem:[%s2221 + $0x8] sm:$0xff]
          %2225 = vset.pattern.permute.xlu0 0
          %2226 = vperm.xlu0 %2225, %v2222
          %v2227 = vpop.permute.xlu0 %2226
          %2230 = vset.pattern.permute.xlu0 0
          %2231 = vperm.xlu0 %2230, %v2223
          %v2232 = vpop.permute.xlu0 %2231
          %v2234 = vadd.f32 %v2217, %v2227
          %v2235 = vadd.f32 %v2218, %v2227
          %v2236 = vadd.f32 %v2219, %v2232
          %v2237 = vadd.f32 %v2220, %v2232
          %s2238 = scalar_lea.vmem %s5, 24
          %v2239 = vld [vmem:[%s2238] sm:$0xf]
          %v2240 = vld [vmem:[%s2238 + $0x4] sm:$0xf]
          %v2241 = vpack.c.bf16 %v2236, %v2234
          %v2242 = vpack.c.bf16 %v2237, %v2235
          %s2243 = scalar_lea.vmem %s6, 48
          %v2244 = vld [vmem:[%s2243] sm:$0xff]
          %v2245 = vld [vmem:[%s2243 + $0x8] sm:$0xff]
          %2247 = vset.pattern.permute.xlu0 0
          %2248 = vperm.xlu0 %2247, %v2244
          %v2249 = vpop.permute.xlu0 %2248
          %2252 = vset.pattern.permute.xlu0 0
          %2253 = vperm.xlu0 %2252, %v2245
          %v2254 = vpop.permute.xlu0 %2253
          %v2258 = vunpack.c.l.b16 %v2239
          %v2259 = vunpack.c.l.b16 %v2240
          %v2260 = vpack.c.b16 %v2259, %v2258
          %v2262 = vsel %vm1578, %v2260, 0
          %2264 = vmatprep.subr.bf16.mxu0 %v2242
          %2265 = vmatpush1.bf16.msra.mxu0 %v2241
          %2266 = vmatprep.subr.bf16.mxu0 0
          %2267 = vmatpush1.bf16.msra.mxu0 0
          %2268 = vmatprep.subr.bf16.mxu0 0
          %2269 = vmatpush1.bf16.msra.mxu0 0
          %2270 = vmatprep.subr.bf16.mxu0 0
          %2271 = vmatpush1.bf16.msra.mxu0 0
          %2272 = vmatprep.subr.bf16.mxu0 0
          %2273 = vmatpush1.bf16.msra.mxu0 0
          %2274 = vmatprep.subr.bf16.mxu0 0
          %2275 = vmatpush1.bf16.msra.mxu0 0
          %2276 = vmatprep.subr.bf16.mxu0 0
          %2277 = vmatpush1.bf16.msra.mxu0 0
          %2278 = vmatprep.subr.bf16.mxu0 0
          %2279 = vmatpush1.bf16.msra.mxu0 0
          %2280 = vmatprep.subr.bf16.mxu0 0
          %2281 = vmatpush1.bf16.msra.mxu0 0
          %2282 = vmatprep.subr.bf16.mxu0 0
          %2283 = vmatpush1.bf16.msra.mxu0 0
          %2284 = vmatprep.subr.bf16.mxu0 0
          %2285 = vmatpush1.bf16.msra.mxu0 0
          %2286 = vmatprep.subr.bf16.mxu0 0
          %2287 = vmatpush1.bf16.msra.mxu0 0
          %2288 = vmatprep.subr.bf16.mxu0 0
          %2289 = vmatpush1.bf16.msra.mxu0 0
          %2290 = vmatprep.subr.bf16.mxu0 0
          %2291 = vmatpush1.bf16.msra.mxu0 0
          %2292 = vmatprep.subr.bf16.mxu0 0
          %2293 = vmatpush1.bf16.msra.mxu0 0
          %2294 = vmatprep.subr.bf16.mxu0 0
          %2295 = vmatpush1.bf16.msra.mxu0 0
          %2296 = vmatprep.mubr.bf16.mxu0 0
          %2297 = vmatmul.mubr.bf16.gmra.mrb[0].mxu0 %v2262
          %v2298 = vpop.f32.mrb[0].mxu0
          %v2299 = vadd.f32 %v2249, %v2298
          %v2300 = vpop.f32.mrb[0].mxu0
          %v2301 = vadd.f32 %v2249, %v2300
          %v2302 = vpop.f32.mrb[0].mxu0
          %v2303 = vadd.f32 %v2254, %v2302
          %v2304 = vpop.f32.mrb[0].mxu0
          %v2305 = vadd.f32 %v2254, %v2304
          %2306 = vdwg.mxu0
          %v2307 = vmax.f32 %v2299, 0.0
          %v2308 = vmax.f32 %v2301, 0.0
          %v2309 = vmax.f32 %v2303, 0.0
          %v2310 = vmax.f32 %v2305, 0.0
          %s2311 = scalar_lea.vmem %s7, 24
          %v2312 = vld [vmem:[%s2311] sm:$0xf]
          %v2313 = vld [vmem:[%s2311 + $0x4] sm:$0xf]
          %v2314 = vpack.c.bf16 %v2309, %v2307
          %v2315 = vpack.c.bf16 %v2310, %v2308
          %s2316 = scalar_lea.vmem %s8, 48
          %v2317 = vld [vmem:[%s2316] sm:$0xff]
          %v2318 = vld [vmem:[%s2316 + $0x8] sm:$0xff]
          %2320 = vset.pattern.permute.xlu0 0
          %2321 = vperm.xlu0 %2320, %v2317
          %v2322 = vpop.permute.xlu0 %2321
          %2325 = vset.pattern.permute.xlu0 0
          %2326 = vperm.xlu0 %2325, %v2318
          %v2327 = vpop.permute.xlu0 %2326
          %v2331 = vunpack.c.l.b16 %v2312
          %v2332 = vunpack.c.l.b16 %v2313
          %v2333 = vpack.c.b16 %v2332, %v2331
          %v2335 = vsel %vm1578, %v2333, 0
          %2337 = vmatprep.subr.bf16.mxu0 %v2315
          %2338 = vmatpush1.bf16.msra.mxu0 %v2314
          %2339 = vmatprep.subr.bf16.mxu0 0
          %2340 = vmatpush1.bf16.msra.mxu0 0
          %2341 = vmatprep.subr.bf16.mxu0 0
          %2342 = vmatpush1.bf16.msra.mxu0 0
          %2343 = vmatprep.subr.bf16.mxu0 0
          %2344 = vmatpush1.bf16.msra.mxu0 0
          %2345 = vmatprep.subr.bf16.mxu0 0
          %2346 = vmatpush1.bf16.msra.mxu0 0
          %2347 = vmatprep.subr.bf16.mxu0 0
          %2348 = vmatpush1.bf16.msra.mxu0 0
          %2349 = vmatprep.subr.bf16.mxu0 0
          %2350 = vmatpush1.bf16.msra.mxu0 0
          %2351 = vmatprep.subr.bf16.mxu0 0
          %2352 = vmatpush1.bf16.msra.mxu0 0
          %2353 = vmatprep.subr.bf16.mxu0 0
          %2354 = vmatpush1.bf16.msra.mxu0 0
          %2355 = vmatprep.subr.bf16.mxu0 0
          %2356 = vmatpush1.bf16.msra.mxu0 0
          %2357 = vmatprep.subr.bf16.mxu0 0
          %2358 = vmatpush1.bf16.msra.mxu0 0
          %2359 = vmatprep.subr.bf16.mxu0 0
          %2360 = vmatpush1.bf16.msra.mxu0 0
          %2361 = vmatprep.subr.bf16.mxu0 0
          %2362 = vmatpush1.bf16.msra.mxu0 0
          %2363 = vmatprep.subr.bf16.mxu0 0
          %2364 = vmatpush1.bf16.msra.mxu0 0
          %2365 = vmatprep.subr.bf16.mxu0 0
          %2366 = vmatpush1.bf16.msra.mxu0 0
          %2367 = vmatprep.subr.bf16.mxu0 0
          %2368 = vmatpush1.bf16.msra.mxu0 0
          %2369 = vmatprep.mubr.bf16.mxu0 0
          %2370 = vmatmul.mubr.bf16.gmra.mrb[0].mxu0 %v2335
          %v2371 = vpop.f32.mrb[0].mxu0
          %v2372 = vadd.f32 %v2322, %v2371
          %v2373 = vpop.f32.mrb[0].mxu0
          %v2374 = vadd.f32 %v2322, %v2373
          %v2375 = vpop.f32.mrb[0].mxu0
          %v2376 = vadd.f32 %v2327, %v2375
          %v2377 = vpop.f32.mrb[0].mxu0
          %v2378 = vadd.f32 %v2327, %v2377
          %2379 = vdwg.mxu0
          %v2380 = vadd.f32 %v2152, %v2372
          %v2381 = vadd.f32 %v2153, %v2374
          %v2382 = vadd.f32 %v2154, %v2376
          %v2383 = vadd.f32 %v2155, %v2378
          %v2384 = vld [vmem:[%s9] sm:$0x3]
          %v2385 = vpack.c.bf16 %v2382, %v2380
          %v2386 = vpack.c.bf16 %v2383, %v2381
          %v2388 = vsel %vm1578, %v2384, 0
          %2390 = vmatprep.subr.bf16.mxu0 %v2386
          %2391 = vmatpush1.bf16.msra.mxu0 %v2385
          %2392 = vmatprep.subr.bf16.mxu0 0
          %2393 = vmatpush1.bf16.msra.mxu0 0
          %2394 = vmatprep.subr.bf16.mxu0 0
          %2395 = vmatpush1.bf16.msra.mxu0 0
          %2396 = vmatprep.subr.bf16.mxu0 0
          %2397 = vmatpush1.bf16.msra.mxu0 0
          %2398 = vmatprep.subr.bf16.mxu0 0
          %2399 = vmatpush1.bf16.msra.mxu0 0
          %2400 = vmatprep.subr.bf16.mxu0 0
          %2401 = vmatpush1.bf16.msra.mxu0 0
          %2402 = vmatprep.subr.bf16.mxu0 0
          %2403 = vmatpush1.bf16.msra.mxu0 0
          %2404 = vmatprep.subr.bf16.mxu0 0
          %2405 = vmatpush1.bf16.msra.mxu0 0
          %2406 = vmatprep.subr.bf16.mxu0 0
          %2407 = vmatpush1.bf16.msra.mxu0 0
          %2408 = vmatprep.subr.bf16.mxu0 0
          %2409 = vmatpush1.bf16.msra.mxu0 0
          %2410 = vmatprep.subr.bf16.mxu0 0
          %2411 = vmatpush1.bf16.msra.mxu0 0
          %2412 = vmatprep.subr.bf16.mxu0 0
          %2413 = vmatpush1.bf16.msra.mxu0 0
          %2414 = vmatprep.subr.bf16.mxu0 0
          %2415 = vmatpush1.bf16.msra.mxu0 0
          %2416 = vmatprep.subr.bf16.mxu0 0
          %2417 = vmatpush1.bf16.msra.mxu0 0
          %2418 = vmatprep.subr.bf16.mxu0 0
          %2419 = vmatpush1.bf16.msra.mxu0 0
          %2420 = vmatprep.subr.bf16.mxu0 0
          %2421 = vmatpush1.bf16.msra.mxu0 0
          %2422 = vmatprep.mubr.bf16.mxu0 0
          %2423 = vmatmul.mubr.bf16.gmra.mrb[0].mxu0 %v2388
          %v2424 = vpop.f32.mrb[0].mxu0
          %v2425 = vadd.f32 0.0, %v2424
          %v2426 = vpop.f32.mrb[0].mxu0
          %v2427 = vadd.f32 0.0, %v2426
          %v2428 = vpop.f32.mrb[0].mxu0
          %v2429 = vpop.f32.mrb[0].mxu0
          %2430 = vdwg.mxu0
          %v2431 = vpack.c.bf16 %v2425, %v2425
          %v2432 = vld [vmem:[%s10] sm:$0xf]
          %v2433 = vld [vmem:[%s10 + $0x4] sm:$0xf]
          %v2434 = vld [vmem:[%s10 + $0x8] sm:$0xf]
          %v2435 = vld [vmem:[%s10 + $0xc] sm:$0xf]
          %v2436 = vld [vmem:[%s10 + $0x10] sm:$0xf]
          %v2437 = vld [vmem:[%s10 + $0x14] sm:$0xf]
          %v2438 = vld [vmem:[%s10 + $0x18] sm:$0xf]
          %v2439 = vld [vmem:[%s10 + $0x1c] sm:$0xf]
          %v2440 = vld [vmem:[%s10 + $0x20] sm:$0xf]
          %v2441 = vld [vmem:[%s10 + $0x24] sm:$0xf]
          %v2442 = vld [vmem:[%s10 + $0x28] sm:$0xf]
          %v2443 = vld [vmem:[%s10 + $0x2c] sm:$0xf]
          %v2444 = vld [vmem:[%s10 + $0x30] sm:$0xf]
          %v2445 = vld [vmem:[%s10 + $0x34] sm:$0xf]
          %v2446 = vld [vmem:[%s10 + $0x38] sm:$0xf]
          %v2447 = vld [vmem:[%s10 + $0x3c] sm:$0xf]
          %v2448 = vld [vmem:[%s11] sm:$0xf]
          %v2465 = vunpack.c.l.b16 %v2432
          %v2466 = vunpack.c.l.b16 %v2433
          %v2467 = vunpack.c.l.b16 %v2434
          %v2468 = vunpack.c.l.b16 %v2435
          %v2469 = vunpack.c.l.b16 %v2436
          %v2470 = vunpack.c.l.b16 %v2437
          %v2471 = vunpack.c.l.b16 %v2438
          %v2472 = vunpack.c.l.b16 %v2439
          %v2473 = vunpack.c.l.b16 %v2440
          %v2474 = vunpack.c.l.b16 %v2441
          %v2475 = vunpack.c.l.b16 %v2442
          %v2476 = vunpack.c.l.b16 %v2443
          %v2477 = vunpack.c.l.b16 %v2444
          %v2478 = vunpack.c.l.b16 %v2445
          %v2479 = vunpack.c.l.b16 %v2446
          %v2480 = vunpack.c.l.b16 %v2447
          %v2481 = vpack.c.b16 %v2466, %v2465
          %v2482 = vpack.c.b16 %v2468, %v2467
          %v2483 = vpack.c.b16 %v2470, %v2469
          %v2484 = vpack.c.b16 %v2472, %v2471
          %v2485 = vpack.c.b16 %v2474, %v2473
          %v2486 = vpack.c.b16 %v2476, %v2475
          %v2487 = vpack.c.b16 %v2478, %v2477
          %v2488 = vpack.c.b16 %v2480, %v2479
          %2497 = vmatprep.subr.bf16.mxu0 0
          %2498 = vmatpush1.bf16.msra.mxu0 %v2481
          %2499 = vmatprep.subr.bf16.mxu0 0
          %2500 = vmatpush1.bf16.msra.mxu0 %v2482
          %2501 = vmatprep.subr.bf16.mxu0 0
          %2502 = vmatpush1.bf16.msra.mxu0 %v2483
          %2503 = vmatprep.subr.bf16.mxu0 0
          %2504 = vmatpush1.bf16.msra.mxu0 %v2484
          %2505 = vmatprep.subr.bf16.mxu0 0
          %2506 = vmatpush1.bf16.msra.mxu0 %v2485
          %2507 = vmatprep.subr.bf16.mxu0 0
          %2508 = vmatpush1.bf16.msra.mxu0 %v2486
          %2509 = vmatprep.subr.bf16.mxu0 0
          %2510 = vmatpush1.bf16.msra.mxu0 %v2487
          %2511 = vmatprep.subr.bf16.mxu0 0
          %2512 = vmatpush1.bf16.msra.mxu0 %v2488
          %2513 = vmatprep.subr.bf16.mxu0 0
          %2514 = vmatpush1.bf16.msra.mxu0 0
          %2515 = vmatprep.subr.bf16.mxu0 0
          %2516 = vmatpush1.bf16.msra.mxu0 0
          %2517 = vmatprep.subr.bf16.mxu0 0
          %2518 = vmatpush1.bf16.msra.mxu0 0
          %2519 = vmatprep.subr.bf16.mxu0 0
          %2520 = vmatpush1.bf16.msra.mxu0 0
          %2521 = vmatprep.subr.bf16.mxu0 0
          %2522 = vmatpush1.bf16.msra.mxu0 0
          %2523 = vmatprep.subr.bf16.mxu0 0
          %2524 = vmatpush1.bf16.msra.mxu0 0
          %2525 = vmatprep.subr.bf16.mxu0 0
          %2526 = vmatpush1.bf16.msra.mxu0 0
          %2527 = vmatprep.subr.bf16.mxu0 0
          %2528 = vmatpush1.bf16.msra.mxu0 0
          %2529 = vmatprep.mubr.bf16.mxu0 0
          %2530 = vmatmul.mubr.bf16.gmra.mrb[0].mxu0 %v2431
          %v2531 = vpop.f32.mrb[0].mxu0
          %v2532 = vadd.f32 %v2448, %v2531
          %v2533 = vpop.f32.mrb[0].mxu0
          %v2534 = vpop.f32.mrb[0].mxu0
          %v2535 = vpop.f32.mrb[0].mxu0
          %2536 = vdwg.mxu0
          %v2537 = vmul.f32 %v2532, %v2532
          %vm2538 = vcmask 1043456
          %v2539 = vsel %vm2538, %v2537, 0.0
          %2540 = vadd.xlane.f32.xlu0 %v2539
          %v2541 = vpop.xlane.xlu0 %2540
          %v2542 = vrot.slane %v2541, 4
          %v2543 = vadd.f32 %v2541, %v2542
          %v2544 = vrot.slane %v2543, 2
          %v2545 = vadd.f32 %v2543, %v2544
          %v2546 = vrot.slane %v2545, 1
          %v2547 = vadd.f32 %v2545, %v2546
          %s2548 = vtos %v2547
          %v2549 = vstv %s2548
          %v2550 = vrsqrt.pop %v2549
          %v2551 = vmul.f32 %v2549, %v2550
          %vm2552 = vcmp.eq.f32.partialorder %v2549, inf
          %v2553 = vsel %vm2552, %v2549, %v2551
          %vm2554 = vcmp.eq.f32.partialorder %v2549, 0.0
          %v2555 = vand.u32 %v2549, 2147483648
          %v2556 = vsel %vm2554, %v2555, %v2553
          %s2557 = vtos %v2556
          %s2558 = smax.f32 %s2557, 1e-12
          %v2559 = vstv %s2558
          %v2560 = vrcp.pop %v2559
          %v2561 = vmul.f32 %v2532, %v2560
          %v2563 = vrot.slane %v2561, 1
          %v2565 = vrot.slane %v2561, 2
          %v2567 = vrot.slane %v2561, 3
          %v2569 = vpack.c.bf16 %v2427, %v2427
          %2570 = vmatprep.subr.bf16.mxu0 0
          %2571 = vmatpush1.bf16.msra.mxu0 %v2481
          %2572 = vmatprep.subr.bf16.mxu0 0
          %2573 = vmatpush1.bf16.msra.mxu0 %v2482
          %2574 = vmatprep.subr.bf16.mxu0 0
          %2575 = vmatpush1.bf16.msra.mxu0 %v2483
          %2576 = vmatprep.subr.bf16.mxu0 0
          %2577 = vmatpush1.bf16.msra.mxu0 %v2484
          %2578 = vmatprep.subr.bf16.mxu0 0
          %2579 = vmatpush1.bf16.msra.mxu0 %v2485
          %2580 = vmatprep.subr.bf16.mxu0 0
          %2581 = vmatpush1.bf16.msra.mxu0 %v2486
          %2582 = vmatprep.subr.bf16.mxu0 0
          %2583 = vmatpush1.bf16.msra.mxu0 %v2487
          %2584 = vmatprep.subr.bf16.mxu0 0
          %2585 = vmatpush1.bf16.msra.mxu0 %v2488
          %2586 = vmatprep.subr.bf16.mxu0 0
          %2587 = vmatpush1.bf16.msra.mxu0 0
          %2588 = vmatprep.subr.bf16.mxu0 0
          %2589 = vmatpush1.bf16.msra.mxu0 0
          %2590 = vmatprep.subr.bf16.mxu0 0
          %2591 = vmatpush1.bf16.msra.mxu0 0
          %2592 = vmatprep.subr.bf16.mxu0 0
          %2593 = vmatpush1.bf16.msra.mxu0 0
          %2594 = vmatprep.subr.bf16.mxu0 0
          %2595 = vmatpush1.bf16.msra.mxu0 0
          %2596 = vmatprep.subr.bf16.mxu0 0
          %2597 = vmatpush1.bf16.msra.mxu0 0
          %2598 = vmatprep.subr.bf16.mxu0 0
          %2599 = vmatpush1.bf16.msra.mxu0 0
          %2600 = vmatprep.subr.bf16.mxu0 0
          %2601 = vmatpush1.bf16.msra.mxu0 0
          %2602 = vmatprep.mubr.bf16.mxu0 0
          %2603 = vmatmul.mubr.bf16.gmra.mrb[0].mxu0 %v2569
          %v2604 = vpop.f32.mrb[0].mxu0
          %v2605 = vadd.f32 %v2448, %v2604
          %v2606 = vpop.f32.mrb[0].mxu0
          %v2607 = vpop.f32.mrb[0].mxu0
          %v2608 = vpop.f32.mrb[0].mxu0
          %2609 = vdwg.mxu0
          %v2610 = vmul.f32 %v2605, %v2605
          %v2611 = vsel %vm2538, %v2610, 0.0
          %2612 = vadd.xlane.f32.xlu0 %v2611
          %v2613 = vpop.xlane.xlu0 %2612
          %v2614 = vrot.slane %v2613, 4
          %v2615 = vadd.f32 %v2613, %v2614
          %v2616 = vrot.slane %v2615, 2
          %v2617 = vadd.f32 %v2615, %v2616
          %v2618 = vrot.slane %v2617, 1
          %v2619 = vadd.f32 %v2617, %v2618
          %s2620 = vtos %v2619
          %v2621 = vstv %s2620
          %v2622 = vrsqrt.pop %v2621
          %v2623 = vmul.f32 %v2621, %v2622
          %vm2624 = vcmp.eq.f32.partialorder %v2621, inf
          %v2625 = vsel %vm2624, %v2621, %v2623
          %vm2626 = vcmp.eq.f32.partialorder %v2621, 0.0
          %v2627 = vand.u32 %v2621, 2147483648
          %v2628 = vsel %vm2626, %v2627, %v2625
          %s2629 = vtos %v2628
          %s2630 = smax.f32 %s2629, 1e-12
          %v2631 = vstv %s2630
          %v2632 = vrcp.pop %v2631
          %v2633 = vmul.f32 %v2605, %v2632
          %v2635 = vrot.slane %v2633, 1
          %v2636 = vrot.slane %v2633, 2
          %v2637 = vrot.slane %v2633, 3
          %v2638 = vrot.slane %v2633, 7
          %v2639 = vrot.slane %v2635, 7
          %v2640 = vrot.slane %v2636, 7
          %v2641 = vrot.slane %v2637, 7
          %vm2646 = vcmask 1040384
          %v2647 = vsel %vm2646, %v2561, %v2638
          %v2648 = vsel %vm2646, %v2563, %v2639
          %v2649 = vsel %vm2646, %v2565, %v2640
          %v2650 = vsel %vm2646, %v2567, %v2641
          %v2651 = vpack.c.bf16 %v2647, %v2647
          %v2652 = vpack.c.bf16 %v2648, %v2648
          %v2653 = vpack.c.bf16 %v2649, %v2649
          %v2654 = vpack.c.bf16 %v2650, %v2650
          %v2659 = vcombine.low %v2651, %v2652
          %v2660 = vcombine.low %v2653, %v2654
          %v2662 = vunpack.c.l.s4 1966171168
          %v2663 = vunpack.c.0.s8 %v2662
          %v2664 = vlaneseq
          %v2665 = vshrl.u32 %v2664, 7
          %v2666 = vsub.s32 %v2663, %v2665
          %v2667 = vrot.slane %v2659, %v2666
          %v2669 = vunpack.c.l.s4 1966171168
          %v2670 = vunpack.c.0.s8 %v2669
          %v2671 = vlaneseq
          %v2672 = vshrl.u32 %v2671, 7
          %v2673 = vsub.s32 %v2670, %v2672
          %v2674 = vrot.slane %v2660, %v2673
          %v2675 = vcombine.low %v2667, %v2674
          %v2677 = vunpack.c.l.s4 1966171168
          %v2678 = vunpack.c.0.s8 %v2677
          %v2679 = vlaneseq
          %v2680 = vshrl.u32 %v2679, 7
          %v2681 = vsub.s32 %v2678, %v2680
          %v2682 = vrot.slane %v2675, %v2681
          %2684 = vst [vmem:[#allocation2] sm:$0xf] %v2682
        $region118: #{apl_forward.1} parent=109 // pred_fallthru
          _
        %v2685 = vld [vmem:[#allocation2] sm:$0xf]
        %v2686 = vld [vmem:[%s713] sm:$0xff]
        %v2687 = vld [vmem:[%s713 + $0x8] sm:$0xff]
        %v2688 = vld [vmem:[%s713 + $0x10] sm:$0xff]
        %v2689 = vld [vmem:[%s713 + $0x18] sm:$0xff]
        %v2690 = vld [vmem:[%s713 + $0x20] sm:$0xff]
        %v2691 = vld [vmem:[%s713 + $0x28] sm:$0xff]
        %v2692 = vld [vmem:[%s713 + $0x30] sm:$0xff]
        %v2693 = vld [vmem:[%s713 + $0x38] sm:$0xff]
        %v2694 = vld [vmem:[%s713 + $0x40] sm:$0xff]
        %v2695 = vld [vmem:[%s713 + $0x48] sm:$0xff]
        %v2696 = vld [vmem:[%s713 + $0x50] sm:$0xff]
        %v2697 = vld [vmem:[%s713 + $0x58] sm:$0xff]
        %v2698 = vld [vmem:[%s713 + $0x60] sm:$0xff]
        %v2699 = vld [vmem:[%s713 + $0x68] sm:$0xff]
        %v2700 = vld [vmem:[%s713 + $0x70] sm:$0xff]
        %v2701 = vld [vmem:[%s713 + $0x78] sm:$0xff]
        %v2702 = vld [vmem:[%s713 + $0x80] sm:$0xff]
        %v2703 = vld [vmem:[%s713 + $0x88] sm:$0xff]
        %v2704 = vld [vmem:[%s713 + $0x90] sm:$0xff]
        %v2705 = vld [vmem:[%s713 + $0x98] sm:$0xff]
        %v2706 = vld [vmem:[%s713 + $0xa0] sm:$0xff]
        %v2707 = vld [vmem:[%s713 + $0xa8] sm:$0xff]
        %v2708 = vld [vmem:[%s713 + $0xb0] sm:$0xff]
        %v2709 = vld [vmem:[%s713 + $0xb8] sm:$0xff]
        %v2710 = vld [vmem:[%s713 + $0xc0] sm:$0xff]
        %v2711 = vld [vmem:[%s713 + $0xc8] sm:$0xff]
        %v2712 = vld [vmem:[%s713 + $0xd0] sm:$0xff]
        %v2713 = vld [vmem:[%s713 + $0xd8] sm:$0xff]
        %v2714 = vld [vmem:[%s713 + $0xe0] sm:$0xff]
        %v2715 = vld [vmem:[%s713 + $0xe8] sm:$0xff]
        %v2716 = vld [vmem:[%s713 + $0xf0] sm:$0xff]
        %v2717 = vld [vmem:[%s713 + $0xf8] sm:$0xff]
        %v2718 = vld [vmem:[%s713 + $0x100] sm:$0xff]
        %v2719 = vld [vmem:[%s713 + $0x108] sm:$0xff]
        %v2720 = vld [vmem:[%s713 + $0x110] sm:$0xff]
        %v2721 = vld [vmem:[%s713 + $0x118] sm:$0xff]
        %v2722 = vld [vmem:[%s713 + $0x120] sm:$0xff]
        %v2723 = vld [vmem:[%s713 + $0x128] sm:$0xff]
        %v2724 = vld [vmem:[%s713 + $0x130] sm:$0xff]
        %v2725 = vld [vmem:[%s713 + $0x138] sm:$0xff]
        %v2726 = vld [vmem:[%s713 + $0x140] sm:$0xff]
        %v2727 = vld [vmem:[%s713 + $0x148] sm:$0xff]
        %v2728 = vld [vmem:[%s713 + $0x150] sm:$0xff]
        %v2729 = vld [vmem:[%s713 + $0x158] sm:$0xff]
        %v2730 = vld [vmem:[%s713 + $0x160] sm:$0xff]
        %v2731 = vld [vmem:[%s713 + $0x168] sm:$0xff]
        %v2732 = vld [vmem:[%s713 + $0x170] sm:$0xff]
        %v2733 = vld [vmem:[%s713 + $0x178] sm:$0xff]
        %v2734 = vld [vmem:[%s713 + $0x180] sm:$0xff]
        %v2735 = vld [vmem:[%s713 + $0x188] sm:$0xff]
        %v2736 = vld [vmem:[%s713 + $0x190] sm:$0xff]
        %v2737 = vld [vmem:[%s713 + $0x198] sm:$0xff]
        %v2738 = vld [vmem:[%s713 + $0x1a0] sm:$0xff]
        %v2739 = vld [vmem:[%s713 + $0x1a8] sm:$0xff]
        %v2740 = vld [vmem:[%s713 + $0x1b0] sm:$0xff]
        %v2741 = vld [vmem:[%s713 + $0x1b8] sm:$0xff]
        %v2742 = vld [vmem:[%s713 + $0x1c0] sm:$0xff]
        %v2743 = vld [vmem:[%s713 + $0x1c8] sm:$0xff]
        %v2744 = vld [vmem:[%s713 + $0x1d0] sm:$0xff]
        %v2745 = vld [vmem:[%s713 + $0x1d8] sm:$0xff]
        %v2746 = vld [vmem:[%s713 + $0x1e0] sm:$0xff]
        %v2747 = vld [vmem:[%s713 + $0x1e8] sm:$0xff]
        %v2748 = vld [vmem:[%s713 + $0x1f0] sm:$0xff]
        %v2749 = vld [vmem:[%s713 + $0x1f8] sm:$0xff]
        %v2750 = vld [vmem:[%s759] sm:$0x3]
        %v2752 = vlaneseq
        %v2753 = vshrl.u32 %v2752, 7
        %v2754 = vsub.s32 0, %v2753
        %v2755 = vrot.slane %v2750, %v2754
        %v2756 = vlaneseq
        %v2757 = vshrl.u32 %v2756, 7
        %v2758 = vsub.s32 1, %v2757
        %v2759 = vrot.slane %v2750, %v2758
        %v2764 = vunpack.c.l.s4 1966171168
        %v2765 = vunpack.c.0.s8 %v2764
        %v2766 = vlaneseq
        %v2767 = vshrl.u32 %v2766, 7
        %v2768 = vsub.s32 %v2765, %v2767
        %v2769 = vrot.slane %v2685, %v2768
        %v2770 = vcombine.high %v2769, %v2769
        %v2772 = vunpack.c.l.s4 1966171168
        %v2773 = vunpack.c.0.s8 %v2772
        %v2774 = vlaneseq
        %v2775 = vshrl.u32 %v2774, 7
        %v2776 = vsub.s32 %v2773, %v2775
        %v2777 = vrot.slane %v2769, %v2776
        %v2779 = vunpack.c.l.s4 1966171168
        %v2780 = vunpack.c.0.s8 %v2779
        %v2781 = vlaneseq
        %v2782 = vshrl.u32 %v2781, 7
        %v2783 = vsub.s32 %v2780, %v2782
        %v2784 = vrot.slane %v2770, %v2783
        %v2785 = vcombine.high %v2777, %v2777
        %v2786 = vcombine.high %v2784, %v2784
        %v2855 = vunpack.c.l.b16 %v2686
        %v2856 = vunpack.c.h.b16 %v2686
        %v2857 = vunpack.c.l.b16 %v2687
        %v2858 = vunpack.c.h.b16 %v2687
        %v2859 = vunpack.c.l.b16 %v2688
        %v2860 = vunpack.c.h.b16 %v2688
        %v2861 = vunpack.c.l.b16 %v2689
        %v2862 = vunpack.c.h.b16 %v2689
        %v2863 = vunpack.c.l.b16 %v2690
        %v2864 = vunpack.c.h.b16 %v2690
        %v2865 = vunpack.c.l.b16 %v2691
        %v2866 = vunpack.c.h.b16 %v2691
        %v2867 = vunpack.c.l.b16 %v2692
        %v2868 = vunpack.c.h.b16 %v2692
        %v2869 = vunpack.c.l.b16 %v2693
        %v2870 = vunpack.c.h.b16 %v2693
        %v2871 = vunpack.c.l.b16 %v2694
        %v2872 = vunpack.c.h.b16 %v2694
        %v2873 = vunpack.c.l.b16 %v2695
        %v2874 = vunpack.c.h.b16 %v2695
        %v2875 = vunpack.c.l.b16 %v2696
        %v2876 = vunpack.c.h.b16 %v2696
        %v2877 = vunpack.c.l.b16 %v2697
        %v2878 = vunpack.c.h.b16 %v2697
        %v2879 = vunpack.c.l.b16 %v2698
        %v2880 = vunpack.c.h.b16 %v2698
        %v2881 = vunpack.c.l.b16 %v2699
        %v2882 = vunpack.c.h.b16 %v2699
        %v2883 = vunpack.c.l.b16 %v2700
        %v2884 = vunpack.c.h.b16 %v2700
        %v2885 = vunpack.c.l.b16 %v2701
        %v2886 = vunpack.c.h.b16 %v2701
        %v2887 = vunpack.c.l.b16 %v2702
        %v2888 = vunpack.c.h.b16 %v2702
        %v2889 = vunpack.c.l.b16 %v2703
        %v2890 = vunpack.c.h.b16 %v2703
        %v2891 = vunpack.c.l.b16 %v2704
        %v2892 = vunpack.c.h.b16 %v2704
        %v2893 = vunpack.c.l.b16 %v2705
        %v2894 = vunpack.c.h.b16 %v2705
        %v2895 = vunpack.c.l.b16 %v2706
        %v2896 = vunpack.c.h.b16 %v2706
        %v2897 = vunpack.c.l.b16 %v2707
        %v2898 = vunpack.c.h.b16 %v2707
        %v2899 = vunpack.c.l.b16 %v2708
        %v2900 = vunpack.c.h.b16 %v2708
        %v2901 = vunpack.c.l.b16 %v2709
        %v2902 = vunpack.c.h.b16 %v2709
        %v2903 = vunpack.c.l.b16 %v2710
        %v2904 = vunpack.c.h.b16 %v2710
        %v2905 = vunpack.c.l.b16 %v2711
        %v2906 = vunpack.c.h.b16 %v2711
        %v2907 = vunpack.c.l.b16 %v2712
        %v2908 = vunpack.c.h.b16 %v2712
        %v2909 = vunpack.c.l.b16 %v2713
        %v2910 = vunpack.c.h.b16 %v2713
        %v2911 = vunpack.c.l.b16 %v2714
        %v2912 = vunpack.c.h.b16 %v2714
        %v2913 = vunpack.c.l.b16 %v2715
        %v2914 = vunpack.c.h.b16 %v2715
        %v2915 = vunpack.c.l.b16 %v2716
        %v2916 = vunpack.c.h.b16 %v2716
        %v2917 = vunpack.c.l.b16 %v2717
        %v2918 = vunpack.c.h.b16 %v2717
        %v2919 = vunpack.c.l.b16 %v2718
        %v2920 = vunpack.c.h.b16 %v2718
        %v2921 = vunpack.c.l.b16 %v2719
        %v2922 = vunpack.c.h.b16 %v2719
        %v2923 = vunpack.c.l.b16 %v2720
        %v2924 = vunpack.c.h.b16 %v2720
        %v2925 = vunpack.c.l.b16 %v2721
        %v2926 = vunpack.c.h.b16 %v2721
        %v2927 = vunpack.c.l.b16 %v2722
        %v2928 = vunpack.c.h.b16 %v2722
        %v2929 = vunpack.c.l.b16 %v2723
        %v2930 = vunpack.c.h.b16 %v2723
        %v2931 = vunpack.c.l.b16 %v2724
        %v2932 = vunpack.c.h.b16 %v2724
        %v2933 = vunpack.c.l.b16 %v2725
        %v2934 = vunpack.c.h.b16 %v2725
        %v2935 = vunpack.c.l.b16 %v2726
        %v2936 = vunpack.c.h.b16 %v2726
        %v2937 = vunpack.c.l.b16 %v2727
        %v2938 = vunpack.c.h.b16 %v2727
        %v2939 = vunpack.c.l.b16 %v2728
        %v2940 = vunpack.c.h.b16 %v2728
        %v2941 = vunpack.c.l.b16 %v2729
        %v2942 = vunpack.c.h.b16 %v2729
        %v2943 = vunpack.c.l.b16 %v2730
        %v2944 = vunpack.c.h.b16 %v2730
        %v2945 = vunpack.c.l.b16 %v2731
        %v2946 = vunpack.c.h.b16 %v2731
        %v2947 = vunpack.c.l.b16 %v2732
        %v2948 = vunpack.c.h.b16 %v2732
        %v2949 = vunpack.c.l.b16 %v2733
        %v2950 = vunpack.c.h.b16 %v2733
        %v2951 = vunpack.c.l.b16 %v2734
        %v2952 = vunpack.c.h.b16 %v2734
        %v2953 = vunpack.c.l.b16 %v2735
        %v2954 = vunpack.c.h.b16 %v2735
        %v2955 = vunpack.c.l.b16 %v2736
        %v2956 = vunpack.c.h.b16 %v2736
        %v2957 = vunpack.c.l.b16 %v2737
        %v2958 = vunpack.c.h.b16 %v2737
        %v2959 = vunpack.c.l.b16 %v2738
        %v2960 = vunpack.c.h.b16 %v2738
        %v2961 = vunpack.c.l.b16 %v2739
        %v2962 = vunpack.c.h.b16 %v2739
        %v2963 = vunpack.c.l.b16 %v2740
        %v2964 = vunpack.c.h.b16 %v2740
        %v2965 = vunpack.c.l.b16 %v2741
        %v2966 = vunpack.c.h.b16 %v2741
        %v2967 = vunpack.c.l.b16 %v2742
        %v2968 = vunpack.c.h.b16 %v2742
        %v2969 = vunpack.c.l.b16 %v2743
        %v2970 = vunpack.c.h.b16 %v2743
        %v2971 = vunpack.c.l.b16 %v2744
        %v2972 = vunpack.c.h.b16 %v2744
        %v2973 = vunpack.c.l.b16 %v2745
        %v2974 = vunpack.c.h.b16 %v2745
        %v2975 = vunpack.c.l.b16 %v2746
        %v2976 = vunpack.c.h.b16 %v2746
        %v2977 = vunpack.c.l.b16 %v2747
        %v2978 = vunpack.c.h.b16 %v2747
        %v2979 = vunpack.c.l.b16 %v2748
        %v2980 = vunpack.c.h.b16 %v2748
        %v2981 = vunpack.c.l.b16 %v2749
        %v2982 = vunpack.c.h.b16 %v2749
        %v2983 = vpack.c.b16 %v2857, %v2855
        %v2984 = vpack.c.b16 %v2858, %v2856
        %v2985 = vpack.c.b16 %v2861, %v2859
        %v2986 = vpack.c.b16 %v2862, %v2860
        %v2987 = vpack.c.b16 %v2865, %v2863
        %v2988 = vpack.c.b16 %v2866, %v2864
        %v2989 = vpack.c.b16 %v2869, %v2867
        %v2990 = vpack.c.b16 %v2870, %v2868
        %v2991 = vpack.c.b16 %v2873, %v2871
        %v2992 = vpack.c.b16 %v2874, %v2872
        %v2993 = vpack.c.b16 %v2877, %v2875
        %v2994 = vpack.c.b16 %v2878, %v2876
        %v2995 = vpack.c.b16 %v2881, %v2879
        %v2996 = vpack.c.b16 %v2882, %v2880
        %v2997 = vpack.c.b16 %v2885, %v2883
        %v2998 = vpack.c.b16 %v2886, %v2884
        %v2999 = vpack.c.b16 %v2889, %v2887
        %v3000 = vpack.c.b16 %v2890, %v2888
        %v3001 = vpack.c.b16 %v2893, %v2891
        %v3002 = vpack.c.b16 %v2894, %v2892
        %v3003 = vpack.c.b16 %v2897, %v2895
        %v3004 = vpack.c.b16 %v2898, %v2896
        %v3005 = vpack.c.b16 %v2901, %v2899
        %v3006 = vpack.c.b16 %v2902, %v2900
        %v3007 = vpack.c.b16 %v2905, %v2903
        %v3008 = vpack.c.b16 %v2906, %v2904
        %v3009 = vpack.c.b16 %v2909, %v2907
        %v3010 = vpack.c.b16 %v2910, %v2908
        %v3011 = vpack.c.b16 %v2913, %v2911
        %v3012 = vpack.c.b16 %v2914, %v2912
        %v3013 = vpack.c.b16 %v2917, %v2915
        %v3014 = vpack.c.b16 %v2918, %v2916
        %v3015 = vpack.c.b16 %v2921, %v2919
        %v3016 = vpack.c.b16 %v2922, %v2920
        %v3017 = vpack.c.b16 %v2925, %v2923
        %v3018 = vpack.c.b16 %v2926, %v2924
        %v3019 = vpack.c.b16 %v2929, %v2927
        %v3020 = vpack.c.b16 %v2930, %v2928
        %v3021 = vpack.c.b16 %v2933, %v2931
        %v3022 = vpack.c.b16 %v2934, %v2932
        %v3023 = vpack.c.b16 %v2937, %v2935
        %v3024 = vpack.c.b16 %v2938, %v2936
        %v3025 = vpack.c.b16 %v2941, %v2939
        %v3026 = vpack.c.b16 %v2942, %v2940
        %v3027 = vpack.c.b16 %v2945, %v2943
        %v3028 = vpack.c.b16 %v2946, %v2944
        %v3029 = vpack.c.b16 %v2949, %v2947
        %v3030 = vpack.c.b16 %v2950, %v2948
        %v3031 = vpack.c.b16 %v2953, %v2951
        %v3032 = vpack.c.b16 %v2954, %v2952
        %v3033 = vpack.c.b16 %v2957, %v2955
        %v3034 = vpack.c.b16 %v2958, %v2956
        %v3035 = vpack.c.b16 %v2961, %v2959
        %v3036 = vpack.c.b16 %v2962, %v2960
        %v3037 = vpack.c.b16 %v2965, %v2963
        %v3038 = vpack.c.b16 %v2966, %v2964
        %v3039 = vpack.c.b16 %v2969, %v2967
        %v3040 = vpack.c.b16 %v2970, %v2968
        %v3041 = vpack.c.b16 %v2973, %v2971
        %v3042 = vpack.c.b16 %v2974, %v2972
        %v3043 = vpack.c.b16 %v2977, %v2975
        %v3044 = vpack.c.b16 %v2978, %v2976
        %v3045 = vpack.c.b16 %v2981, %v2979
        %v3046 = vpack.c.b16 %v2982, %v2980
        %3111 = vmatprep.subr.bf16.mxu0 %v2984
        %3112 = vmatpush1.bf16.msra.mxu0 %v2983
        %3113 = vmatprep.subr.bf16.mxu0 %v2986
        %3114 = vmatpush1.bf16.msra.mxu0 %v2985
        %3115 = vmatprep.subr.bf16.mxu0 %v2988
        %3116 = vmatpush1.bf16.msra.mxu0 %v2987
        %3117 = vmatprep.subr.bf16.mxu0 %v2990
        %3118 = vmatpush1.bf16.msra.mxu0 %v2989
        %3119 = vmatprep.subr.bf16.mxu0 %v2992
        %3120 = vmatpush1.bf16.msra.mxu0 %v2991
        %3121 = vmatprep.subr.bf16.mxu0 %v2994
        %3122 = vmatpush1.bf16.msra.mxu0 %v2993
        %3123 = vmatprep.subr.bf16.mxu0 %v2996
        %3124 = vmatpush1.bf16.msra.mxu0 %v2995
        %3125 = vmatprep.subr.bf16.mxu0 %v2998
        %3126 = vmatpush1.bf16.msra.mxu0 %v2997
        %3127 = vmatprep.subr.bf16.mxu0 %v3000
        %3128 = vmatpush1.bf16.msra.mxu0 %v2999
        %3129 = vmatprep.subr.bf16.mxu0 %v3002
        %3130 = vmatpush1.bf16.msra.mxu0 %v3001
        %3131 = vmatprep.subr.bf16.mxu0 %v3004
        %3132 = vmatpush1.bf16.msra.mxu0 %v3003
        %3133 = vmatprep.subr.bf16.mxu0 %v3006
        %3134 = vmatpush1.bf16.msra.mxu0 %v3005
        %3135 = vmatprep.subr.bf16.mxu0 %v3008
        %3136 = vmatpush1.bf16.msra.mxu0 %v3007
        %3137 = vmatprep.subr.bf16.mxu0 %v3010
        %3138 = vmatpush1.bf16.msra.mxu0 %v3009
        %3139 = vmatprep.subr.bf16.mxu0 %v3012
        %3140 = vmatpush1.bf16.msra.mxu0 %v3011
        %3141 = vmatprep.subr.bf16.mxu0 %v3014
        %3142 = vmatpush1.bf16.msra.mxu0 %v3013
        %3143 = vmatprep.mubr.bf16.mxu0 %v2784
        %3144 = vmatmul.mubr.bf16.gmra.mrb[0].mxu0 %v2777
        %v3145 = vpop.f32.mrb[0].mxu0
        %v3146 = vadd.f32 %v2755, %v3145
        %v3147 = vpop.f32.mrb[0].mxu0
        %v3148 = vadd.f32 %v2759, %v3147
        %v3149 = vpop.f32.mrb[0].mxu0
        %v3150 = vpop.f32.mrb[0].mxu0
        %3151 = vdwg.mxu0
        %3152 = vmatprep.subr.bf16.mxu0 %v3016
        %3153 = vmatpush1.bf16.msra.mxu0 %v3015
        %3154 = vmatprep.subr.bf16.mxu0 %v3018
        %3155 = vmatpush1.bf16.msra.mxu0 %v3017
        %3156 = vmatprep.subr.bf16.mxu0 %v3020
        %3157 = vmatpush1.bf16.msra.mxu0 %v3019
        %3158 = vmatprep.subr.bf16.mxu0 %v3022
        %3159 = vmatpush1.bf16.msra.mxu0 %v3021
        %3160 = vmatprep.subr.bf16.mxu0 %v3024
        %3161 = vmatpush1.bf16.msra.mxu0 %v3023
        %3162 = vmatprep.subr.bf16.mxu0 %v3026
        %3163 = vmatpush1.bf16.msra.mxu0 %v3025
        %3164 = vmatprep.subr.bf16.mxu0 %v3028
        %3165 = vmatpush1.bf16.msra.mxu0 %v3027
        %3166 = vmatprep.subr.bf16.mxu0 %v3030
        %3167 = vmatpush1.bf16.msra.mxu0 %v3029
        %3168 = vmatprep.subr.bf16.mxu0 %v3032
        %3169 = vmatpush1.bf16.msra.mxu0 %v3031
        %3170 = vmatprep.subr.bf16.mxu0 %v3034
        %3171 = vmatpush1.bf16.msra.mxu0 %v3033
        %3172 = vmatprep.subr.bf16.mxu0 %v3036
        %3173 = vmatpush1.bf16.msra.mxu0 %v3035
        %3174 = vmatprep.subr.bf16.mxu0 %v3038
        %3175 = vmatpush1.bf16.msra.mxu0 %v3037
        %3176 = vmatprep.subr.bf16.mxu0 %v3040
        %3177 = vmatpush1.bf16.msra.mxu0 %v3039
        %3178 = vmatprep.subr.bf16.mxu0 %v3042
        %3179 = vmatpush1.bf16.msra.mxu0 %v3041
        %3180 = vmatprep.subr.bf16.mxu0 %v3044
        %3181 = vmatpush1.bf16.msra.mxu0 %v3043
        %3182 = vmatprep.subr.bf16.mxu0 %v3046
        %3183 = vmatpush1.bf16.msra.mxu0 %v3045
        %3184 = vmatprep.mubr.bf16.mxu0 %v2786
        %3185 = vmatmul.mubr.bf16.gmra.mrb[0].mxu0 %v2785
        %v3186 = vpop.f32.mrb[0].mxu0
        %v3187 = vadd.f32 %v3146, %v3186
        %v3188 = vpop.f32.mrb[0].mxu0
        %v3189 = vadd.f32 %v3148, %v3188
        %v3190 = vpop.f32.mrb[0].mxu0
        %v3191 = vpop.f32.mrb[0].mxu0
        %3192 = vdwg.mxu0
        %v3195 = vcombine.low %v3187, %v3189
        %v3197 = vunpack.c.l.s4 1983009808
        %v3198 = vunpack.c.0.s8 %v3197
        %v3199 = vlaneseq
        %v3200 = vshrl.u32 %v3199, 7
        %v3201 = vsub.s32 %v3198, %v3200
        %v3202 = vrot.slane %v3195, %v3201
        %s3204 = smul.u32 %s26, 2
        %s3205 = smul.addr %s3204, 2
        %s3206 = scalar_lea.vmem [#allocation3], %s3205
        %3207 = vst [vmem:[%s3206] sm:$0xf] %v3202
        %p3208 = scmp.eq.s32.totalorder %s26, 1
        // Predicated region
        $region119: #{apl_forward.1} parent=109 // pred_check
          %p3209 = pneg %p3208
        $region120: #{apl_forward.1} parent=109 // pred_check_branch
          %3211 = sbr.rel (%p3209) target = $region122
        $region121: #{apl_forward.1} parent=109 // pred_region
          %v3212 = vld [vmem:[#allocation3] sm:$0xf]
          %s3213 = scalar_lea.vmem [#allocation3], 4
          %v3214 = vld [vmem:[%s3213] sm:$0xf]
          %v3217 = vunpack.c.l.s4 1983009808
          %v3218 = vunpack.c.0.s8 %v3217
          %v3219 = vlaneseq
          %v3220 = vshrl.u32 %v3219, 7
          %v3221 = vsub.s32 %v3218, %v3220
          %v3222 = vrot.slane %v3212, %v3221
          %v3223 = vcombine.high %v3222, %v3222
          %v3228 = vunpack.c.l.s4 1983009808
          %v3229 = vunpack.c.0.s8 %v3228
          %v3230 = vlaneseq
          %v3231 = vshrl.u32 %v3230, 7
          %v3232 = vsub.s32 %v3229, %v3231
          %v3233 = vrot.slane %v3214, %v3232
          %v3234 = vcombine.high %v3233, %v3233
          %v3237 = vmul.f32 %v3222, %v3222
          %v3238 = vmul.f32 %v3223, %v3223
          %v3239 = vmul.f32 %v3233, %v3233
          %v3240 = vmul.f32 %v3234, %v3234
          %vm3241 = vcmask 1041408
          %v3242 = vsel %vm3241, %v3237, 0.0
          %v3243 = vsel %vm3241, %v3238, 0.0
          %v3244 = vadd.f32 %v3242, %v3243
          %v3245 = vsel %vm3241, %v3239, 0.0
          %v3246 = vadd.f32 %v3244, %v3245
          %v3247 = vsel %vm3241, %v3240, 0.0
          %v3248 = vadd.f32 %v3246, %v3247
          %3249 = vadd.xlane.f32.xlu0 %v3248
          %v3250 = vpop.xlane.xlu0 %3249
          %v3251 = vrsqrt.pop %v3250
          %v3252 = vmul.f32 %v3250, %v3251
          %vm3253 = vcmp.eq.f32.partialorder %v3250, inf
          %v3254 = vsel %vm3253, %v3250, %v3252
          %vm3255 = vcmp.eq.f32.partialorder %v3250, 0.0
          %v3256 = vand.u32 %v3250, 2147483648
          %v3257 = vsel %vm3255, %v3256, %v3254
          %v3258 = vmax.f32 %v3257, 1e-12
          %v3259 = vrcp.pop %v3258
          %v3260 = vmul.f32 %v3222, %v3259
          %v3261 = vmul.f32 %v3223, %v3259
          %v3262 = vmul.f32 %v3233, %v3259
          %v3263 = vmul.f32 %v3234, %v3259
          %v3268 = vcombine.low %v3260, %v3261
          %v3269 = vcombine.low %v3262, %v3263
          %v3271 = vunpack.c.l.s4 1983009808
          %v3272 = vunpack.c.0.s8 %v3271
          %v3273 = vlaneseq
          %v3274 = vshrl.u32 %v3273, 7
          %v3275 = vsub.s32 %v3272, %v3274
          %v3276 = vrot.slane %v3268, %v3275
          %v3278 = vunpack.c.l.s4 1983009808
          %v3279 = vunpack.c.0.s8 %v3278
          %v3280 = vlaneseq
          %v3281 = vshrl.u32 %v3280, 7
          %v3282 = vsub.s32 %v3279, %v3281
          %v3283 = vrot.slane %v3269, %v3282
          %v3284 = vcombine.low %v3276, %v3283
          %3286 = vst [vmem:[#allocation5] sm:$0xff] %v3284
        $region122: #{apl_forward.1} parent=109 // pred_fallthru
          _
        // Predicated region
        $region123: #{apl_forward.1} parent=109 // pred_check
          %p3287 = pneg %p343
        $region124: #{apl_forward.1} parent=109 // pred_check_branch
          %3289 = sbr.rel (%p3287) target = $region126
        $region125: #{apl_forward.1} parent=109 // pred_region
          %s3291 = ssub.s32 128, 128
          %3292 = vsyncadd [#allocation6], %s3291
          %s3294 = sshll.u32 [#allocation5], 4
          %s3295 = int_to_ptr.vmem [resolvable:$true] %s3294
          %3297 = dma.vmem_to_hbm [thread:$0]  %s3295, 128, %s14, [#allocation6]
        $region126: #{apl_forward.1} parent=109 // pred_fallthru
          _
        // Predicated region
        $region127: #{apl_forward.1} parent=109 // pred_check
          %p3298 = pneg %p343
        $region128: #{apl_forward.1} parent=109 // pred_check_branch
          %3300 = sbr.rel (%p3298) target = $region130
        $region129: #{apl_forward.1} parent=109 // pred_region
          %3301 = dma.done [#allocation6], 128
        $region130: #{apl_forward.1} parent=109 // pred_fallthru
          _
      $region110: #{apl_forward.1} parent=5 // pred_fallthru
        _
      %p3302 = scmp.le.s32.totalorder 2, %s21
      // Predicated region
      $region131: #{apl_forward.1} parent=5 // pred_check
        %p3303 = pneg %p3302
      $region132: #{apl_forward.1} parent=5 // pred_check_branch
        %3305 = sbr.rel (%p3303) target = $region134
      $region133: #{apl_forward.1} parent=5 // pred_region
        %s3306 = ssub.s32 %s21, 2
      $region134: #{apl_forward.1} parent=5 // pred_fallthru
        _
    $region6: #{apl_forward.1} parent=1 // loop_footer
      %s25 = sadd.s32 1, %s21
    $region7: #{apl_forward.1} parent=1 // loop_footer_branch
      %20 = sbr.rel target = $region3
    $region8: #{apl_forward.1} parent=1 // loop_exit
      _
    %3307 = vsyncpa [#allocation6], 1
    %s3308 = scalar_lea.sflag [#allocation6], 1
    %3309 = vsyncpa %s3308, 1

</llo_original>
